<compile_context>
chip_gen: v6e
topology: v6e:2x2x1
jax: 0.10.0
libtpu: 0.0.40
codegen_flags: <defaults>
</compile_context>

<pallas_src>
import functools

import jax
import jax.numpy as jnp
from jax.experimental import pallas as pl
from jax.experimental.pallas import tpu as pltpu

NUM_INFEATURE = 288   # fixed by the module
HIDDEN = 256
NUM_CLASSES = 2
OUT_PAD = 128         # lane-dense padded classifier width


def _round_up(x, m):
    return ((x + m - 1) // m) * m


def _head_kernel(x_ref, w1_ref, b1_ref, w2_ref, b2_ref, o_ref, acc_ref, *,
                 inv_hw, num_classes, lane_tiles):
    k = pl.program_id(1)

    @pl.when(k == 0)
    def _init():
        acc_ref[...] = jnp.zeros_like(acc_ref)

    # (TB, 288, TS) chunk of the feature map; cast after load so bf16 inputs
    # only move bf16 bytes over HBM.
    x = x_ref[...].astype(jnp.float32)

    # Fold the TS lanes into a 128-wide running sum with lane-tile-aligned
    # VPU adds (no per-step cross-lane reduction).
    partial = x[:, :, 0:128]
    for t in range(1, lane_tiles):
        partial = partial + x[:, :, t * 128:(t + 1) * 128]
    acc_ref[...] += partial

    @pl.when(k == pl.num_programs(1) - 1)
    def _finalize():
        # AdaptiveAvgPool2d(1): one cross-lane reduce + hoisted 1/HW multiply.
        pooled = jnp.sum(acc_ref[...], axis=-1) * inv_hw              # (TB, 288)

        # fc: Linear(288 -> 256)
        h = jnp.dot(pooled, w1_ref[...],
                    preferred_element_type=jnp.float32) + b1_ref[...]
        # classifier: ReLU -> Dropout(0.5) (identity at inference) -> Linear
        h = jnp.maximum(h, 0.0)
        logits = jnp.dot(h, w2_ref[...],
                         preferred_element_type=jnp.float32) + b2_ref[...]  # (TB, 128)

        # Mask padded classes, then LogSoftmax(dim=1).
        col = jax.lax.broadcasted_iota(jnp.int32, logits.shape, 1)
        logits = jnp.where(col < num_classes, logits, -1e30)
        m = jnp.max(logits, axis=-1, keepdims=True)
        shifted = logits - m
        lse = jnp.log(jnp.sum(jnp.exp(shifted), axis=-1, keepdims=True))
        o_ref[...] = shifted - lse


def pre_net_head(feat_nchw, w1, b1, w2, b2, *, tb=8):
    """feat_nchw: [B, 288, H, W] backbone feature map (f32 or bf16)."""
    B, C, H, W = feat_nchw.shape
    assert C == NUM_INFEATURE
    HW = H * W

    tb = max(8, _round_up(tb, 8))
    itemsize = jnp.dtype(feat_nchw.dtype).itemsize

    # Spatial chunk (lane dim): multiple of 128, sized so the double-buffered
    # x tiles stay well inside v5e's 16 MiB default scoped VMEM and far below
    # v7x's 64 MiB physical VMEM.
    per_lane_tile = 2 * tb * C * 128 * itemsize       # both pipeline buffers
    max_lane_tiles = max(1, (12 * 1024 * 1024) // per_lane_tile)
    ts = 128 * min(pl.cdiv(HW, 128), max_lane_tiles, 8)
    lane_tiles = ts // 128

    B_pad = _round_up(B, tb)
    HW_pad = _round_up(HW, ts)

    x3 = feat_nchw.reshape(B, C, HW)
    if (B_pad, HW_pad) != (B, HW):
        # Zero padding: padded spatial positions add 0 to the pooled sum;
        # padded batch rows are sliced off below.
        x3 = jnp.pad(x3, ((0, B_pad - B), (0, 0), (0, HW_pad - HW)))

    # Lane-dense classifier: zero-pad the 2-wide projection to 128 columns.
    w2p = jnp.pad(w2, ((0, 0), (0, OUT_PAD - NUM_CLASSES)))
    b2p = jnp.pad(b2, ((0, 0), (0, OUT_PAD - NUM_CLASSES)))

    n_b = B_pad // tb
    n_s = HW_pad // ts

    kernel = functools.partial(
        _head_kernel,
        inv_hw=1.0 / float(HW),
        num_classes=NUM_CLASSES,
        lane_tiles=lane_tiles,
    )

    bytes_accessed = (
        x3.size * itemsize
        + (w1.size + b1.size + w2p.size + b2p.size) * 4
        + B_pad * OUT_PAD * 4
    )
    cost = pl.CostEstimate(
        flops=int(B_pad * C * HW_pad                       # pooling adds
                  + 2 * B_pad * (C * HIDDEN + HIDDEN * OUT_PAD)),
        transcendentals=int(B_pad * (OUT_PAD + 1)),
        bytes_accessed=int(bytes_accessed),
    )

    out = pl.pallas_call(
        kernel,
        out_shape=jax.ShapeDtypeStruct((B_pad, OUT_PAD), jnp.float32),
        grid_spec=pltpu.PrefetchScalarGridSpec(
            num_scalar_prefetch=0,
            grid=(n_b, n_s),                    # reduction (spatial) axis last
            in_specs=[
                pl.BlockSpec((tb, C, ts), lambda i, k: (i, 0, k)),
                pl.BlockSpec((C, HIDDEN), lambda i, k: (0, 0)),   # VMEM-resident
                pl.BlockSpec((1, HIDDEN), lambda i, k: (0, 0)),
                pl.BlockSpec((HIDDEN, OUT_PAD), lambda i, k: (0, 0)),
                pl.BlockSpec((1, OUT_PAD), lambda i, k: (0, 0)),
            ],
            out_specs=pl.BlockSpec((tb, OUT_PAD), lambda i, k: (i, 0)),
            scratch_shapes=[pltpu.VMEM((tb, C, 128), jnp.float32)],
        ),
        compiler_params=pltpu.CompilerParams(
            dimension_semantics=("parallel", "arbitrary"),
            vmem_limit_bytes=32 * 1024 * 1024,
        ),
        cost_estimate=cost,
    )(x3, w1, b1, w2p, b2p)

    return out[:B, :NUM_CLASSES]


def init_params(key):
    """Deterministic parameter init (PyTorch-Linear-style uniform bounds)."""
    k1, k2, k3, k4 = jax.random.split(key, 4)
    bound1 = 1.0 / jnp.sqrt(NUM_INFEATURE)
    bound2 = 1.0 / jnp.sqrt(HIDDEN)
    # Stored already transposed: (in_features, out_features) so kernel does x @ W.
    w1 = jax.random.uniform(k1, (NUM_INFEATURE, HIDDEN), jnp.float32,
                            -bound1, bound1)
    b1 = jax.random.uniform(k2, (1, HIDDEN), jnp.float32, -bound1, bound1)
    w2 = jax.random.uniform(k3, (HIDDEN, NUM_CLASSES), jnp.float32,
                            -bound2, bound2)
    b2 = jax.random.uniform(k4, (1, NUM_CLASSES), jnp.float32, -bound2, bound2)
    return w1, b1, w2, b2


if __name__ == "__main__":
    key = jax.random.PRNGKey(0)
    kx, kp = jax.random.split(key)

    # TODO(synk): the Xception backbone (resnet_layer = children[:10] of an
    # externally supplied model) is not reproduced; the kernel starts from its
    # 288-channel feature map.
    B, H, W = 2, 8, 8
    feat = jax.random.normal(kx, (B, NUM_INFEATURE, H, W), jnp.float32)

    w1, b1, w2, b2 = init_params(kp)

    out = pre_net_head(feat, w1, b1, w2, b2)
    out = jax.block_until_ready(out)

    # Plain-JAX reference.
    pooled = jnp.mean(feat, axis=(2, 3))
    h = jnp.maximum(pooled @ w1 + b1, 0.0)
    logits = h @ w2 + b2
    ref = jax.nn.log_softmax(logits, axis=1)

    assert out.shape == (B, NUM_CLASSES)
    assert jnp.allclose(out, ref, atol=3e-5, rtol=3e-5)

    print("KERNEL_OK")
</pallas_src>

<mosaic_0001>
module attributes {stable_mosaic.version = 11 : i64} {
  func.func @_head_kernel(%arg0: i32, %arg1: i32, %arg2: memref<8x288x128xf32, #tpu.memory_space<vmem>>, %arg3: memref<288x256xf32, #tpu.memory_space<vmem>>, %arg4: memref<1x256xf32, #tpu.memory_space<vmem>>, %arg5: memref<256x128xf32, #tpu.memory_space<vmem>>, %arg6: memref<1x128xf32, #tpu.memory_space<vmem>>, %arg7: memref<8x128xf32, #tpu.memory_space<vmem>>, %arg8: memref<8x288x128xf32, #tpu.memory_space<vmem>>) attributes {dimension_semantics = [#tpu.dimension_semantics<parallel>, #tpu.dimension_semantics<arbitrary>], iteration_bounds = array<i64: 1, 1>, scalar_prefetch = 0 : i64, scratch_operands = 1 : i64, tpu.core_type = #tpu.core_type<tc>, window_params = [{transform_indices = @transform_0, window_bounds = array<i64: 8, 288, 128>}, {pipeline_mode = #tpu.pipeline_mode<synchronous>, transform_indices = @transform_1, window_bounds = array<i64: 288, 256>}, {pipeline_mode = #tpu.pipeline_mode<synchronous>, transform_indices = @transform_2, window_bounds = array<i64: 1, 256>}, {pipeline_mode = #tpu.pipeline_mode<synchronous>, transform_indices = @transform_3, window_bounds = array<i64: 256, 128>}, {pipeline_mode = #tpu.pipeline_mode<synchronous>, transform_indices = @transform_4, window_bounds = array<i64: 1, 128>}, {transform_indices = @transform_5, window_bounds = array<i64: 8, 128>}]} {
    %c0_i32 = arith.constant 0 : i32
    %0 = arith.cmpi eq, %arg1, %c0_i32 : i32
    %1 = arith.extui %0 : i1 to i32
    %c0_i32_0 = arith.constant 0 : i32
    %2 = arith.cmpi ne, %1, %c0_i32_0 : i32
    scf.if %2 {
      %cst = arith.constant 0.000000e+00 : f32
      %10 = vector.broadcast %cst : f32 to vector<8x288x128xf32>
      %c0_11 = arith.constant 0 : index
      %c0_12 = arith.constant 0 : index
      %c0_13 = arith.constant 0 : index
      %11 = vector.load %arg8[%c0_11, %c0_12, %c0_13] : memref<8x288x128xf32, #tpu.memory_space<vmem>>, vector<8x288x128xf32>
      tpu.vector_store %arg8[%c0_11, %c0_12, %c0_13], %10 {strides = array<i32>} : memref<8x288x128xf32, #tpu.memory_space<vmem>>, vector<8x288x128xf32>,
    } else {
    }
    %c0 = arith.constant 0 : index
    %c0_1 = arith.constant 0 : index
    %c0_2 = arith.constant 0 : index
    %3 = vector.load %arg2[%c0, %c0_1, %c0_2] : memref<8x288x128xf32, #tpu.memory_space<vmem>>, vector<8x288x128xf32>
    %c0_3 = arith.constant 0 : index
    %c0_4 = arith.constant 0 : index
    %c0_5 = arith.constant 0 : index
    %4 = vector.load %arg8[%c0_3, %c0_4, %c0_5] : memref<8x288x128xf32, #tpu.memory_space<vmem>>, vector<8x288x128xf32>
    %5 = arith.addf %4, %3 : vector<8x288x128xf32>
    %c0_6 = arith.constant 0 : index
    %c0_7 = arith.constant 0 : index
    %c0_8 = arith.constant 0 : index
    %6 = vector.load %arg8[%c0_6, %c0_7, %c0_8] : memref<8x288x128xf32, #tpu.memory_space<vmem>>, vector<8x288x128xf32>
    tpu.vector_store %arg8[%c0_6, %c0_7, %c0_8], %5 {strides = array<i32>} : memref<8x288x128xf32, #tpu.memory_space<vmem>>, vector<8x288x128xf32>,
    %c0_i32_9 = arith.constant 0 : i32
    %7 = arith.cmpi eq, %arg1, %c0_i32_9 : i32
    %8 = arith.extui %7 : i1 to i32
    %c0_i32_10 = arith.constant 0 : i32
    %9 = arith.cmpi ne, %8, %c0_i32_10 : i32
    scf.if %9 {
      %c0_11 = arith.constant 0 : index
      %c0_12 = arith.constant 0 : index
      %c0_13 = arith.constant 0 : index
      %10 = vector.load %arg8[%c0_11, %c0_12, %c0_13] : memref<8x288x128xf32, #tpu.memory_space<vmem>>, vector<8x288x128xf32>
      %cst = arith.constant dense<0.000000e+00> : vector<8x288xf32>
      %11 = vector.multi_reduction <add>, %10, %cst [2] : vector<8x288x128xf32> to vector<8x288xf32>
      %cst_14 = arith.constant 1.562500e-02 : f32
      %12 = vector.broadcast %cst_14 : f32 to vector<8x288xf32>
      %13 = arith.mulf %11, %12 : vector<8x288xf32>
      %c0_15 = arith.constant 0 : index
      %c0_16 = arith.constant 0 : index
      %14 = vector.load %arg3[%c0_15, %c0_16] : memref<288x256xf32, #tpu.memory_space<vmem>>, vector<288x256xf32>
      %cst_17 = arith.constant dense<0.000000e+00> : vector<8x256xf32>
      %15 = tpu.matmul %13, %14, %cst_17 {dimension_numbers = #tpu.dot_dimension_numbers<[1], [0], [0], [1], [0, 0, 1, 1], [], []>} : vector<8x288xf32>, vector<288x256xf32>, vector<8x256xf32> -> vector<8x256xf32>
      %c0_18 = arith.constant 0 : index
      %c0_19 = arith.constant 0 : index
      %16 = vector.load %arg4[%c0_18, %c0_19] : memref<1x256xf32, #tpu.memory_space<vmem>>, vector<1x256xf32>
      %17 = vector.broadcast %16 : vector<1x256xf32> to vector<8x256xf32>
      %18 = arith.addf %15, %17 : vector<8x256xf32>
      %cst_20 = arith.constant 0.000000e+00 : f32
      %19 = vector.broadcast %cst_20 : f32 to vector<8x256xf32>
      %20 = arith.maximumf %18, %19 : vector<8x256xf32>
      %c0_21 = arith.constant 0 : index
      %c0_22 = arith.constant 0 : index
      %21 = vector.load %arg5[%c0_21, %c0_22] : memref<256x128xf32, #tpu.memory_space<vmem>>, vector<256x128xf32>
      %cst_23 = arith.constant dense<0.000000e+00> : vector<8x128xf32>
      %22 = tpu.matmul %20, %21, %cst_23 {dimension_numbers = #tpu.dot_dimension_numbers<[1], [0], [0], [1], [0, 0, 1, 1], [], []>} : vector<8x256xf32>, vector<256x128xf32>, vector<8x128xf32> -> vector<8x128xf32>
      %c0_24 = arith.constant 0 : index
      %c0_25 = arith.constant 0 : index
      %23 = vector.load %arg6[%c0_24, %c0_25] : memref<1x128xf32, #tpu.memory_space<vmem>>, vector<1x128xf32>
      %24 = vector.broadcast %23 : vector<1x128xf32> to vector<8x128xf32>
      %25 = arith.addf %22, %24 : vector<8x128xf32>
      %26 = tpu.iota {dimensions = array<i32: 1>} : vector<8x128xi32>
      %c2_i32 = arith.constant 2 : i32
      %27 = vector.broadcast %c2_i32 : i32 to vector<8x128xi32>
      %28 = arith.cmpi slt, %26, %27 : vector<8x128xi32>
      %cst_26 = arith.constant -1.000000e+30 : f32
      %29 = vector.broadcast %cst_26 : f32 to vector<8x128xf32>
      %30 = arith.select %28, %25, %29 : vector<8x128xi1>, vector<8x128xf32>
      %cst_27 = arith.constant dense<0xFF800000> : vector<8xf32>
      %31 = vector.multi_reduction <maximumf>, %30, %cst_27 [1] : vector<8x128xf32> to vector<8xf32>
      %32 = vector.shape_cast %31 : vector<8xf32> to vector<8x1xf32>
      %33 = vector.broadcast %32 : vector<8x1xf32> to vector<8x128xf32>
      %34 = arith.subf %30, %33 : vector<8x128xf32>
      %35 = math.exp %34 : vector<8x128xf32>
      %cst_28 = arith.constant dense<0.000000e+00> : vector<8xf32>
      %36 = vector.multi_reduction <add>, %35, %cst_28 [1] : vector<8x128xf32> to vector<8xf32>
      %37 = vector.shape_cast %36 : vector<8xf32> to vector<8x1xf32>
      %38 = math.log %37 : vector<8x1xf32>
      %39 = vector.broadcast %38 : vector<8x1xf32> to vector<8x128xf32>
      %40 = arith.subf %34, %39 : vector<8x128xf32>
      %c0_29 = arith.constant 0 : index
      %c0_30 = arith.constant 0 : index
      %41 = vector.load %arg7[%c0_29, %c0_30] : memref<8x128xf32, #tpu.memory_space<vmem>>, vector<8x128xf32>
      tpu.vector_store %arg7[%c0_29, %c0_30], %40 {strides = array<i32>} : memref<8x128xf32, #tpu.memory_space<vmem>>, vector<8x128xf32>,
    } else {
    }
    return
  }
  func.func @transform_0(%arg0: i32, %arg1: i32) -> (i32, i32, i32) {
    %c0_i32 = arith.constant 0 : i32
    %c0_i32_0 = arith.constant 0 : i32
    return %arg0, %c0_i32, %arg1 : i32, i32, i32
  }
  func.func @transform_1(%arg0: i32, %arg1: i32) -> (i32, i32) {
    %c0_i32 = arith.constant 0 : i32
    %c0_i32_0 = arith.constant 0 : i32
    %c0_i32_1 = arith.constant 0 : i32
    return %c0_i32, %c0_i32_0 : i32, i32
  }
  func.func @transform_2(%arg0: i32, %arg1: i32) -> (i32, i32) {
    %c0_i32 = arith.constant 0 : i32
    %c0_i32_0 = arith.constant 0 : i32
    %c0_i32_1 = arith.constant 0 : i32
    return %c0_i32, %c0_i32_0 : i32, i32
  }
  func.func @transform_3(%arg0: i32, %arg1: i32) -> (i32, i32) {
    %c0_i32 = arith.constant 0 : i32
    %c0_i32_0 = arith.constant 0 : i32
    %c0_i32_1 = arith.constant 0 : i32
    return %c0_i32, %c0_i32_0 : i32, i32
  }
  func.func @transform_4(%arg0: i32, %arg1: i32) -> (i32, i32) {
    %c0_i32 = arith.constant 0 : i32
    %c0_i32_0 = arith.constant 0 : i32
    %c0_i32_1 = arith.constant 0 : i32
    return %c0_i32, %c0_i32_0 : i32, i32
  }
  func.func @transform_5(%arg0: i32, %arg1: i32) -> (i32, i32) {
    %c0_i32 = arith.constant 0 : i32
    %c0_i32_0 = arith.constant 0 : i32
    return %arg0, %c0_i32 : i32, i32
  }
}

</mosaic_0001>

<llo_original>
// kernel: tpu_custom_call.1
$region0: #{tpu_custom_call.1}
  #allocation0 [shape = 'u32[]', space=smem, size = 0x4, offset = 0x4, fixed_abs, tag = 'smem constant byte address 0x4 - core index']
  #allocation1 [shape = 'u32[144,128]{1,0:T(1,128)}', space=vmem, size = 0x12000, scoped, tag = 'internal scratch']
  #allocation2 [shape = 'f32[8,288,128]{2,1,0:T(8,128)}', space=vmem, size = 0x120000, scoped, tag = 'scratch operand']
  %s0 = inlined_call_operand.hbm [shape: f32[8,288,128], index: 0, kind: input, shape index: {}]
  %s1 = inlined_call_operand.hbm [shape: f32[288,256], index: 1, kind: input, shape index: {}]
  %s2 = inlined_call_operand.hbm [shape: f32[1,256], index: 2, kind: input, shape index: {}]
  %s3 = inlined_call_operand.hbm [shape: f32[256,128], index: 3, kind: input, shape index: {}]
  %s4 = inlined_call_operand.hbm [shape: f32[1,128], index: 4, kind: input, shape index: {}]
  %s5 = inlined_call_operand.hbm [shape: f32[8,128], index: 5, kind: output, shape index: {}]
  %s6 = sld [smem:[#allocation0]]
  $region58: #{tpu_custom_call.1} parent=0
    _
  %s8 = ssub.s32 1, %s6
  %s9 = scalar_select 0, %s8, %s6
  $region1: #{tpu_custom_call.1} parent=0
    #allocation3 [shape = 'u8[1179648]{0}', space=vmem, size = 0x120000, scoped, tag = 'input window, operand 0, single buffered']
    #allocation4 [shape = 's32[1]{0}', space=sflag, size = 0x4, scoped, tag = 'scoped memory for tpu_custom_call.1']
    #allocation5 [shape = 's32[1]{0}', space=sflag, size = 0x4, scoped, tag = 'scoped memory for tpu_custom_call.1']
    #allocation6 [shape = 'u8[294912]{0}', space=vmem, size = 0x48000, scoped, tag = 'input window, operand 1, single buffered']
    #allocation7 [shape = 's32[1]{0}', space=sflag, size = 0x4, scoped, tag = 'scoped memory for tpu_custom_call.1']
    #allocation8 [shape = 'u8[1024]{0}', space=vmem, size = 0x400, scoped, tag = 'input window, operand 2, single buffered']
    #allocation9 [shape = 'u8[131072]{0}', space=vmem, size = 0x20000, scoped, tag = 'input window, operand 3, single buffered']
    #allocation10 [shape = 's32[1]{0}', space=sflag, size = 0x4, scoped, tag = 'scoped memory for tpu_custom_call.1']
    #allocation11 [shape = 'u8[512]{0}', space=vmem, size = 0x400, scoped, tag = 'input window, operand 4, single buffered']
    #allocation12 [shape = 'u8[4096]{0}', space=vmem, size = 0x1000, scoped, tag = 'output window, operand 0, single buffered']
    %10 = vsyncpa [#allocation4], 0
    %11 = vsyncpa [#allocation7], 0
    %12 = vsyncpa [#allocation10], 0
    %13 = vsyncpa [#allocation5], 0
    // Predicated region
    $region2: #{tpu_custom_call.1} parent=1 // pred_check
      _
    $region3: #{tpu_custom_call.1} parent=1 // pred_check_branch
      %15 = sbr.rel (0) target = $region5
    $region4: #{tpu_custom_call.1} parent=1 // pred_region
      %s17 = ssub.s32 36864, 36864
      %18 = vsyncadd [#allocation4], %s17
      %s19 = sshll.u32 [#allocation3], 4
      %s20 = int_to_ptr.vmem [resolvable:$true] %s19
      %25 = dma.hbm_to_vmem [thread:$0]  %s0, 36864, %s20, [#allocation4], 128, 128, 8
    $region5: #{tpu_custom_call.1} parent=1 // pred_fallthru
      _
    // Predicated region
    $region6: #{tpu_custom_call.1} parent=1 // pred_check
      _
    $region7: #{tpu_custom_call.1} parent=1 // pred_check_branch
      %27 = sbr.rel (0) target = $region9
    $region8: #{tpu_custom_call.1} parent=1 // pred_region
      %s29 = ssub.s32 9216, 9216
      %30 = vsyncadd [#allocation7], %s29
      %s31 = sshll.u32 [#allocation6], 4
      %s32 = int_to_ptr.vmem [resolvable:$true] %s31
      %37 = dma.hbm_to_vmem [thread:$0]  %s1, 9216, %s32, [#allocation7], 256, 256, 16
    $region9: #{tpu_custom_call.1} parent=1 // pred_fallthru
      _
    // Predicated region
    $region10: #{tpu_custom_call.1} parent=1 // pred_check
      _
    $region11: #{tpu_custom_call.1} parent=1 // pred_check_branch
      %39 = sbr.rel (0) target = $region13
    $region12: #{tpu_custom_call.1} parent=1 // pred_region
      %s41 = ssub.s32 32, 32
      %42 = vsyncadd [#allocation7], %s41
      %s44 = sshll.u32 [#allocation8], 4
      %s45 = int_to_ptr.vmem [resolvable:$true] %s44
      %47 = dma.hbm_to_vmem [thread:$0]  %s2, 32, %s45, [#allocation7]
    $region13: #{tpu_custom_call.1} parent=1 // pred_fallthru
      _
    // Predicated region
    $region14: #{tpu_custom_call.1} parent=1 // pred_check
      _
    $region15: #{tpu_custom_call.1} parent=1 // pred_check_branch
      %49 = sbr.rel (0) target = $region17
    $region16: #{tpu_custom_call.1} parent=1 // pred_region
      %s51 = ssub.s32 4096, 4096
      %52 = vsyncadd [#allocation10], %s51
      %s53 = sshll.u32 [#allocation9], 4
      %s54 = int_to_ptr.vmem [resolvable:$true] %s53
      %59 = dma.hbm_to_vmem [thread:$0]  %s3, 4096, %s54, [#allocation10], 128, 128, 8
    $region17: #{tpu_custom_call.1} parent=1 // pred_fallthru
      _
    // Predicated region
    $region18: #{tpu_custom_call.1} parent=1 // pred_check
      _
    $region19: #{tpu_custom_call.1} parent=1 // pred_check_branch
      %61 = sbr.rel (0) target = $region21
    $region20: #{tpu_custom_call.1} parent=1 // pred_region
      %s63 = ssub.s32 16, 16
      %64 = vsyncadd [#allocation10], %s63
      %s66 = sshll.u32 [#allocation11], 4
      %s67 = int_to_ptr.vmem [resolvable:$true] %s66
      %69 = dma.hbm_to_vmem [thread:$0]  %s4, 16, %s67, [#allocation10]
    $region21: #{tpu_custom_call.1} parent=1 // pred_fallthru
      _
    // Predicated region
    $region22: #{tpu_custom_call.1} parent=1 // pred_check
      _
    $region23: #{tpu_custom_call.1} parent=1 // pred_check_branch
      %71 = sbr.rel (0) target = $region25
    $region24: #{tpu_custom_call.1} parent=1 // pred_region
      %72 = dma.done [#allocation4], 36864
    $region25: #{tpu_custom_call.1} parent=1 // pred_fallthru
      _
    // Predicated region
    $region26: #{tpu_custom_call.1} parent=1 // pred_check
      _
    $region27: #{tpu_custom_call.1} parent=1 // pred_check_branch
      %74 = sbr.rel (0) target = $region29
    $region28: #{tpu_custom_call.1} parent=1 // pred_region
      %75 = dma.done [#allocation7], 9216
    $region29: #{tpu_custom_call.1} parent=1 // pred_fallthru
      _
    // Predicated region
    $region30: #{tpu_custom_call.1} parent=1 // pred_check
      _
    $region31: #{tpu_custom_call.1} parent=1 // pred_check_branch
      %77 = sbr.rel (0) target = $region33
    $region32: #{tpu_custom_call.1} parent=1 // pred_region
      %78 = dma.done [#allocation7], 32
    $region33: #{tpu_custom_call.1} parent=1 // pred_fallthru
      _
    // Predicated region
    $region34: #{tpu_custom_call.1} parent=1 // pred_check
      _
    $region35: #{tpu_custom_call.1} parent=1 // pred_check_branch
      %80 = sbr.rel (0) target = $region37
    $region36: #{tpu_custom_call.1} parent=1 // pred_region
      %81 = dma.done [#allocation10], 4096
    $region37: #{tpu_custom_call.1} parent=1 // pred_fallthru
      _
    // Predicated region
    $region38: #{tpu_custom_call.1} parent=1 // pred_check
      _
    $region39: #{tpu_custom_call.1} parent=1 // pred_check_branch
      %83 = sbr.rel (0) target = $region41
    $region40: #{tpu_custom_call.1} parent=1 // pred_region
      %84 = dma.done [#allocation10], 16
    $region41: #{tpu_custom_call.1} parent=1 // pred_fallthru
      _
    %p85 = scmp.eq.s32.totalorder 0, 0
    // Predicated region
    $region42: #{tpu_custom_call.1} parent=1 // pred_check
      %p86 = pneg %p85
    $region43: #{tpu_custom_call.1} parent=1 // pred_check_branch
      %88 = sbr.rel (%p86) target = $region45
    $region44: #{tpu_custom_call.1} parent=1 // pred_region
      %89 = vst [vmem:[#allocation2] sm:$0xff] 0.0
      %90 = vst [vmem:[#allocation2 + $0x8] sm:$0xff] 0.0
      %91 = vst [vmem:[#allocation2 + $0x10] sm:$0xff] 0.0
      %92 = vst [vmem:[#allocation2 + $0x18] sm:$0xff] 0.0
      %93 = vst [vmem:[#allocation2 + $0x20] sm:$0xff] 0.0
      %94 = vst [vmem:[#allocation2 + $0x28] sm:$0xff] 0.0
      %95 = vst [vmem:[#allocation2 + $0x30] sm:$0xff] 0.0
      %96 = vst [vmem:[#allocation2 + $0x38] sm:$0xff] 0.0
      %97 = vst [vmem:[#allocation2 + $0x40] sm:$0xff] 0.0
      %98 = vst [vmem:[#allocation2 + $0x48] sm:$0xff] 0.0
      %99 = vst [vmem:[#allocation2 + $0x50] sm:$0xff] 0.0
      %100 = vst [vmem:[#allocation2 + $0x58] sm:$0xff] 0.0
      %101 = vst [vmem:[#allocation2 + $0x60] sm:$0xff] 0.0
      %102 = vst [vmem:[#allocation2 + $0x68] sm:$0xff] 0.0
      %103 = vst [vmem:[#allocation2 + $0x70] sm:$0xff] 0.0
      %104 = vst [vmem:[#allocation2 + $0x78] sm:$0xff] 0.0
      %105 = vst [vmem:[#allocation2 + $0x80] sm:$0xff] 0.0
      %106 = vst [vmem:[#allocation2 + $0x88] sm:$0xff] 0.0
      %107 = vst [vmem:[#allocation2 + $0x90] sm:$0xff] 0.0
      %108 = vst [vmem:[#allocation2 + $0x98] sm:$0xff] 0.0
      %109 = vst [vmem:[#allocation2 + $0xa0] sm:$0xff] 0.0
      %110 = vst [vmem:[#allocation2 + $0xa8] sm:$0xff] 0.0
      %111 = vst [vmem:[#allocation2 + $0xb0] sm:$0xff] 0.0
      %112 = vst [vmem:[#allocation2 + $0xb8] sm:$0xff] 0.0
      %113 = vst [vmem:[#allocation2 + $0xc0] sm:$0xff] 0.0
      %114 = vst [vmem:[#allocation2 + $0xc8] sm:$0xff] 0.0
      %115 = vst [vmem:[#allocation2 + $0xd0] sm:$0xff] 0.0
      %116 = vst [vmem:[#allocation2 + $0xd8] sm:$0xff] 0.0
      %117 = vst [vmem:[#allocation2 + $0xe0] sm:$0xff] 0.0
      %118 = vst [vmem:[#allocation2 + $0xe8] sm:$0xff] 0.0
      %119 = vst [vmem:[#allocation2 + $0xf0] sm:$0xff] 0.0
      %120 = vst [vmem:[#allocation2 + $0xf8] sm:$0xff] 0.0
      %121 = vst [vmem:[#allocation2 + $0x100] sm:$0xff] 0.0
      %122 = vst [vmem:[#allocation2 + $0x108] sm:$0xff] 0.0
      %123 = vst [vmem:[#allocation2 + $0x110] sm:$0xff] 0.0
      %124 = vst [vmem:[#allocation2 + $0x118] sm:$0xff] 0.0
      %125 = vst [vmem:[#allocation2 + $0x120] sm:$0xff] 0.0
      %126 = vst [vmem:[#allocation2 + $0x128] sm:$0xff] 0.0
      %127 = vst [vmem:[#allocation2 + $0x130] sm:$0xff] 0.0
      %128 = vst [vmem:[#allocation2 + $0x138] sm:$0xff] 0.0
      %129 = vst [vmem:[#allocation2 + $0x140] sm:$0xff] 0.0
      %130 = vst [vmem:[#allocation2 + $0x148] sm:$0xff] 0.0
      %131 = vst [vmem:[#allocation2 + $0x150] sm:$0xff] 0.0
      %132 = vst [vmem:[#allocation2 + $0x158] sm:$0xff] 0.0
      %133 = vst [vmem:[#allocation2 + $0x160] sm:$0xff] 0.0
      %134 = vst [vmem:[#allocation2 + $0x168] sm:$0xff] 0.0
      %135 = vst [vmem:[#allocation2 + $0x170] sm:$0xff] 0.0
      %136 = vst [vmem:[#allocation2 + $0x178] sm:$0xff] 0.0
      %137 = vst [vmem:[#allocation2 + $0x180] sm:$0xff] 0.0
      %138 = vst [vmem:[#allocation2 + $0x188] sm:$0xff] 0.0
      %139 = vst [vmem:[#allocation2 + $0x190] sm:$0xff] 0.0
      %140 = vst [vmem:[#allocation2 + $0x198] sm:$0xff] 0.0
      %141 = vst [vmem:[#allocation2 + $0x1a0] sm:$0xff] 0.0
      %142 = vst [vmem:[#allocation2 + $0x1a8] sm:$0xff] 0.0
      %143 = vst [vmem:[#allocation2 + $0x1b0] sm:$0xff] 0.0
      %144 = vst [vmem:[#allocation2 + $0x1b8] sm:$0xff] 0.0
      %145 = vst [vmem:[#allocation2 + $0x1c0] sm:$0xff] 0.0
      %146 = vst [vmem:[#allocation2 + $0x1c8] sm:$0xff] 0.0
      %147 = vst [vmem:[#allocation2 + $0x1d0] sm:$0xff] 0.0
      %148 = vst [vmem:[#allocation2 + $0x1d8] sm:$0xff] 0.0
      %149 = vst [vmem:[#allocation2 + $0x1e0] sm:$0xff] 0.0
      %150 = vst [vmem:[#allocation2 + $0x1e8] sm:$0xff] 0.0
      %151 = vst [vmem:[#allocation2 + $0x1f0] sm:$0xff] 0.0
      %152 = vst [vmem:[#allocation2 + $0x1f8] sm:$0xff] 0.0
      %153 = vst [vmem:[#allocation2 + $0x200] sm:$0xff] 0.0
      %154 = vst [vmem:[#allocation2 + $0x208] sm:$0xff] 0.0
      %155 = vst [vmem:[#allocation2 + $0x210] sm:$0xff] 0.0
      %156 = vst [vmem:[#allocation2 + $0x218] sm:$0xff] 0.0
      %157 = vst [vmem:[#allocation2 + $0x220] sm:$0xff] 0.0
      %158 = vst [vmem:[#allocation2 + $0x228] sm:$0xff] 0.0
      %159 = vst [vmem:[#allocation2 + $0x230] sm:$0xff] 0.0
      %160 = vst [vmem:[#allocation2 + $0x238] sm:$0xff] 0.0
      %161 = vst [vmem:[#allocation2 + $0x240] sm:$0xff] 0.0
      %162 = vst [vmem:[#allocation2 + $0x248] sm:$0xff] 0.0
      %163 = vst [vmem:[#allocation2 + $0x250] sm:$0xff] 0.0
      %164 = vst [vmem:[#allocation2 + $0x258] sm:$0xff] 0.0
      %165 = vst [vmem:[#allocation2 + $0x260] sm:$0xff] 0.0
      %166 = vst [vmem:[#allocation2 + $0x268] sm:$0xff] 0.0
      %167 = vst [vmem:[#allocation2 + $0x270] sm:$0xff] 0.0
      %168 = vst [vmem:[#allocation2 + $0x278] sm:$0xff] 0.0
      %169 = vst [vmem:[#allocation2 + $0x280] sm:$0xff] 0.0
      %170 = vst [vmem:[#allocation2 + $0x288] sm:$0xff] 0.0
      %171 = vst [vmem:[#allocation2 + $0x290] sm:$0xff] 0.0
      %172 = vst [vmem:[#allocation2 + $0x298] sm:$0xff] 0.0
      %173 = vst [vmem:[#allocation2 + $0x2a0] sm:$0xff] 0.0
      %174 = vst [vmem:[#allocation2 + $0x2a8] sm:$0xff] 0.0
      %175 = vst [vmem:[#allocation2 + $0x2b0] sm:$0xff] 0.0
      %176 = vst [vmem:[#allocation2 + $0x2b8] sm:$0xff] 0.0
      %177 = vst [vmem:[#allocation2 + $0x2c0] sm:$0xff] 0.0
      %178 = vst [vmem:[#allocation2 + $0x2c8] sm:$0xff] 0.0
      %179 = vst [vmem:[#allocation2 + $0x2d0] sm:$0xff] 0.0
      %180 = vst [vmem:[#allocation2 + $0x2d8] sm:$0xff] 0.0
      %181 = vst [vmem:[#allocation2 + $0x2e0] sm:$0xff] 0.0
      %182 = vst [vmem:[#allocation2 + $0x2e8] sm:$0xff] 0.0
      %183 = vst [vmem:[#allocation2 + $0x2f0] sm:$0xff] 0.0
      %184 = vst [vmem:[#allocation2 + $0x2f8] sm:$0xff] 0.0
      %185 = vst [vmem:[#allocation2 + $0x300] sm:$0xff] 0.0
      %186 = vst [vmem:[#allocation2 + $0x308] sm:$0xff] 0.0
      %187 = vst [vmem:[#allocation2 + $0x310] sm:$0xff] 0.0
      %188 = vst [vmem:[#allocation2 + $0x318] sm:$0xff] 0.0
      %189 = vst [vmem:[#allocation2 + $0x320] sm:$0xff] 0.0
      %190 = vst [vmem:[#allocation2 + $0x328] sm:$0xff] 0.0
      %191 = vst [vmem:[#allocation2 + $0x330] sm:$0xff] 0.0
      %192 = vst [vmem:[#allocation2 + $0x338] sm:$0xff] 0.0
      %193 = vst [vmem:[#allocation2 + $0x340] sm:$0xff] 0.0
      %194 = vst [vmem:[#allocation2 + $0x348] sm:$0xff] 0.0
      %195 = vst [vmem:[#allocation2 + $0x350] sm:$0xff] 0.0
      %196 = vst [vmem:[#allocation2 + $0x358] sm:$0xff] 0.0
      %197 = vst [vmem:[#allocation2 + $0x360] sm:$0xff] 0.0
      %198 = vst [vmem:[#allocation2 + $0x368] sm:$0xff] 0.0
      %199 = vst [vmem:[#allocation2 + $0x370] sm:$0xff] 0.0
      %200 = vst [vmem:[#allocation2 + $0x378] sm:$0xff] 0.0
      %201 = vst [vmem:[#allocation2 + $0x380] sm:$0xff] 0.0
      %202 = vst [vmem:[#allocation2 + $0x388] sm:$0xff] 0.0
      %203 = vst [vmem:[#allocation2 + $0x390] sm:$0xff] 0.0
      %204 = vst [vmem:[#allocation2 + $0x398] sm:$0xff] 0.0
      %205 = vst [vmem:[#allocation2 + $0x3a0] sm:$0xff] 0.0
      %206 = vst [vmem:[#allocation2 + $0x3a8] sm:$0xff] 0.0
      %207 = vst [vmem:[#allocation2 + $0x3b0] sm:$0xff] 0.0
      %208 = vst [vmem:[#allocation2 + $0x3b8] sm:$0xff] 0.0
      %209 = vst [vmem:[#allocation2 + $0x3c0] sm:$0xff] 0.0
      %210 = vst [vmem:[#allocation2 + $0x3c8] sm:$0xff] 0.0
      %211 = vst [vmem:[#allocation2 + $0x3d0] sm:$0xff] 0.0
      %212 = vst [vmem:[#allocation2 + $0x3d8] sm:$0xff] 0.0
      %213 = vst [vmem:[#allocation2 + $0x3e0] sm:$0xff] 0.0
      %214 = vst [vmem:[#allocation2 + $0x3e8] sm:$0xff] 0.0
      %215 = vst [vmem:[#allocation2 + $0x3f0] sm:$0xff] 0.0
      %216 = vst [vmem:[#allocation2 + $0x3f8] sm:$0xff] 0.0
      %217 = vst [vmem:[#allocation2 + $0x400] sm:$0xff] 0.0
      %218 = vst [vmem:[#allocation2 + $0x408] sm:$0xff] 0.0
      %219 = vst [vmem:[#allocation2 + $0x410] sm:$0xff] 0.0
      %220 = vst [vmem:[#allocation2 + $0x418] sm:$0xff] 0.0
      %221 = vst [vmem:[#allocation2 + $0x420] sm:$0xff] 0.0
      %222 = vst [vmem:[#allocation2 + $0x428] sm:$0xff] 0.0
      %223 = vst [vmem:[#allocation2 + $0x430] sm:$0xff] 0.0
      %224 = vst [vmem:[#allocation2 + $0x438] sm:$0xff] 0.0
      %225 = vst [vmem:[#allocation2 + $0x440] sm:$0xff] 0.0
      %226 = vst [vmem:[#allocation2 + $0x448] sm:$0xff] 0.0
      %227 = vst [vmem:[#allocation2 + $0x450] sm:$0xff] 0.0
      %228 = vst [vmem:[#allocation2 + $0x458] sm:$0xff] 0.0
      %229 = vst [vmem:[#allocation2 + $0x460] sm:$0xff] 0.0
      %230 = vst [vmem:[#allocation2 + $0x468] sm:$0xff] 0.0
      %231 = vst [vmem:[#allocation2 + $0x470] sm:$0xff] 0.0
      %232 = vst [vmem:[#allocation2 + $0x478] sm:$0xff] 0.0
      %233 = vst [vmem:[#allocation2 + $0x480] sm:$0xff] 0.0
      %234 = vst [vmem:[#allocation2 + $0x488] sm:$0xff] 0.0
      %235 = vst [vmem:[#allocation2 + $0x490] sm:$0xff] 0.0
      %236 = vst [vmem:[#allocation2 + $0x498] sm:$0xff] 0.0
      %237 = vst [vmem:[#allocation2 + $0x4a0] sm:$0xff] 0.0
      %238 = vst [vmem:[#allocation2 + $0x4a8] sm:$0xff] 0.0
      %239 = vst [vmem:[#allocation2 + $0x4b0] sm:$0xff] 0.0
      %240 = vst [vmem:[#allocation2 + $0x4b8] sm:$0xff] 0.0
      %241 = vst [vmem:[#allocation2 + $0x4c0] sm:$0xff] 0.0
      %242 = vst [vmem:[#allocation2 + $0x4c8] sm:$0xff] 0.0
      %243 = vst [vmem:[#allocation2 + $0x4d0] sm:$0xff] 0.0
      %244 = vst [vmem:[#allocation2 + $0x4d8] sm:$0xff] 0.0
      %245 = vst [vmem:[#allocation2 + $0x4e0] sm:$0xff] 0.0
      %246 = vst [vmem:[#allocation2 + $0x4e8] sm:$0xff] 0.0
      %247 = vst [vmem:[#allocation2 + $0x4f0] sm:$0xff] 0.0
      %248 = vst [vmem:[#allocation2 + $0x4f8] sm:$0xff] 0.0
      %249 = vst [vmem:[#allocation2 + $0x500] sm:$0xff] 0.0
      %250 = vst [vmem:[#allocation2 + $0x508] sm:$0xff] 0.0
      %251 = vst [vmem:[#allocation2 + $0x510] sm:$0xff] 0.0
      %252 = vst [vmem:[#allocation2 + $0x518] sm:$0xff] 0.0
      %253 = vst [vmem:[#allocation2 + $0x520] sm:$0xff] 0.0
      %254 = vst [vmem:[#allocation2 + $0x528] sm:$0xff] 0.0
      %255 = vst [vmem:[#allocation2 + $0x530] sm:$0xff] 0.0
      %256 = vst [vmem:[#allocation2 + $0x538] sm:$0xff] 0.0
      %257 = vst [vmem:[#allocation2 + $0x540] sm:$0xff] 0.0
      %258 = vst [vmem:[#allocation2 + $0x548] sm:$0xff] 0.0
      %259 = vst [vmem:[#allocation2 + $0x550] sm:$0xff] 0.0
      %260 = vst [vmem:[#allocation2 + $0x558] sm:$0xff] 0.0
      %261 = vst [vmem:[#allocation2 + $0x560] sm:$0xff] 0.0
      %262 = vst [vmem:[#allocation2 + $0x568] sm:$0xff] 0.0
      %263 = vst [vmem:[#allocation2 + $0x570] sm:$0xff] 0.0
      %264 = vst [vmem:[#allocation2 + $0x578] sm:$0xff] 0.0
      %265 = vst [vmem:[#allocation2 + $0x580] sm:$0xff] 0.0
      %266 = vst [vmem:[#allocation2 + $0x588] sm:$0xff] 0.0
      %267 = vst [vmem:[#allocation2 + $0x590] sm:$0xff] 0.0
      %268 = vst [vmem:[#allocation2 + $0x598] sm:$0xff] 0.0
      %269 = vst [vmem:[#allocation2 + $0x5a0] sm:$0xff] 0.0
      %270 = vst [vmem:[#allocation2 + $0x5a8] sm:$0xff] 0.0
      %271 = vst [vmem:[#allocation2 + $0x5b0] sm:$0xff] 0.0
      %272 = vst [vmem:[#allocation2 + $0x5b8] sm:$0xff] 0.0
      %273 = vst [vmem:[#allocation2 + $0x5c0] sm:$0xff] 0.0
      %274 = vst [vmem:[#allocation2 + $0x5c8] sm:$0xff] 0.0
      %275 = vst [vmem:[#allocation2 + $0x5d0] sm:$0xff] 0.0
      %276 = vst [vmem:[#allocation2 + $0x5d8] sm:$0xff] 0.0
      %277 = vst [vmem:[#allocation2 + $0x5e0] sm:$0xff] 0.0
      %278 = vst [vmem:[#allocation2 + $0x5e8] sm:$0xff] 0.0
      %279 = vst [vmem:[#allocation2 + $0x5f0] sm:$0xff] 0.0
      %280 = vst [vmem:[#allocation2 + $0x5f8] sm:$0xff] 0.0
      %281 = vst [vmem:[#allocation2 + $0x600] sm:$0xff] 0.0
      %282 = vst [vmem:[#allocation2 + $0x608] sm:$0xff] 0.0
      %283 = vst [vmem:[#allocation2 + $0x610] sm:$0xff] 0.0
      %284 = vst [vmem:[#allocation2 + $0x618] sm:$0xff] 0.0
      %285 = vst [vmem:[#allocation2 + $0x620] sm:$0xff] 0.0
      %286 = vst [vmem:[#allocation2 + $0x628] sm:$0xff] 0.0
      %287 = vst [vmem:[#allocation2 + $0x630] sm:$0xff] 0.0
      %288 = vst [vmem:[#allocation2 + $0x638] sm:$0xff] 0.0
      %289 = vst [vmem:[#allocation2 + $0x640] sm:$0xff] 0.0
      %290 = vst [vmem:[#allocation2 + $0x648] sm:$0xff] 0.0
      %291 = vst [vmem:[#allocation2 + $0x650] sm:$0xff] 0.0
      %292 = vst [vmem:[#allocation2 + $0x658] sm:$0xff] 0.0
      %293 = vst [vmem:[#allocation2 + $0x660] sm:$0xff] 0.0
      %294 = vst [vmem:[#allocation2 + $0x668] sm:$0xff] 0.0
      %295 = vst [vmem:[#allocation2 + $0x670] sm:$0xff] 0.0
      %296 = vst [vmem:[#allocation2 + $0x678] sm:$0xff] 0.0
      %297 = vst [vmem:[#allocation2 + $0x680] sm:$0xff] 0.0
      %298 = vst [vmem:[#allocation2 + $0x688] sm:$0xff] 0.0
      %299 = vst [vmem:[#allocation2 + $0x690] sm:$0xff] 0.0
      %300 = vst [vmem:[#allocation2 + $0x698] sm:$0xff] 0.0
      %301 = vst [vmem:[#allocation2 + $0x6a0] sm:$0xff] 0.0
      %302 = vst [vmem:[#allocation2 + $0x6a8] sm:$0xff] 0.0
      %303 = vst [vmem:[#allocation2 + $0x6b0] sm:$0xff] 0.0
      %304 = vst [vmem:[#allocation2 + $0x6b8] sm:$0xff] 0.0
      %305 = vst [vmem:[#allocation2 + $0x6c0] sm:$0xff] 0.0
      %306 = vst [vmem:[#allocation2 + $0x6c8] sm:$0xff] 0.0
      %307 = vst [vmem:[#allocation2 + $0x6d0] sm:$0xff] 0.0
      %308 = vst [vmem:[#allocation2 + $0x6d8] sm:$0xff] 0.0
      %309 = vst [vmem:[#allocation2 + $0x6e0] sm:$0xff] 0.0
      %310 = vst [vmem:[#allocation2 + $0x6e8] sm:$0xff] 0.0
      %311 = vst [vmem:[#allocation2 + $0x6f0] sm:$0xff] 0.0
      %312 = vst [vmem:[#allocation2 + $0x6f8] sm:$0xff] 0.0
      %313 = vst [vmem:[#allocation2 + $0x700] sm:$0xff] 0.0
      %314 = vst [vmem:[#allocation2 + $0x708] sm:$0xff] 0.0
      %315 = vst [vmem:[#allocation2 + $0x710] sm:$0xff] 0.0
      %316 = vst [vmem:[#allocation2 + $0x718] sm:$0xff] 0.0
      %317 = vst [vmem:[#allocation2 + $0x720] sm:$0xff] 0.0
      %318 = vst [vmem:[#allocation2 + $0x728] sm:$0xff] 0.0
      %319 = vst [vmem:[#allocation2 + $0x730] sm:$0xff] 0.0
      %320 = vst [vmem:[#allocation2 + $0x738] sm:$0xff] 0.0
      %321 = vst [vmem:[#allocation2 + $0x740] sm:$0xff] 0.0
      %322 = vst [vmem:[#allocation2 + $0x748] sm:$0xff] 0.0
      %323 = vst [vmem:[#allocation2 + $0x750] sm:$0xff] 0.0
      %324 = vst [vmem:[#allocation2 + $0x758] sm:$0xff] 0.0
      %325 = vst [vmem:[#allocation2 + $0x760] sm:$0xff] 0.0
      %326 = vst [vmem:[#allocation2 + $0x768] sm:$0xff] 0.0
      %327 = vst [vmem:[#allocation2 + $0x770] sm:$0xff] 0.0
      %328 = vst [vmem:[#allocation2 + $0x778] sm:$0xff] 0.0
      %329 = vst [vmem:[#allocation2 + $0x780] sm:$0xff] 0.0
      %330 = vst [vmem:[#allocation2 + $0x788] sm:$0xff] 0.0
      %331 = vst [vmem:[#allocation2 + $0x790] sm:$0xff] 0.0
      %332 = vst [vmem:[#allocation2 + $0x798] sm:$0xff] 0.0
      %333 = vst [vmem:[#allocation2 + $0x7a0] sm:$0xff] 0.0
      %334 = vst [vmem:[#allocation2 + $0x7a8] sm:$0xff] 0.0
      %335 = vst [vmem:[#allocation2 + $0x7b0] sm:$0xff] 0.0
      %336 = vst [vmem:[#allocation2 + $0x7b8] sm:$0xff] 0.0
      %337 = vst [vmem:[#allocation2 + $0x7c0] sm:$0xff] 0.0
      %338 = vst [vmem:[#allocation2 + $0x7c8] sm:$0xff] 0.0
      %339 = vst [vmem:[#allocation2 + $0x7d0] sm:$0xff] 0.0
      %340 = vst [vmem:[#allocation2 + $0x7d8] sm:$0xff] 0.0
      %341 = vst [vmem:[#allocation2 + $0x7e0] sm:$0xff] 0.0
      %342 = vst [vmem:[#allocation2 + $0x7e8] sm:$0xff] 0.0
      %343 = vst [vmem:[#allocation2 + $0x7f0] sm:$0xff] 0.0
      %344 = vst [vmem:[#allocation2 + $0x7f8] sm:$0xff] 0.0
      %345 = vst [vmem:[#allocation2 + $0x800] sm:$0xff] 0.0
      %346 = vst [vmem:[#allocation2 + $0x808] sm:$0xff] 0.0
      %347 = vst [vmem:[#allocation2 + $0x810] sm:$0xff] 0.0
      %348 = vst [vmem:[#allocation2 + $0x818] sm:$0xff] 0.0
      %349 = vst [vmem:[#allocation2 + $0x820] sm:$0xff] 0.0
      %350 = vst [vmem:[#allocation2 + $0x828] sm:$0xff] 0.0
      %351 = vst [vmem:[#allocation2 + $0x830] sm:$0xff] 0.0
      %352 = vst [vmem:[#allocation2 + $0x838] sm:$0xff] 0.0
      %353 = vst [vmem:[#allocation2 + $0x840] sm:$0xff] 0.0
      %354 = vst [vmem:[#allocation2 + $0x848] sm:$0xff] 0.0
      %355 = vst [vmem:[#allocation2 + $0x850] sm:$0xff] 0.0
      %356 = vst [vmem:[#allocation2 + $0x858] sm:$0xff] 0.0
      %357 = vst [vmem:[#allocation2 + $0x860] sm:$0xff] 0.0
      %358 = vst [vmem:[#allocation2 + $0x868] sm:$0xff] 0.0
      %359 = vst [vmem:[#allocation2 + $0x870] sm:$0xff] 0.0
      %360 = vst [vmem:[#allocation2 + $0x878] sm:$0xff] 0.0
      %361 = vst [vmem:[#allocation2 + $0x880] sm:$0xff] 0.0
      %362 = vst [vmem:[#allocation2 + $0x888] sm:$0xff] 0.0
      %363 = vst [vmem:[#allocation2 + $0x890] sm:$0xff] 0.0
      %364 = vst [vmem:[#allocation2 + $0x898] sm:$0xff] 0.0
      %365 = vst [vmem:[#allocation2 + $0x8a0] sm:$0xff] 0.0
      %366 = vst [vmem:[#allocation2 + $0x8a8] sm:$0xff] 0.0
      %367 = vst [vmem:[#allocation2 + $0x8b0] sm:$0xff] 0.0
      %368 = vst [vmem:[#allocation2 + $0x8b8] sm:$0xff] 0.0
      %369 = vst [vmem:[#allocation2 + $0x8c0] sm:$0xff] 0.0
      %370 = vst [vmem:[#allocation2 + $0x8c8] sm:$0xff] 0.0
      %371 = vst [vmem:[#allocation2 + $0x8d0] sm:$0xff] 0.0
      %372 = vst [vmem:[#allocation2 + $0x8d8] sm:$0xff] 0.0
      %373 = vst [vmem:[#allocation2 + $0x8e0] sm:$0xff] 0.0
      %374 = vst [vmem:[#allocation2 + $0x8e8] sm:$0xff] 0.0
      %375 = vst [vmem:[#allocation2 + $0x8f0] sm:$0xff] 0.0
      %376 = vst [vmem:[#allocation2 + $0x8f8] sm:$0xff] 0.0
    $region45: #{tpu_custom_call.1} parent=1 // pred_fallthru
      _
    %v377 = vld [vmem:[#allocation3] sm:$0xff]
    %v378 = vld [vmem:[#allocation3 + $0x8] sm:$0xff]
    %v379 = vld [vmem:[#allocation3 + $0x10] sm:$0xff]
    %v380 = vld [vmem:[#allocation3 + $0x18] sm:$0xff]
    %v381 = vld [vmem:[#allocation3 + $0x20] sm:$0xff]
    %v382 = vld [vmem:[#allocation3 + $0x28] sm:$0xff]
    %v383 = vld [vmem:[#allocation3 + $0x30] sm:$0xff]
    %v384 = vld [vmem:[#allocation3 + $0x38] sm:$0xff]
    %v385 = vld [vmem:[#allocation3 + $0x40] sm:$0xff]
    %v386 = vld [vmem:[#allocation3 + $0x48] sm:$0xff]
    %v387 = vld [vmem:[#allocation3 + $0x50] sm:$0xff]
    %v388 = vld [vmem:[#allocation3 + $0x58] sm:$0xff]
    %v389 = vld [vmem:[#allocation3 + $0x60] sm:$0xff]
    %v390 = vld [vmem:[#allocation3 + $0x68] sm:$0xff]
    %v391 = vld [vmem:[#allocation3 + $0x70] sm:$0xff]
    %v392 = vld [vmem:[#allocation3 + $0x78] sm:$0xff]
    %v393 = vld [vmem:[#allocation3 + $0x80] sm:$0xff]
    %v394 = vld [vmem:[#allocation3 + $0x88] sm:$0xff]
    %v395 = vld [vmem:[#allocation3 + $0x90] sm:$0xff]
    %v396 = vld [vmem:[#allocation3 + $0x98] sm:$0xff]
    %v397 = vld [vmem:[#allocation3 + $0xa0] sm:$0xff]
    %v398 = vld [vmem:[#allocation3 + $0xa8] sm:$0xff]
    %v399 = vld [vmem:[#allocation3 + $0xb0] sm:$0xff]
    %v400 = vld [vmem:[#allocation3 + $0xb8] sm:$0xff]
    %v401 = vld [vmem:[#allocation3 + $0xc0] sm:$0xff]
    %v402 = vld [vmem:[#allocation3 + $0xc8] sm:$0xff]
    %v403 = vld [vmem:[#allocation3 + $0xd0] sm:$0xff]
    %v404 = vld [vmem:[#allocation3 + $0xd8] sm:$0xff]
    %v405 = vld [vmem:[#allocation3 + $0xe0] sm:$0xff]
    %v406 = vld [vmem:[#allocation3 + $0xe8] sm:$0xff]
    %v407 = vld [vmem:[#allocation3 + $0xf0] sm:$0xff]
    %v408 = vld [vmem:[#allocation3 + $0xf8] sm:$0xff]
    %v409 = vld [vmem:[#allocation3 + $0x100] sm:$0xff]
    %v410 = vld [vmem:[#allocation3 + $0x108] sm:$0xff]
    %v411 = vld [vmem:[#allocation3 + $0x110] sm:$0xff]
    %v412 = vld [vmem:[#allocation3 + $0x118] sm:$0xff]
    %v413 = vld [vmem:[#allocation3 + $0x120] sm:$0xff]
    %v414 = vld [vmem:[#allocation3 + $0x128] sm:$0xff]
    %v415 = vld [vmem:[#allocation3 + $0x130] sm:$0xff]
    %v416 = vld [vmem:[#allocation3 + $0x138] sm:$0xff]
    %v417 = vld [vmem:[#allocation3 + $0x140] sm:$0xff]
    %v418 = vld [vmem:[#allocation3 + $0x148] sm:$0xff]
    %v419 = vld [vmem:[#allocation3 + $0x150] sm:$0xff]
    %v420 = vld [vmem:[#allocation3 + $0x158] sm:$0xff]
    %v421 = vld [vmem:[#allocation3 + $0x160] sm:$0xff]
    %v422 = vld [vmem:[#allocation3 + $0x168] sm:$0xff]
    %v423 = vld [vmem:[#allocation3 + $0x170] sm:$0xff]
    %v424 = vld [vmem:[#allocation3 + $0x178] sm:$0xff]
    %v425 = vld [vmem:[#allocation3 + $0x180] sm:$0xff]
    %v426 = vld [vmem:[#allocation3 + $0x188] sm:$0xff]
    %v427 = vld [vmem:[#allocation3 + $0x190] sm:$0xff]
    %v428 = vld [vmem:[#allocation3 + $0x198] sm:$0xff]
    %v429 = vld [vmem:[#allocation3 + $0x1a0] sm:$0xff]
    %v430 = vld [vmem:[#allocation3 + $0x1a8] sm:$0xff]
    %v431 = vld [vmem:[#allocation3 + $0x1b0] sm:$0xff]
    %v432 = vld [vmem:[#allocation3 + $0x1b8] sm:$0xff]
    %v433 = vld [vmem:[#allocation3 + $0x1c0] sm:$0xff]
    %v434 = vld [vmem:[#allocation3 + $0x1c8] sm:$0xff]
    %v435 = vld [vmem:[#allocation3 + $0x1d0] sm:$0xff]
    %v436 = vld [vmem:[#allocation3 + $0x1d8] sm:$0xff]
    %v437 = vld [vmem:[#allocation3 + $0x1e0] sm:$0xff]
    %v438 = vld [vmem:[#allocation3 + $0x1e8] sm:$0xff]
    %v439 = vld [vmem:[#allocation3 + $0x1f0] sm:$0xff]
    %v440 = vld [vmem:[#allocation3 + $0x1f8] sm:$0xff]
    %v441 = vld [vmem:[#allocation3 + $0x200] sm:$0xff]
    %v442 = vld [vmem:[#allocation3 + $0x208] sm:$0xff]
    %v443 = vld [vmem:[#allocation3 + $0x210] sm:$0xff]
    %v444 = vld [vmem:[#allocation3 + $0x218] sm:$0xff]
    %v445 = vld [vmem:[#allocation3 + $0x220] sm:$0xff]
    %v446 = vld [vmem:[#allocation3 + $0x228] sm:$0xff]
    %v447 = vld [vmem:[#allocation3 + $0x230] sm:$0xff]
    %v448 = vld [vmem:[#allocation3 + $0x238] sm:$0xff]
    %v449 = vld [vmem:[#allocation3 + $0x240] sm:$0xff]
    %v450 = vld [vmem:[#allocation3 + $0x248] sm:$0xff]
    %v451 = vld [vmem:[#allocation3 + $0x250] sm:$0xff]
    %v452 = vld [vmem:[#allocation3 + $0x258] sm:$0xff]
    %v453 = vld [vmem:[#allocation3 + $0x260] sm:$0xff]
    %v454 = vld [vmem:[#allocation3 + $0x268] sm:$0xff]
    %v455 = vld [vmem:[#allocation3 + $0x270] sm:$0xff]
    %v456 = vld [vmem:[#allocation3 + $0x278] sm:$0xff]
    %v457 = vld [vmem:[#allocation3 + $0x280] sm:$0xff]
    %v458 = vld [vmem:[#allocation3 + $0x288] sm:$0xff]
    %v459 = vld [vmem:[#allocation3 + $0x290] sm:$0xff]
    %v460 = vld [vmem:[#allocation3 + $0x298] sm:$0xff]
    %v461 = vld [vmem:[#allocation3 + $0x2a0] sm:$0xff]
    %v462 = vld [vmem:[#allocation3 + $0x2a8] sm:$0xff]
    %v463 = vld [vmem:[#allocation3 + $0x2b0] sm:$0xff]
    %v464 = vld [vmem:[#allocation3 + $0x2b8] sm:$0xff]
    %v465 = vld [vmem:[#allocation3 + $0x2c0] sm:$0xff]
    %v466 = vld [vmem:[#allocation3 + $0x2c8] sm:$0xff]
    %v467 = vld [vmem:[#allocation3 + $0x2d0] sm:$0xff]
    %v468 = vld [vmem:[#allocation3 + $0x2d8] sm:$0xff]
    %v469 = vld [vmem:[#allocation3 + $0x2e0] sm:$0xff]
    %v470 = vld [vmem:[#allocation3 + $0x2e8] sm:$0xff]
    %v471 = vld [vmem:[#allocation3 + $0x2f0] sm:$0xff]
    %v472 = vld [vmem:[#allocation3 + $0x2f8] sm:$0xff]
    %v473 = vld [vmem:[#allocation3 + $0x300] sm:$0xff]
    %v474 = vld [vmem:[#allocation3 + $0x308] sm:$0xff]
    %v475 = vld [vmem:[#allocation3 + $0x310] sm:$0xff]
    %v476 = vld [vmem:[#allocation3 + $0x318] sm:$0xff]
    %v477 = vld [vmem:[#allocation3 + $0x320] sm:$0xff]
    %v478 = vld [vmem:[#allocation3 + $0x328] sm:$0xff]
    %v479 = vld [vmem:[#allocation3 + $0x330] sm:$0xff]
    %v480 = vld [vmem:[#allocation3 + $0x338] sm:$0xff]
    %v481 = vld [vmem:[#allocation3 + $0x340] sm:$0xff]
    %v482 = vld [vmem:[#allocation3 + $0x348] sm:$0xff]
    %v483 = vld [vmem:[#allocation3 + $0x350] sm:$0xff]
    %v484 = vld [vmem:[#allocation3 + $0x358] sm:$0xff]
    %v485 = vld [vmem:[#allocation3 + $0x360] sm:$0xff]
    %v486 = vld [vmem:[#allocation3 + $0x368] sm:$0xff]
    %v487 = vld [vmem:[#allocation3 + $0x370] sm:$0xff]
    %v488 = vld [vmem:[#allocation3 + $0x378] sm:$0xff]
    %v489 = vld [vmem:[#allocation3 + $0x380] sm:$0xff]
    %v490 = vld [vmem:[#allocation3 + $0x388] sm:$0xff]
    %v491 = vld [vmem:[#allocation3 + $0x390] sm:$0xff]
    %v492 = vld [vmem:[#allocation3 + $0x398] sm:$0xff]
    %v493 = vld [vmem:[#allocation3 + $0x3a0] sm:$0xff]
    %v494 = vld [vmem:[#allocation3 + $0x3a8] sm:$0xff]
    %v495 = vld [vmem:[#allocation3 + $0x3b0] sm:$0xff]
    %v496 = vld [vmem:[#allocation3 + $0x3b8] sm:$0xff]
    %v497 = vld [vmem:[#allocation3 + $0x3c0] sm:$0xff]
    %v498 = vld [vmem:[#allocation3 + $0x3c8] sm:$0xff]
    %v499 = vld [vmem:[#allocation3 + $0x3d0] sm:$0xff]
    %v500 = vld [vmem:[#allocation3 + $0x3d8] sm:$0xff]
    %v501 = vld [vmem:[#allocation3 + $0x3e0] sm:$0xff]
    %v502 = vld [vmem:[#allocation3 + $0x3e8] sm:$0xff]
    %v503 = vld [vmem:[#allocation3 + $0x3f0] sm:$0xff]
    %v504 = vld [vmem:[#allocation3 + $0x3f8] sm:$0xff]
    %v505 = vld [vmem:[#allocation3 + $0x400] sm:$0xff]
    %v506 = vld [vmem:[#allocation3 + $0x408] sm:$0xff]
    %v507 = vld [vmem:[#allocation3 + $0x410] sm:$0xff]
    %v508 = vld [vmem:[#allocation3 + $0x418] sm:$0xff]
    %v509 = vld [vmem:[#allocation3 + $0x420] sm:$0xff]
    %v510 = vld [vmem:[#allocation3 + $0x428] sm:$0xff]
    %v511 = vld [vmem:[#allocation3 + $0x430] sm:$0xff]
    %v512 = vld [vmem:[#allocation3 + $0x438] sm:$0xff]
    %v513 = vld [vmem:[#allocation3 + $0x440] sm:$0xff]
    %v514 = vld [vmem:[#allocation3 + $0x448] sm:$0xff]
    %v515 = vld [vmem:[#allocation3 + $0x450] sm:$0xff]
    %v516 = vld [vmem:[#allocation3 + $0x458] sm:$0xff]
    %v517 = vld [vmem:[#allocation3 + $0x460] sm:$0xff]
    %v518 = vld [vmem:[#allocation3 + $0x468] sm:$0xff]
    %v519 = vld [vmem:[#allocation3 + $0x470] sm:$0xff]
    %v520 = vld [vmem:[#allocation3 + $0x478] sm:$0xff]
    %v521 = vld [vmem:[#allocation3 + $0x480] sm:$0xff]
    %v522 = vld [vmem:[#allocation3 + $0x488] sm:$0xff]
    %v523 = vld [vmem:[#allocation3 + $0x490] sm:$0xff]
    %v524 = vld [vmem:[#allocation3 + $0x498] sm:$0xff]
    %v525 = vld [vmem:[#allocation3 + $0x4a0] sm:$0xff]
    %v526 = vld [vmem:[#allocation3 + $0x4a8] sm:$0xff]
    %v527 = vld [vmem:[#allocation3 + $0x4b0] sm:$0xff]
    %v528 = vld [vmem:[#allocation3 + $0x4b8] sm:$0xff]
    %v529 = vld [vmem:[#allocation3 + $0x4c0] sm:$0xff]
    %v530 = vld [vmem:[#allocation3 + $0x4c8] sm:$0xff]
    %v531 = vld [vmem:[#allocation3 + $0x4d0] sm:$0xff]
    %v532 = vld [vmem:[#allocation3 + $0x4d8] sm:$0xff]
    %v533 = vld [vmem:[#allocation3 + $0x4e0] sm:$0xff]
    %v534 = vld [vmem:[#allocation3 + $0x4e8] sm:$0xff]
    %v535 = vld [vmem:[#allocation3 + $0x4f0] sm:$0xff]
    %v536 = vld [vmem:[#allocation3 + $0x4f8] sm:$0xff]
    %v537 = vld [vmem:[#allocation3 + $0x500] sm:$0xff]
    %v538 = vld [vmem:[#allocation3 + $0x508] sm:$0xff]
    %v539 = vld [vmem:[#allocation3 + $0x510] sm:$0xff]
    %v540 = vld [vmem:[#allocation3 + $0x518] sm:$0xff]
    %v541 = vld [vmem:[#allocation3 + $0x520] sm:$0xff]
    %v542 = vld [vmem:[#allocation3 + $0x528] sm:$0xff]
    %v543 = vld [vmem:[#allocation3 + $0x530] sm:$0xff]
    %v544 = vld [vmem:[#allocation3 + $0x538] sm:$0xff]
    %v545 = vld [vmem:[#allocation3 + $0x540] sm:$0xff]
    %v546 = vld [vmem:[#allocation3 + $0x548] sm:$0xff]
    %v547 = vld [vmem:[#allocation3 + $0x550] sm:$0xff]
    %v548 = vld [vmem:[#allocation3 + $0x558] sm:$0xff]
    %v549 = vld [vmem:[#allocation3 + $0x560] sm:$0xff]
    %v550 = vld [vmem:[#allocation3 + $0x568] sm:$0xff]
    %v551 = vld [vmem:[#allocation3 + $0x570] sm:$0xff]
    %v552 = vld [vmem:[#allocation3 + $0x578] sm:$0xff]
    %v553 = vld [vmem:[#allocation3 + $0x580] sm:$0xff]
    %v554 = vld [vmem:[#allocation3 + $0x588] sm:$0xff]
    %v555 = vld [vmem:[#allocation3 + $0x590] sm:$0xff]
    %v556 = vld [vmem:[#allocation3 + $0x598] sm:$0xff]
    %v557 = vld [vmem:[#allocation3 + $0x5a0] sm:$0xff]
    %v558 = vld [vmem:[#allocation3 + $0x5a8] sm:$0xff]
    %v559 = vld [vmem:[#allocation3 + $0x5b0] sm:$0xff]
    %v560 = vld [vmem:[#allocation3 + $0x5b8] sm:$0xff]
    %v561 = vld [vmem:[#allocation3 + $0x5c0] sm:$0xff]
    %v562 = vld [vmem:[#allocation3 + $0x5c8] sm:$0xff]
    %v563 = vld [vmem:[#allocation3 + $0x5d0] sm:$0xff]
    %v564 = vld [vmem:[#allocation3 + $0x5d8] sm:$0xff]
    %v565 = vld [vmem:[#allocation3 + $0x5e0] sm:$0xff]
    %v566 = vld [vmem:[#allocation3 + $0x5e8] sm:$0xff]
    %v567 = vld [vmem:[#allocation3 + $0x5f0] sm:$0xff]
    %v568 = vld [vmem:[#allocation3 + $0x5f8] sm:$0xff]
    %v569 = vld [vmem:[#allocation3 + $0x600] sm:$0xff]
    %v570 = vld [vmem:[#allocation3 + $0x608] sm:$0xff]
    %v571 = vld [vmem:[#allocation3 + $0x610] sm:$0xff]
    %v572 = vld [vmem:[#allocation3 + $0x618] sm:$0xff]
    %v573 = vld [vmem:[#allocation3 + $0x620] sm:$0xff]
    %v574 = vld [vmem:[#allocation3 + $0x628] sm:$0xff]
    %v575 = vld [vmem:[#allocation3 + $0x630] sm:$0xff]
    %v576 = vld [vmem:[#allocation3 + $0x638] sm:$0xff]
    %v577 = vld [vmem:[#allocation3 + $0x640] sm:$0xff]
    %v578 = vld [vmem:[#allocation3 + $0x648] sm:$0xff]
    %v579 = vld [vmem:[#allocation3 + $0x650] sm:$0xff]
    %v580 = vld [vmem:[#allocation3 + $0x658] sm:$0xff]
    %v581 = vld [vmem:[#allocation3 + $0x660] sm:$0xff]
    %v582 = vld [vmem:[#allocation3 + $0x668] sm:$0xff]
    %v583 = vld [vmem:[#allocation3 + $0x670] sm:$0xff]
    %v584 = vld [vmem:[#allocation3 + $0x678] sm:$0xff]
    %v585 = vld [vmem:[#allocation3 + $0x680] sm:$0xff]
    %v586 = vld [vmem:[#allocation3 + $0x688] sm:$0xff]
    %v587 = vld [vmem:[#allocation3 + $0x690] sm:$0xff]
    %v588 = vld [vmem:[#allocation3 + $0x698] sm:$0xff]
    %v589 = vld [vmem:[#allocation3 + $0x6a0] sm:$0xff]
    %v590 = vld [vmem:[#allocation3 + $0x6a8] sm:$0xff]
    %v591 = vld [vmem:[#allocation3 + $0x6b0] sm:$0xff]
    %v592 = vld [vmem:[#allocation3 + $0x6b8] sm:$0xff]
    %v593 = vld [vmem:[#allocation3 + $0x6c0] sm:$0xff]
    %v594 = vld [vmem:[#allocation3 + $0x6c8] sm:$0xff]
    %v595 = vld [vmem:[#allocation3 + $0x6d0] sm:$0xff]
    %v596 = vld [vmem:[#allocation3 + $0x6d8] sm:$0xff]
    %v597 = vld [vmem:[#allocation3 + $0x6e0] sm:$0xff]
    %v598 = vld [vmem:[#allocation3 + $0x6e8] sm:$0xff]
    %v599 = vld [vmem:[#allocation3 + $0x6f0] sm:$0xff]
    %v600 = vld [vmem:[#allocation3 + $0x6f8] sm:$0xff]
    %v601 = vld [vmem:[#allocation3 + $0x700] sm:$0xff]
    %v602 = vld [vmem:[#allocation3 + $0x708] sm:$0xff]
    %v603 = vld [vmem:[#allocation3 + $0x710] sm:$0xff]
    %v604 = vld [vmem:[#allocation3 + $0x718] sm:$0xff]
    %v605 = vld [vmem:[#allocation3 + $0x720] sm:$0xff]
    %v606 = vld [vmem:[#allocation3 + $0x728] sm:$0xff]
    %v607 = vld [vmem:[#allocation3 + $0x730] sm:$0xff]
    %v608 = vld [vmem:[#allocation3 + $0x738] sm:$0xff]
    %v609 = vld [vmem:[#allocation3 + $0x740] sm:$0xff]
    %v610 = vld [vmem:[#allocation3 + $0x748] sm:$0xff]
    %v611 = vld [vmem:[#allocation3 + $0x750] sm:$0xff]
    %v612 = vld [vmem:[#allocation3 + $0x758] sm:$0xff]
    %v613 = vld [vmem:[#allocation3 + $0x760] sm:$0xff]
    %v614 = vld [vmem:[#allocation3 + $0x768] sm:$0xff]
    %v615 = vld [vmem:[#allocation3 + $0x770] sm:$0xff]
    %v616 = vld [vmem:[#allocation3 + $0x778] sm:$0xff]
    %v617 = vld [vmem:[#allocation3 + $0x780] sm:$0xff]
    %v618 = vld [vmem:[#allocation3 + $0x788] sm:$0xff]
    %v619 = vld [vmem:[#allocation3 + $0x790] sm:$0xff]
    %v620 = vld [vmem:[#allocation3 + $0x798] sm:$0xff]
    %v621 = vld [vmem:[#allocation3 + $0x7a0] sm:$0xff]
    %v622 = vld [vmem:[#allocation3 + $0x7a8] sm:$0xff]
    %v623 = vld [vmem:[#allocation3 + $0x7b0] sm:$0xff]
    %v624 = vld [vmem:[#allocation3 + $0x7b8] sm:$0xff]
    %v625 = vld [vmem:[#allocation3 + $0x7c0] sm:$0xff]
    %v626 = vld [vmem:[#allocation3 + $0x7c8] sm:$0xff]
    %v627 = vld [vmem:[#allocation3 + $0x7d0] sm:$0xff]
    %v628 = vld [vmem:[#allocation3 + $0x7d8] sm:$0xff]
    %v629 = vld [vmem:[#allocation3 + $0x7e0] sm:$0xff]
    %v630 = vld [vmem:[#allocation3 + $0x7e8] sm:$0xff]
    %v631 = vld [vmem:[#allocation3 + $0x7f0] sm:$0xff]
    %v632 = vld [vmem:[#allocation3 + $0x7f8] sm:$0xff]
    %v633 = vld [vmem:[#allocation3 + $0x800] sm:$0xff]
    %v634 = vld [vmem:[#allocation3 + $0x808] sm:$0xff]
    %v635 = vld [vmem:[#allocation3 + $0x810] sm:$0xff]
    %v636 = vld [vmem:[#allocation3 + $0x818] sm:$0xff]
    %v637 = vld [vmem:[#allocation3 + $0x820] sm:$0xff]
    %v638 = vld [vmem:[#allocation3 + $0x828] sm:$0xff]
    %v639 = vld [vmem:[#allocation3 + $0x830] sm:$0xff]
    %v640 = vld [vmem:[#allocation3 + $0x838] sm:$0xff]
    %v641 = vld [vmem:[#allocation3 + $0x840] sm:$0xff]
    %v642 = vld [vmem:[#allocation3 + $0x848] sm:$0xff]
    %v643 = vld [vmem:[#allocation3 + $0x850] sm:$0xff]
    %v644 = vld [vmem:[#allocation3 + $0x858] sm:$0xff]
    %v645 = vld [vmem:[#allocation3 + $0x860] sm:$0xff]
    %v646 = vld [vmem:[#allocation3 + $0x868] sm:$0xff]
    %v647 = vld [vmem:[#allocation3 + $0x870] sm:$0xff]
    %v648 = vld [vmem:[#allocation3 + $0x878] sm:$0xff]
    %v649 = vld [vmem:[#allocation3 + $0x880] sm:$0xff]
    %v650 = vld [vmem:[#allocation3 + $0x888] sm:$0xff]
    %v651 = vld [vmem:[#allocation3 + $0x890] sm:$0xff]
    %v652 = vld [vmem:[#allocation3 + $0x898] sm:$0xff]
    %v653 = vld [vmem:[#allocation3 + $0x8a0] sm:$0xff]
    %v654 = vld [vmem:[#allocation3 + $0x8a8] sm:$0xff]
    %v655 = vld [vmem:[#allocation3 + $0x8b0] sm:$0xff]
    %v656 = vld [vmem:[#allocation3 + $0x8b8] sm:$0xff]
    %v657 = vld [vmem:[#allocation3 + $0x8c0] sm:$0xff]
    %v658 = vld [vmem:[#allocation3 + $0x8c8] sm:$0xff]
    %v659 = vld [vmem:[#allocation3 + $0x8d0] sm:$0xff]
    %v660 = vld [vmem:[#allocation3 + $0x8d8] sm:$0xff]
    %v661 = vld [vmem:[#allocation3 + $0x8e0] sm:$0xff]
    %v662 = vld [vmem:[#allocation3 + $0x8e8] sm:$0xff]
    %v663 = vld [vmem:[#allocation3 + $0x8f0] sm:$0xff]
    %v664 = vld [vmem:[#allocation3 + $0x8f8] sm:$0xff]
    %v665 = vld [vmem:[#allocation2] sm:$0xff]
    %v666 = vld [vmem:[#allocation2 + $0x8] sm:$0xff]
    %v667 = vld [vmem:[#allocation2 + $0x10] sm:$0xff]
    %v668 = vld [vmem:[#allocation2 + $0x18] sm:$0xff]
    %v669 = vld [vmem:[#allocation2 + $0x20] sm:$0xff]
    %v670 = vld [vmem:[#allocation2 + $0x28] sm:$0xff]
    %v671 = vld [vmem:[#allocation2 + $0x30] sm:$0xff]
    %v672 = vld [vmem:[#allocation2 + $0x38] sm:$0xff]
    %v673 = vld [vmem:[#allocation2 + $0x40] sm:$0xff]
    %v674 = vld [vmem:[#allocation2 + $0x48] sm:$0xff]
    %v675 = vld [vmem:[#allocation2 + $0x50] sm:$0xff]
    %v676 = vld [vmem:[#allocation2 + $0x58] sm:$0xff]
    %v677 = vld [vmem:[#allocation2 + $0x60] sm:$0xff]
    %v678 = vld [vmem:[#allocation2 + $0x68] sm:$0xff]
    %v679 = vld [vmem:[#allocation2 + $0x70] sm:$0xff]
    %v680 = vld [vmem:[#allocation2 + $0x78] sm:$0xff]
    %v681 = vld [vmem:[#allocation2 + $0x80] sm:$0xff]
    %v682 = vld [vmem:[#allocation2 + $0x88] sm:$0xff]
    %v683 = vld [vmem:[#allocation2 + $0x90] sm:$0xff]
    %v684 = vld [vmem:[#allocation2 + $0x98] sm:$0xff]
    %v685 = vld [vmem:[#allocation2 + $0xa0] sm:$0xff]
    %v686 = vld [vmem:[#allocation2 + $0xa8] sm:$0xff]
    %v687 = vld [vmem:[#allocation2 + $0xb0] sm:$0xff]
    %v688 = vld [vmem:[#allocation2 + $0xb8] sm:$0xff]
    %v689 = vld [vmem:[#allocation2 + $0xc0] sm:$0xff]
    %v690 = vld [vmem:[#allocation2 + $0xc8] sm:$0xff]
    %v691 = vld [vmem:[#allocation2 + $0xd0] sm:$0xff]
    %v692 = vld [vmem:[#allocation2 + $0xd8] sm:$0xff]
    %v693 = vld [vmem:[#allocation2 + $0xe0] sm:$0xff]
    %v694 = vld [vmem:[#allocation2 + $0xe8] sm:$0xff]
    %v695 = vld [vmem:[#allocation2 + $0xf0] sm:$0xff]
    %v696 = vld [vmem:[#allocation2 + $0xf8] sm:$0xff]
    %v697 = vld [vmem:[#allocation2 + $0x100] sm:$0xff]
    %v698 = vld [vmem:[#allocation2 + $0x108] sm:$0xff]
    %v699 = vld [vmem:[#allocation2 + $0x110] sm:$0xff]
    %v700 = vld [vmem:[#allocation2 + $0x118] sm:$0xff]
    %v701 = vld [vmem:[#allocation2 + $0x120] sm:$0xff]
    %v702 = vld [vmem:[#allocation2 + $0x128] sm:$0xff]
    %v703 = vld [vmem:[#allocation2 + $0x130] sm:$0xff]
    %v704 = vld [vmem:[#allocation2 + $0x138] sm:$0xff]
    %v705 = vld [vmem:[#allocation2 + $0x140] sm:$0xff]
    %v706 = vld [vmem:[#allocation2 + $0x148] sm:$0xff]
    %v707 = vld [vmem:[#allocation2 + $0x150] sm:$0xff]
    %v708 = vld [vmem:[#allocation2 + $0x158] sm:$0xff]
    %v709 = vld [vmem:[#allocation2 + $0x160] sm:$0xff]
    %v710 = vld [vmem:[#allocation2 + $0x168] sm:$0xff]
    %v711 = vld [vmem:[#allocation2 + $0x170] sm:$0xff]
    %v712 = vld [vmem:[#allocation2 + $0x178] sm:$0xff]
    %v713 = vld [vmem:[#allocation2 + $0x180] sm:$0xff]
    %v714 = vld [vmem:[#allocation2 + $0x188] sm:$0xff]
    %v715 = vld [vmem:[#allocation2 + $0x190] sm:$0xff]
    %v716 = vld [vmem:[#allocation2 + $0x198] sm:$0xff]
    %v717 = vld [vmem:[#allocation2 + $0x1a0] sm:$0xff]
    %v718 = vld [vmem:[#allocation2 + $0x1a8] sm:$0xff]
    %v719 = vld [vmem:[#allocation2 + $0x1b0] sm:$0xff]
    %v720 = vld [vmem:[#allocation2 + $0x1b8] sm:$0xff]
    %v721 = vld [vmem:[#allocation2 + $0x1c0] sm:$0xff]
    %v722 = vld [vmem:[#allocation2 + $0x1c8] sm:$0xff]
    %v723 = vld [vmem:[#allocation2 + $0x1d0] sm:$0xff]
    %v724 = vld [vmem:[#allocation2 + $0x1d8] sm:$0xff]
    %v725 = vld [vmem:[#allocation2 + $0x1e0] sm:$0xff]
    %v726 = vld [vmem:[#allocation2 + $0x1e8] sm:$0xff]
    %v727 = vld [vmem:[#allocation2 + $0x1f0] sm:$0xff]
    %v728 = vld [vmem:[#allocation2 + $0x1f8] sm:$0xff]
    %v729 = vld [vmem:[#allocation2 + $0x200] sm:$0xff]
    %v730 = vld [vmem:[#allocation2 + $0x208] sm:$0xff]
    %v731 = vld [vmem:[#allocation2 + $0x210] sm:$0xff]
    %v732 = vld [vmem:[#allocation2 + $0x218] sm:$0xff]
    %v733 = vld [vmem:[#allocation2 + $0x220] sm:$0xff]
    %v734 = vld [vmem:[#allocation2 + $0x228] sm:$0xff]
    %v735 = vld [vmem:[#allocation2 + $0x230] sm:$0xff]
    %v736 = vld [vmem:[#allocation2 + $0x238] sm:$0xff]
    %v737 = vld [vmem:[#allocation2 + $0x240] sm:$0xff]
    %v738 = vld [vmem:[#allocation2 + $0x248] sm:$0xff]
    %v739 = vld [vmem:[#allocation2 + $0x250] sm:$0xff]
    %v740 = vld [vmem:[#allocation2 + $0x258] sm:$0xff]
    %v741 = vld [vmem:[#allocation2 + $0x260] sm:$0xff]
    %v742 = vld [vmem:[#allocation2 + $0x268] sm:$0xff]
    %v743 = vld [vmem:[#allocation2 + $0x270] sm:$0xff]
    %v744 = vld [vmem:[#allocation2 + $0x278] sm:$0xff]
    %v745 = vld [vmem:[#allocation2 + $0x280] sm:$0xff]
    %v746 = vld [vmem:[#allocation2 + $0x288] sm:$0xff]
    %v747 = vld [vmem:[#allocation2 + $0x290] sm:$0xff]
    %v748 = vld [vmem:[#allocation2 + $0x298] sm:$0xff]
    %v749 = vld [vmem:[#allocation2 + $0x2a0] sm:$0xff]
    %v750 = vld [vmem:[#allocation2 + $0x2a8] sm:$0xff]
    %v751 = vld [vmem:[#allocation2 + $0x2b0] sm:$0xff]
    %v752 = vld [vmem:[#allocation2 + $0x2b8] sm:$0xff]
    %v753 = vld [vmem:[#allocation2 + $0x2c0] sm:$0xff]
    %v754 = vld [vmem:[#allocation2 + $0x2c8] sm:$0xff]
    %v755 = vld [vmem:[#allocation2 + $0x2d0] sm:$0xff]
    %v756 = vld [vmem:[#allocation2 + $0x2d8] sm:$0xff]
    %v757 = vld [vmem:[#allocation2 + $0x2e0] sm:$0xff]
    %v758 = vld [vmem:[#allocation2 + $0x2e8] sm:$0xff]
    %v759 = vld [vmem:[#allocation2 + $0x2f0] sm:$0xff]
    %v760 = vld [vmem:[#allocation2 + $0x2f8] sm:$0xff]
    %v761 = vld [vmem:[#allocation2 + $0x300] sm:$0xff]
    %v762 = vld [vmem:[#allocation2 + $0x308] sm:$0xff]
    %v763 = vld [vmem:[#allocation2 + $0x310] sm:$0xff]
    %v764 = vld [vmem:[#allocation2 + $0x318] sm:$0xff]
    %v765 = vld [vmem:[#allocation2 + $0x320] sm:$0xff]
    %v766 = vld [vmem:[#allocation2 + $0x328] sm:$0xff]
    %v767 = vld [vmem:[#allocation2 + $0x330] sm:$0xff]
    %v768 = vld [vmem:[#allocation2 + $0x338] sm:$0xff]
    %v769 = vld [vmem:[#allocation2 + $0x340] sm:$0xff]
    %v770 = vld [vmem:[#allocation2 + $0x348] sm:$0xff]
    %v771 = vld [vmem:[#allocation2 + $0x350] sm:$0xff]
    %v772 = vld [vmem:[#allocation2 + $0x358] sm:$0xff]
    %v773 = vld [vmem:[#allocation2 + $0x360] sm:$0xff]
    %v774 = vld [vmem:[#allocation2 + $0x368] sm:$0xff]
    %v775 = vld [vmem:[#allocation2 + $0x370] sm:$0xff]
    %v776 = vld [vmem:[#allocation2 + $0x378] sm:$0xff]
    %v777 = vld [vmem:[#allocation2 + $0x380] sm:$0xff]
    %v778 = vld [vmem:[#allocation2 + $0x388] sm:$0xff]
    %v779 = vld [vmem:[#allocation2 + $0x390] sm:$0xff]
    %v780 = vld [vmem:[#allocation2 + $0x398] sm:$0xff]
    %v781 = vld [vmem:[#allocation2 + $0x3a0] sm:$0xff]
    %v782 = vld [vmem:[#allocation2 + $0x3a8] sm:$0xff]
    %v783 = vld [vmem:[#allocation2 + $0x3b0] sm:$0xff]
    %v784 = vld [vmem:[#allocation2 + $0x3b8] sm:$0xff]
    %v785 = vld [vmem:[#allocation2 + $0x3c0] sm:$0xff]
    %v786 = vld [vmem:[#allocation2 + $0x3c8] sm:$0xff]
    %v787 = vld [vmem:[#allocation2 + $0x3d0] sm:$0xff]
    %v788 = vld [vmem:[#allocation2 + $0x3d8] sm:$0xff]
    %v789 = vld [vmem:[#allocation2 + $0x3e0] sm:$0xff]
    %v790 = vld [vmem:[#allocation2 + $0x3e8] sm:$0xff]
    %v791 = vld [vmem:[#allocation2 + $0x3f0] sm:$0xff]
    %v792 = vld [vmem:[#allocation2 + $0x3f8] sm:$0xff]
    %v793 = vld [vmem:[#allocation2 + $0x400] sm:$0xff]
    %v794 = vld [vmem:[#allocation2 + $0x408] sm:$0xff]
    %v795 = vld [vmem:[#allocation2 + $0x410] sm:$0xff]
    %v796 = vld [vmem:[#allocation2 + $0x418] sm:$0xff]
    %v797 = vld [vmem:[#allocation2 + $0x420] sm:$0xff]
    %v798 = vld [vmem:[#allocation2 + $0x428] sm:$0xff]
    %v799 = vld [vmem:[#allocation2 + $0x430] sm:$0xff]
    %v800 = vld [vmem:[#allocation2 + $0x438] sm:$0xff]
    %v801 = vld [vmem:[#allocation2 + $0x440] sm:$0xff]
    %v802 = vld [vmem:[#allocation2 + $0x448] sm:$0xff]
    %v803 = vld [vmem:[#allocation2 + $0x450] sm:$0xff]
    %v804 = vld [vmem:[#allocation2 + $0x458] sm:$0xff]
    %v805 = vld [vmem:[#allocation2 + $0x460] sm:$0xff]
    %v806 = vld [vmem:[#allocation2 + $0x468] sm:$0xff]
    %v807 = vld [vmem:[#allocation2 + $0x470] sm:$0xff]
    %v808 = vld [vmem:[#allocation2 + $0x478] sm:$0xff]
    %v809 = vld [vmem:[#allocation2 + $0x480] sm:$0xff]
    %v810 = vld [vmem:[#allocation2 + $0x488] sm:$0xff]
    %v811 = vld [vmem:[#allocation2 + $0x490] sm:$0xff]
    %v812 = vld [vmem:[#allocation2 + $0x498] sm:$0xff]
    %v813 = vld [vmem:[#allocation2 + $0x4a0] sm:$0xff]
    %v814 = vld [vmem:[#allocation2 + $0x4a8] sm:$0xff]
    %v815 = vld [vmem:[#allocation2 + $0x4b0] sm:$0xff]
    %v816 = vld [vmem:[#allocation2 + $0x4b8] sm:$0xff]
    %v817 = vld [vmem:[#allocation2 + $0x4c0] sm:$0xff]
    %v818 = vld [vmem:[#allocation2 + $0x4c8] sm:$0xff]
    %v819 = vld [vmem:[#allocation2 + $0x4d0] sm:$0xff]
    %v820 = vld [vmem:[#allocation2 + $0x4d8] sm:$0xff]
    %v821 = vld [vmem:[#allocation2 + $0x4e0] sm:$0xff]
    %v822 = vld [vmem:[#allocation2 + $0x4e8] sm:$0xff]
    %v823 = vld [vmem:[#allocation2 + $0x4f0] sm:$0xff]
    %v824 = vld [vmem:[#allocation2 + $0x4f8] sm:$0xff]
    %v825 = vld [vmem:[#allocation2 + $0x500] sm:$0xff]
    %v826 = vld [vmem:[#allocation2 + $0x508] sm:$0xff]
    %v827 = vld [vmem:[#allocation2 + $0x510] sm:$0xff]
    %v828 = vld [vmem:[#allocation2 + $0x518] sm:$0xff]
    %v829 = vld [vmem:[#allocation2 + $0x520] sm:$0xff]
    %v830 = vld [vmem:[#allocation2 + $0x528] sm:$0xff]
    %v831 = vld [vmem:[#allocation2 + $0x530] sm:$0xff]
    %v832 = vld [vmem:[#allocation2 + $0x538] sm:$0xff]
    %v833 = vld [vmem:[#allocation2 + $0x540] sm:$0xff]
    %v834 = vld [vmem:[#allocation2 + $0x548] sm:$0xff]
    %v835 = vld [vmem:[#allocation2 + $0x550] sm:$0xff]
    %v836 = vld [vmem:[#allocation2 + $0x558] sm:$0xff]
    %v837 = vld [vmem:[#allocation2 + $0x560] sm:$0xff]
    %v838 = vld [vmem:[#allocation2 + $0x568] sm:$0xff]
    %v839 = vld [vmem:[#allocation2 + $0x570] sm:$0xff]
    %v840 = vld [vmem:[#allocation2 + $0x578] sm:$0xff]
    %v841 = vld [vmem:[#allocation2 + $0x580] sm:$0xff]
    %v842 = vld [vmem:[#allocation2 + $0x588] sm:$0xff]
    %v843 = vld [vmem:[#allocation2 + $0x590] sm:$0xff]
    %v844 = vld [vmem:[#allocation2 + $0x598] sm:$0xff]
    %v845 = vld [vmem:[#allocation2 + $0x5a0] sm:$0xff]
    %v846 = vld [vmem:[#allocation2 + $0x5a8] sm:$0xff]
    %v847 = vld [vmem:[#allocation2 + $0x5b0] sm:$0xff]
    %v848 = vld [vmem:[#allocation2 + $0x5b8] sm:$0xff]
    %v849 = vld [vmem:[#allocation2 + $0x5c0] sm:$0xff]
    %v850 = vld [vmem:[#allocation2 + $0x5c8] sm:$0xff]
    %v851 = vld [vmem:[#allocation2 + $0x5d0] sm:$0xff]
    %v852 = vld [vmem:[#allocation2 + $0x5d8] sm:$0xff]
    %v853 = vld [vmem:[#allocation2 + $0x5e0] sm:$0xff]
    %v854 = vld [vmem:[#allocation2 + $0x5e8] sm:$0xff]
    %v855 = vld [vmem:[#allocation2 + $0x5f0] sm:$0xff]
    %v856 = vld [vmem:[#allocation2 + $0x5f8] sm:$0xff]
    %v857 = vld [vmem:[#allocation2 + $0x600] sm:$0xff]
    %v858 = vld [vmem:[#allocation2 + $0x608] sm:$0xff]
    %v859 = vld [vmem:[#allocation2 + $0x610] sm:$0xff]
    %v860 = vld [vmem:[#allocation2 + $0x618] sm:$0xff]
    %v861 = vld [vmem:[#allocation2 + $0x620] sm:$0xff]
    %v862 = vld [vmem:[#allocation2 + $0x628] sm:$0xff]
    %v863 = vld [vmem:[#allocation2 + $0x630] sm:$0xff]
    %v864 = vld [vmem:[#allocation2 + $0x638] sm:$0xff]
    %v865 = vld [vmem:[#allocation2 + $0x640] sm:$0xff]
    %v866 = vld [vmem:[#allocation2 + $0x648] sm:$0xff]
    %v867 = vld [vmem:[#allocation2 + $0x650] sm:$0xff]
    %v868 = vld [vmem:[#allocation2 + $0x658] sm:$0xff]
    %v869 = vld [vmem:[#allocation2 + $0x660] sm:$0xff]
    %v870 = vld [vmem:[#allocation2 + $0x668] sm:$0xff]
    %v871 = vld [vmem:[#allocation2 + $0x670] sm:$0xff]
    %v872 = vld [vmem:[#allocation2 + $0x678] sm:$0xff]
    %v873 = vld [vmem:[#allocation2 + $0x680] sm:$0xff]
    %v874 = vld [vmem:[#allocation2 + $0x688] sm:$0xff]
    %v875 = vld [vmem:[#allocation2 + $0x690] sm:$0xff]
    %v876 = vld [vmem:[#allocation2 + $0x698] sm:$0xff]
    %v877 = vld [vmem:[#allocation2 + $0x6a0] sm:$0xff]
    %v878 = vld [vmem:[#allocation2 + $0x6a8] sm:$0xff]
    %v879 = vld [vmem:[#allocation2 + $0x6b0] sm:$0xff]
    %v880 = vld [vmem:[#allocation2 + $0x6b8] sm:$0xff]
    %v881 = vld [vmem:[#allocation2 + $0x6c0] sm:$0xff]
    %v882 = vld [vmem:[#allocation2 + $0x6c8] sm:$0xff]
    %v883 = vld [vmem:[#allocation2 + $0x6d0] sm:$0xff]
    %v884 = vld [vmem:[#allocation2 + $0x6d8] sm:$0xff]
    %v885 = vld [vmem:[#allocation2 + $0x6e0] sm:$0xff]
    %v886 = vld [vmem:[#allocation2 + $0x6e8] sm:$0xff]
    %v887 = vld [vmem:[#allocation2 + $0x6f0] sm:$0xff]
    %v888 = vld [vmem:[#allocation2 + $0x6f8] sm:$0xff]
    %v889 = vld [vmem:[#allocation2 + $0x700] sm:$0xff]
    %v890 = vld [vmem:[#allocation2 + $0x708] sm:$0xff]
    %v891 = vld [vmem:[#allocation2 + $0x710] sm:$0xff]
    %v892 = vld [vmem:[#allocation2 + $0x718] sm:$0xff]
    %v893 = vld [vmem:[#allocation2 + $0x720] sm:$0xff]
    %v894 = vld [vmem:[#allocation2 + $0x728] sm:$0xff]
    %v895 = vld [vmem:[#allocation2 + $0x730] sm:$0xff]
    %v896 = vld [vmem:[#allocation2 + $0x738] sm:$0xff]
    %v897 = vld [vmem:[#allocation2 + $0x740] sm:$0xff]
    %v898 = vld [vmem:[#allocation2 + $0x748] sm:$0xff]
    %v899 = vld [vmem:[#allocation2 + $0x750] sm:$0xff]
    %v900 = vld [vmem:[#allocation2 + $0x758] sm:$0xff]
    %v901 = vld [vmem:[#allocation2 + $0x760] sm:$0xff]
    %v902 = vld [vmem:[#allocation2 + $0x768] sm:$0xff]
    %v903 = vld [vmem:[#allocation2 + $0x770] sm:$0xff]
    %v904 = vld [vmem:[#allocation2 + $0x778] sm:$0xff]
    %v905 = vld [vmem:[#allocation2 + $0x780] sm:$0xff]
    %v906 = vld [vmem:[#allocation2 + $0x788] sm:$0xff]
    %v907 = vld [vmem:[#allocation2 + $0x790] sm:$0xff]
    %v908 = vld [vmem:[#allocation2 + $0x798] sm:$0xff]
    %v909 = vld [vmem:[#allocation2 + $0x7a0] sm:$0xff]
    %v910 = vld [vmem:[#allocation2 + $0x7a8] sm:$0xff]
    %v911 = vld [vmem:[#allocation2 + $0x7b0] sm:$0xff]
    %v912 = vld [vmem:[#allocation2 + $0x7b8] sm:$0xff]
    %v913 = vld [vmem:[#allocation2 + $0x7c0] sm:$0xff]
    %v914 = vld [vmem:[#allocation2 + $0x7c8] sm:$0xff]
    %v915 = vld [vmem:[#allocation2 + $0x7d0] sm:$0xff]
    %v916 = vld [vmem:[#allocation2 + $0x7d8] sm:$0xff]
    %v917 = vld [vmem:[#allocation2 + $0x7e0] sm:$0xff]
    %v918 = vld [vmem:[#allocation2 + $0x7e8] sm:$0xff]
    %v919 = vld [vmem:[#allocation2 + $0x7f0] sm:$0xff]
    %v920 = vld [vmem:[#allocation2 + $0x7f8] sm:$0xff]
    %v921 = vld [vmem:[#allocation2 + $0x800] sm:$0xff]
    %v922 = vld [vmem:[#allocation2 + $0x808] sm:$0xff]
    %v923 = vld [vmem:[#allocation2 + $0x810] sm:$0xff]
    %v924 = vld [vmem:[#allocation2 + $0x818] sm:$0xff]
    %v925 = vld [vmem:[#allocation2 + $0x820] sm:$0xff]
    %v926 = vld [vmem:[#allocation2 + $0x828] sm:$0xff]
    %v927 = vld [vmem:[#allocation2 + $0x830] sm:$0xff]
    %v928 = vld [vmem:[#allocation2 + $0x838] sm:$0xff]
    %v929 = vld [vmem:[#allocation2 + $0x840] sm:$0xff]
    %v930 = vld [vmem:[#allocation2 + $0x848] sm:$0xff]
    %v931 = vld [vmem:[#allocation2 + $0x850] sm:$0xff]
    %v932 = vld [vmem:[#allocation2 + $0x858] sm:$0xff]
    %v933 = vld [vmem:[#allocation2 + $0x860] sm:$0xff]
    %v934 = vld [vmem:[#allocation2 + $0x868] sm:$0xff]
    %v935 = vld [vmem:[#allocation2 + $0x870] sm:$0xff]
    %v936 = vld [vmem:[#allocation2 + $0x878] sm:$0xff]
    %v937 = vld [vmem:[#allocation2 + $0x880] sm:$0xff]
    %v938 = vld [vmem:[#allocation2 + $0x888] sm:$0xff]
    %v939 = vld [vmem:[#allocation2 + $0x890] sm:$0xff]
    %v940 = vld [vmem:[#allocation2 + $0x898] sm:$0xff]
    %v941 = vld [vmem:[#allocation2 + $0x8a0] sm:$0xff]
    %v942 = vld [vmem:[#allocation2 + $0x8a8] sm:$0xff]
    %v943 = vld [vmem:[#allocation2 + $0x8b0] sm:$0xff]
    %v944 = vld [vmem:[#allocation2 + $0x8b8] sm:$0xff]
    %v945 = vld [vmem:[#allocation2 + $0x8c0] sm:$0xff]
    %v946 = vld [vmem:[#allocation2 + $0x8c8] sm:$0xff]
    %v947 = vld [vmem:[#allocation2 + $0x8d0] sm:$0xff]
    %v948 = vld [vmem:[#allocation2 + $0x8d8] sm:$0xff]
    %v949 = vld [vmem:[#allocation2 + $0x8e0] sm:$0xff]
    %v950 = vld [vmem:[#allocation2 + $0x8e8] sm:$0xff]
    %v951 = vld [vmem:[#allocation2 + $0x8f0] sm:$0xff]
    %v952 = vld [vmem:[#allocation2 + $0x8f8] sm:$0xff]
    %v953 = vadd.f32 %v665, %v377
    %v954 = vadd.f32 %v666, %v378
    %v955 = vadd.f32 %v667, %v379
    %v956 = vadd.f32 %v668, %v380
    %v957 = vadd.f32 %v669, %v381
    %v958 = vadd.f32 %v670, %v382
    %v959 = vadd.f32 %v671, %v383
    %v960 = vadd.f32 %v672, %v384
    %v961 = vadd.f32 %v673, %v385
    %v962 = vadd.f32 %v674, %v386
    %v963 = vadd.f32 %v675, %v387
    %v964 = vadd.f32 %v676, %v388
    %v965 = vadd.f32 %v677, %v389
    %v966 = vadd.f32 %v678, %v390
    %v967 = vadd.f32 %v679, %v391
    %v968 = vadd.f32 %v680, %v392
    %v969 = vadd.f32 %v681, %v393
    %v970 = vadd.f32 %v682, %v394
    %v971 = vadd.f32 %v683, %v395
    %v972 = vadd.f32 %v684, %v396
    %v973 = vadd.f32 %v685, %v397
    %v974 = vadd.f32 %v686, %v398
    %v975 = vadd.f32 %v687, %v399
    %v976 = vadd.f32 %v688, %v400
    %v977 = vadd.f32 %v689, %v401
    %v978 = vadd.f32 %v690, %v402
    %v979 = vadd.f32 %v691, %v403
    %v980 = vadd.f32 %v692, %v404
    %v981 = vadd.f32 %v693, %v405
    %v982 = vadd.f32 %v694, %v406
    %v983 = vadd.f32 %v695, %v407
    %v984 = vadd.f32 %v696, %v408
    %v985 = vadd.f32 %v697, %v409
    %v986 = vadd.f32 %v698, %v410
    %v987 = vadd.f32 %v699, %v411
    %v988 = vadd.f32 %v700, %v412
    %v989 = vadd.f32 %v701, %v413
    %v990 = vadd.f32 %v702, %v414
    %v991 = vadd.f32 %v703, %v415
    %v992 = vadd.f32 %v704, %v416
    %v993 = vadd.f32 %v705, %v417
    %v994 = vadd.f32 %v706, %v418
    %v995 = vadd.f32 %v707, %v419
    %v996 = vadd.f32 %v708, %v420
    %v997 = vadd.f32 %v709, %v421
    %v998 = vadd.f32 %v710, %v422
    %v999 = vadd.f32 %v711, %v423
    %v1000 = vadd.f32 %v712, %v424
    %v1001 = vadd.f32 %v713, %v425
    %v1002 = vadd.f32 %v714, %v426
    %v1003 = vadd.f32 %v715, %v427
    %v1004 = vadd.f32 %v716, %v428
    %v1005 = vadd.f32 %v717, %v429
    %v1006 = vadd.f32 %v718, %v430
    %v1007 = vadd.f32 %v719, %v431
    %v1008 = vadd.f32 %v720, %v432
    %v1009 = vadd.f32 %v721, %v433
    %v1010 = vadd.f32 %v722, %v434
    %v1011 = vadd.f32 %v723, %v435
    %v1012 = vadd.f32 %v724, %v436
    %v1013 = vadd.f32 %v725, %v437
    %v1014 = vadd.f32 %v726, %v438
    %v1015 = vadd.f32 %v727, %v439
    %v1016 = vadd.f32 %v728, %v440
    %v1017 = vadd.f32 %v729, %v441
    %v1018 = vadd.f32 %v730, %v442
    %v1019 = vadd.f32 %v731, %v443
    %v1020 = vadd.f32 %v732, %v444
    %v1021 = vadd.f32 %v733, %v445
    %v1022 = vadd.f32 %v734, %v446
    %v1023 = vadd.f32 %v735, %v447
    %v1024 = vadd.f32 %v736, %v448
    %v1025 = vadd.f32 %v737, %v449
    %v1026 = vadd.f32 %v738, %v450
    %v1027 = vadd.f32 %v739, %v451
    %v1028 = vadd.f32 %v740, %v452
    %v1029 = vadd.f32 %v741, %v453
    %v1030 = vadd.f32 %v742, %v454
    %v1031 = vadd.f32 %v743, %v455
    %v1032 = vadd.f32 %v744, %v456
    %v1033 = vadd.f32 %v745, %v457
    %v1034 = vadd.f32 %v746, %v458
    %v1035 = vadd.f32 %v747, %v459
    %v1036 = vadd.f32 %v748, %v460
    %v1037 = vadd.f32 %v749, %v461
    %v1038 = vadd.f32 %v750, %v462
    %v1039 = vadd.f32 %v751, %v463
    %v1040 = vadd.f32 %v752, %v464
    %v1041 = vadd.f32 %v753, %v465
    %v1042 = vadd.f32 %v754, %v466
    %v1043 = vadd.f32 %v755, %v467
    %v1044 = vadd.f32 %v756, %v468
    %v1045 = vadd.f32 %v757, %v469
    %v1046 = vadd.f32 %v758, %v470
    %v1047 = vadd.f32 %v759, %v471
    %v1048 = vadd.f32 %v760, %v472
    %v1049 = vadd.f32 %v761, %v473
    %v1050 = vadd.f32 %v762, %v474
    %v1051 = vadd.f32 %v763, %v475
    %v1052 = vadd.f32 %v764, %v476
    %v1053 = vadd.f32 %v765, %v477
    %v1054 = vadd.f32 %v766, %v478
    %v1055 = vadd.f32 %v767, %v479
    %v1056 = vadd.f32 %v768, %v480
    %v1057 = vadd.f32 %v769, %v481
    %v1058 = vadd.f32 %v770, %v482
    %v1059 = vadd.f32 %v771, %v483
    %v1060 = vadd.f32 %v772, %v484
    %v1061 = vadd.f32 %v773, %v485
    %v1062 = vadd.f32 %v774, %v486
    %v1063 = vadd.f32 %v775, %v487
    %v1064 = vadd.f32 %v776, %v488
    %v1065 = vadd.f32 %v777, %v489
    %v1066 = vadd.f32 %v778, %v490
    %v1067 = vadd.f32 %v779, %v491
    %v1068 = vadd.f32 %v780, %v492
    %v1069 = vadd.f32 %v781, %v493
    %v1070 = vadd.f32 %v782, %v494
    %v1071 = vadd.f32 %v783, %v495
    %v1072 = vadd.f32 %v784, %v496
    %v1073 = vadd.f32 %v785, %v497
    %v1074 = vadd.f32 %v786, %v498
    %v1075 = vadd.f32 %v787, %v499
    %v1076 = vadd.f32 %v788, %v500
    %v1077 = vadd.f32 %v789, %v501
    %v1078 = vadd.f32 %v790, %v502
    %v1079 = vadd.f32 %v791, %v503
    %v1080 = vadd.f32 %v792, %v504
    %v1081 = vadd.f32 %v793, %v505
    %v1082 = vadd.f32 %v794, %v506
    %v1083 = vadd.f32 %v795, %v507
    %v1084 = vadd.f32 %v796, %v508
    %v1085 = vadd.f32 %v797, %v509
    %v1086 = vadd.f32 %v798, %v510
    %v1087 = vadd.f32 %v799, %v511
    %v1088 = vadd.f32 %v800, %v512
    %v1089 = vadd.f32 %v801, %v513
    %v1090 = vadd.f32 %v802, %v514
    %v1091 = vadd.f32 %v803, %v515
    %v1092 = vadd.f32 %v804, %v516
    %v1093 = vadd.f32 %v805, %v517
    %v1094 = vadd.f32 %v806, %v518
    %v1095 = vadd.f32 %v807, %v519
    %v1096 = vadd.f32 %v808, %v520
    %v1097 = vadd.f32 %v809, %v521
    %v1098 = vadd.f32 %v810, %v522
    %v1099 = vadd.f32 %v811, %v523
    %v1100 = vadd.f32 %v812, %v524
    %v1101 = vadd.f32 %v813, %v525
    %v1102 = vadd.f32 %v814, %v526
    %v1103 = vadd.f32 %v815, %v527
    %v1104 = vadd.f32 %v816, %v528
    %v1105 = vadd.f32 %v817, %v529
    %v1106 = vadd.f32 %v818, %v530
    %v1107 = vadd.f32 %v819, %v531
    %v1108 = vadd.f32 %v820, %v532
    %v1109 = vadd.f32 %v821, %v533
    %v1110 = vadd.f32 %v822, %v534
    %v1111 = vadd.f32 %v823, %v535
    %v1112 = vadd.f32 %v824, %v536
    %v1113 = vadd.f32 %v825, %v537
    %v1114 = vadd.f32 %v826, %v538
    %v1115 = vadd.f32 %v827, %v539
    %v1116 = vadd.f32 %v828, %v540
    %v1117 = vadd.f32 %v829, %v541
    %v1118 = vadd.f32 %v830, %v542
    %v1119 = vadd.f32 %v831, %v543
    %v1120 = vadd.f32 %v832, %v544
    %v1121 = vadd.f32 %v833, %v545
    %v1122 = vadd.f32 %v834, %v546
    %v1123 = vadd.f32 %v835, %v547
    %v1124 = vadd.f32 %v836, %v548
    %v1125 = vadd.f32 %v837, %v549
    %v1126 = vadd.f32 %v838, %v550
    %v1127 = vadd.f32 %v839, %v551
    %v1128 = vadd.f32 %v840, %v552
    %v1129 = vadd.f32 %v841, %v553
    %v1130 = vadd.f32 %v842, %v554
    %v1131 = vadd.f32 %v843, %v555
    %v1132 = vadd.f32 %v844, %v556
    %v1133 = vadd.f32 %v845, %v557
    %v1134 = vadd.f32 %v846, %v558
    %v1135 = vadd.f32 %v847, %v559
    %v1136 = vadd.f32 %v848, %v560
    %v1137 = vadd.f32 %v849, %v561
    %v1138 = vadd.f32 %v850, %v562
    %v1139 = vadd.f32 %v851, %v563
    %v1140 = vadd.f32 %v852, %v564
    %v1141 = vadd.f32 %v853, %v565
    %v1142 = vadd.f32 %v854, %v566
    %v1143 = vadd.f32 %v855, %v567
    %v1144 = vadd.f32 %v856, %v568
    %v1145 = vadd.f32 %v857, %v569
    %v1146 = vadd.f32 %v858, %v570
    %v1147 = vadd.f32 %v859, %v571
    %v1148 = vadd.f32 %v860, %v572
    %v1149 = vadd.f32 %v861, %v573
    %v1150 = vadd.f32 %v862, %v574
    %v1151 = vadd.f32 %v863, %v575
    %v1152 = vadd.f32 %v864, %v576
    %v1153 = vadd.f32 %v865, %v577
    %v1154 = vadd.f32 %v866, %v578
    %v1155 = vadd.f32 %v867, %v579
    %v1156 = vadd.f32 %v868, %v580
    %v1157 = vadd.f32 %v869, %v581
    %v1158 = vadd.f32 %v870, %v582
    %v1159 = vadd.f32 %v871, %v583
    %v1160 = vadd.f32 %v872, %v584
    %v1161 = vadd.f32 %v873, %v585
    %v1162 = vadd.f32 %v874, %v586
    %v1163 = vadd.f32 %v875, %v587
    %v1164 = vadd.f32 %v876, %v588
    %v1165 = vadd.f32 %v877, %v589
    %v1166 = vadd.f32 %v878, %v590
    %v1167 = vadd.f32 %v879, %v591
    %v1168 = vadd.f32 %v880, %v592
    %v1169 = vadd.f32 %v881, %v593
    %v1170 = vadd.f32 %v882, %v594
    %v1171 = vadd.f32 %v883, %v595
    %v1172 = vadd.f32 %v884, %v596
    %v1173 = vadd.f32 %v885, %v597
    %v1174 = vadd.f32 %v886, %v598
    %v1175 = vadd.f32 %v887, %v599
    %v1176 = vadd.f32 %v888, %v600
    %v1177 = vadd.f32 %v889, %v601
    %v1178 = vadd.f32 %v890, %v602
    %v1179 = vadd.f32 %v891, %v603
    %v1180 = vadd.f32 %v892, %v604
    %v1181 = vadd.f32 %v893, %v605
    %v1182 = vadd.f32 %v894, %v606
    %v1183 = vadd.f32 %v895, %v607
    %v1184 = vadd.f32 %v896, %v608
    %v1185 = vadd.f32 %v897, %v609
    %v1186 = vadd.f32 %v898, %v610
    %v1187 = vadd.f32 %v899, %v611
    %v1188 = vadd.f32 %v900, %v612
    %v1189 = vadd.f32 %v901, %v613
    %v1190 = vadd.f32 %v902, %v614
    %v1191 = vadd.f32 %v903, %v615
    %v1192 = vadd.f32 %v904, %v616
    %v1193 = vadd.f32 %v905, %v617
    %v1194 = vadd.f32 %v906, %v618
    %v1195 = vadd.f32 %v907, %v619
    %v1196 = vadd.f32 %v908, %v620
    %v1197 = vadd.f32 %v909, %v621
    %v1198 = vadd.f32 %v910, %v622
    %v1199 = vadd.f32 %v911, %v623
    %v1200 = vadd.f32 %v912, %v624
    %v1201 = vadd.f32 %v913, %v625
    %v1202 = vadd.f32 %v914, %v626
    %v1203 = vadd.f32 %v915, %v627
    %v1204 = vadd.f32 %v916, %v628
    %v1205 = vadd.f32 %v917, %v629
    %v1206 = vadd.f32 %v918, %v630
    %v1207 = vadd.f32 %v919, %v631
    %v1208 = vadd.f32 %v920, %v632
    %v1209 = vadd.f32 %v921, %v633
    %v1210 = vadd.f32 %v922, %v634
    %v1211 = vadd.f32 %v923, %v635
    %v1212 = vadd.f32 %v924, %v636
    %v1213 = vadd.f32 %v925, %v637
    %v1214 = vadd.f32 %v926, %v638
    %v1215 = vadd.f32 %v927, %v639
    %v1216 = vadd.f32 %v928, %v640
    %v1217 = vadd.f32 %v929, %v641
    %v1218 = vadd.f32 %v930, %v642
    %v1219 = vadd.f32 %v931, %v643
    %v1220 = vadd.f32 %v932, %v644
    %v1221 = vadd.f32 %v933, %v645
    %v1222 = vadd.f32 %v934, %v646
    %v1223 = vadd.f32 %v935, %v647
    %v1224 = vadd.f32 %v936, %v648
    %v1225 = vadd.f32 %v937, %v649
    %v1226 = vadd.f32 %v938, %v650
    %v1227 = vadd.f32 %v939, %v651
    %v1228 = vadd.f32 %v940, %v652
    %v1229 = vadd.f32 %v941, %v653
    %v1230 = vadd.f32 %v942, %v654
    %v1231 = vadd.f32 %v943, %v655
    %v1232 = vadd.f32 %v944, %v656
    %v1233 = vadd.f32 %v945, %v657
    %v1234 = vadd.f32 %v946, %v658
    %v1235 = vadd.f32 %v947, %v659
    %v1236 = vadd.f32 %v948, %v660
    %v1237 = vadd.f32 %v949, %v661
    %v1238 = vadd.f32 %v950, %v662
    %v1239 = vadd.f32 %v951, %v663
    %v1240 = vadd.f32 %v952, %v664
    %1241 = vst [vmem:[#allocation2] sm:$0xff] %v953
    %1242 = vst [vmem:[#allocation2 + $0x8] sm:$0xff] %v954
    %1243 = vst [vmem:[#allocation2 + $0x10] sm:$0xff] %v955
    %1244 = vst [vmem:[#allocation2 + $0x18] sm:$0xff] %v956
    %1245 = vst [vmem:[#allocation2 + $0x20] sm:$0xff] %v957
    %1246 = vst [vmem:[#allocation2 + $0x28] sm:$0xff] %v958
    %1247 = vst [vmem:[#allocation2 + $0x30] sm:$0xff] %v959
    %1248 = vst [vmem:[#allocation2 + $0x38] sm:$0xff] %v960
    %1249 = vst [vmem:[#allocation2 + $0x40] sm:$0xff] %v961
    %1250 = vst [vmem:[#allocation2 + $0x48] sm:$0xff] %v962
    %1251 = vst [vmem:[#allocation2 + $0x50] sm:$0xff] %v963
    %1252 = vst [vmem:[#allocation2 + $0x58] sm:$0xff] %v964
    %1253 = vst [vmem:[#allocation2 + $0x60] sm:$0xff] %v965
    %1254 = vst [vmem:[#allocation2 + $0x68] sm:$0xff] %v966
    %1255 = vst [vmem:[#allocation2 + $0x70] sm:$0xff] %v967
    %1256 = vst [vmem:[#allocation2 + $0x78] sm:$0xff] %v968
    %1257 = vst [vmem:[#allocation2 + $0x80] sm:$0xff] %v969
    %1258 = vst [vmem:[#allocation2 + $0x88] sm:$0xff] %v970
    %1259 = vst [vmem:[#allocation2 + $0x90] sm:$0xff] %v971
    %1260 = vst [vmem:[#allocation2 + $0x98] sm:$0xff] %v972
    %1261 = vst [vmem:[#allocation2 + $0xa0] sm:$0xff] %v973
    %1262 = vst [vmem:[#allocation2 + $0xa8] sm:$0xff] %v974
    %1263 = vst [vmem:[#allocation2 + $0xb0] sm:$0xff] %v975
    %1264 = vst [vmem:[#allocation2 + $0xb8] sm:$0xff] %v976
    %1265 = vst [vmem:[#allocation2 + $0xc0] sm:$0xff] %v977
    %1266 = vst [vmem:[#allocation2 + $0xc8] sm:$0xff] %v978
    %1267 = vst [vmem:[#allocation2 + $0xd0] sm:$0xff] %v979
    %1268 = vst [vmem:[#allocation2 + $0xd8] sm:$0xff] %v980
    %1269 = vst [vmem:[#allocation2 + $0xe0] sm:$0xff] %v981
    %1270 = vst [vmem:[#allocation2 + $0xe8] sm:$0xff] %v982
    %1271 = vst [vmem:[#allocation2 + $0xf0] sm:$0xff] %v983
    %1272 = vst [vmem:[#allocation2 + $0xf8] sm:$0xff] %v984
    %1273 = vst [vmem:[#allocation2 + $0x100] sm:$0xff] %v985
    %1274 = vst [vmem:[#allocation2 + $0x108] sm:$0xff] %v986
    %1275 = vst [vmem:[#allocation2 + $0x110] sm:$0xff] %v987
    %1276 = vst [vmem:[#allocation2 + $0x118] sm:$0xff] %v988
    %1277 = vst [vmem:[#allocation2 + $0x120] sm:$0xff] %v989
    %1278 = vst [vmem:[#allocation2 + $0x128] sm:$0xff] %v990
    %1279 = vst [vmem:[#allocation2 + $0x130] sm:$0xff] %v991
    %1280 = vst [vmem:[#allocation2 + $0x138] sm:$0xff] %v992
    %1281 = vst [vmem:[#allocation2 + $0x140] sm:$0xff] %v993
    %1282 = vst [vmem:[#allocation2 + $0x148] sm:$0xff] %v994
    %1283 = vst [vmem:[#allocation2 + $0x150] sm:$0xff] %v995
    %1284 = vst [vmem:[#allocation2 + $0x158] sm:$0xff] %v996
    %1285 = vst [vmem:[#allocation2 + $0x160] sm:$0xff] %v997
    %1286 = vst [vmem:[#allocation2 + $0x168] sm:$0xff] %v998
    %1287 = vst [vmem:[#allocation2 + $0x170] sm:$0xff] %v999
    %1288 = vst [vmem:[#allocation2 + $0x178] sm:$0xff] %v1000
    %1289 = vst [vmem:[#allocation2 + $0x180] sm:$0xff] %v1001
    %1290 = vst [vmem:[#allocation2 + $0x188] sm:$0xff] %v1002
    %1291 = vst [vmem:[#allocation2 + $0x190] sm:$0xff] %v1003
    %1292 = vst [vmem:[#allocation2 + $0x198] sm:$0xff] %v1004
    %1293 = vst [vmem:[#allocation2 + $0x1a0] sm:$0xff] %v1005
    %1294 = vst [vmem:[#allocation2 + $0x1a8] sm:$0xff] %v1006
    %1295 = vst [vmem:[#allocation2 + $0x1b0] sm:$0xff] %v1007
    %1296 = vst [vmem:[#allocation2 + $0x1b8] sm:$0xff] %v1008
    %1297 = vst [vmem:[#allocation2 + $0x1c0] sm:$0xff] %v1009
    %1298 = vst [vmem:[#allocation2 + $0x1c8] sm:$0xff] %v1010
    %1299 = vst [vmem:[#allocation2 + $0x1d0] sm:$0xff] %v1011
    %1300 = vst [vmem:[#allocation2 + $0x1d8] sm:$0xff] %v1012
    %1301 = vst [vmem:[#allocation2 + $0x1e0] sm:$0xff] %v1013
    %1302 = vst [vmem:[#allocation2 + $0x1e8] sm:$0xff] %v1014
    %1303 = vst [vmem:[#allocation2 + $0x1f0] sm:$0xff] %v1015
    %1304 = vst [vmem:[#allocation2 + $0x1f8] sm:$0xff] %v1016
    %1305 = vst [vmem:[#allocation2 + $0x200] sm:$0xff] %v1017
    %1306 = vst [vmem:[#allocation2 + $0x208] sm:$0xff] %v1018
    %1307 = vst [vmem:[#allocation2 + $0x210] sm:$0xff] %v1019
    %1308 = vst [vmem:[#allocation2 + $0x218] sm:$0xff] %v1020
    %1309 = vst [vmem:[#allocation2 + $0x220] sm:$0xff] %v1021
    %1310 = vst [vmem:[#allocation2 + $0x228] sm:$0xff] %v1022
    %1311 = vst [vmem:[#allocation2 + $0x230] sm:$0xff] %v1023
    %1312 = vst [vmem:[#allocation2 + $0x238] sm:$0xff] %v1024
    %1313 = vst [vmem:[#allocation2 + $0x240] sm:$0xff] %v1025
    %1314 = vst [vmem:[#allocation2 + $0x248] sm:$0xff] %v1026
    %1315 = vst [vmem:[#allocation2 + $0x250] sm:$0xff] %v1027
    %1316 = vst [vmem:[#allocation2 + $0x258] sm:$0xff] %v1028
    %1317 = vst [vmem:[#allocation2 + $0x260] sm:$0xff] %v1029
    %1318 = vst [vmem:[#allocation2 + $0x268] sm:$0xff] %v1030
    %1319 = vst [vmem:[#allocation2 + $0x270] sm:$0xff] %v1031
    %1320 = vst [vmem:[#allocation2 + $0x278] sm:$0xff] %v1032
    %1321 = vst [vmem:[#allocation2 + $0x280] sm:$0xff] %v1033
    %1322 = vst [vmem:[#allocation2 + $0x288] sm:$0xff] %v1034
    %1323 = vst [vmem:[#allocation2 + $0x290] sm:$0xff] %v1035
    %1324 = vst [vmem:[#allocation2 + $0x298] sm:$0xff] %v1036
    %1325 = vst [vmem:[#allocation2 + $0x2a0] sm:$0xff] %v1037
    %1326 = vst [vmem:[#allocation2 + $0x2a8] sm:$0xff] %v1038
    %1327 = vst [vmem:[#allocation2 + $0x2b0] sm:$0xff] %v1039
    %1328 = vst [vmem:[#allocation2 + $0x2b8] sm:$0xff] %v1040
    %1329 = vst [vmem:[#allocation2 + $0x2c0] sm:$0xff] %v1041
    %1330 = vst [vmem:[#allocation2 + $0x2c8] sm:$0xff] %v1042
    %1331 = vst [vmem:[#allocation2 + $0x2d0] sm:$0xff] %v1043
    %1332 = vst [vmem:[#allocation2 + $0x2d8] sm:$0xff] %v1044
    %1333 = vst [vmem:[#allocation2 + $0x2e0] sm:$0xff] %v1045
    %1334 = vst [vmem:[#allocation2 + $0x2e8] sm:$0xff] %v1046
    %1335 = vst [vmem:[#allocation2 + $0x2f0] sm:$0xff] %v1047
    %1336 = vst [vmem:[#allocation2 + $0x2f8] sm:$0xff] %v1048
    %1337 = vst [vmem:[#allocation2 + $0x300] sm:$0xff] %v1049
    %1338 = vst [vmem:[#allocation2 + $0x308] sm:$0xff] %v1050
    %1339 = vst [vmem:[#allocation2 + $0x310] sm:$0xff] %v1051
    %1340 = vst [vmem:[#allocation2 + $0x318] sm:$0xff] %v1052
    %1341 = vst [vmem:[#allocation2 + $0x320] sm:$0xff] %v1053
    %1342 = vst [vmem:[#allocation2 + $0x328] sm:$0xff] %v1054
    %1343 = vst [vmem:[#allocation2 + $0x330] sm:$0xff] %v1055
    %1344 = vst [vmem:[#allocation2 + $0x338] sm:$0xff] %v1056
    %1345 = vst [vmem:[#allocation2 + $0x340] sm:$0xff] %v1057
    %1346 = vst [vmem:[#allocation2 + $0x348] sm:$0xff] %v1058
    %1347 = vst [vmem:[#allocation2 + $0x350] sm:$0xff] %v1059
    %1348 = vst [vmem:[#allocation2 + $0x358] sm:$0xff] %v1060
    %1349 = vst [vmem:[#allocation2 + $0x360] sm:$0xff] %v1061
    %1350 = vst [vmem:[#allocation2 + $0x368] sm:$0xff] %v1062
    %1351 = vst [vmem:[#allocation2 + $0x370] sm:$0xff] %v1063
    %1352 = vst [vmem:[#allocation2 + $0x378] sm:$0xff] %v1064
    %1353 = vst [vmem:[#allocation2 + $0x380] sm:$0xff] %v1065
    %1354 = vst [vmem:[#allocation2 + $0x388] sm:$0xff] %v1066
    %1355 = vst [vmem:[#allocation2 + $0x390] sm:$0xff] %v1067
    %1356 = vst [vmem:[#allocation2 + $0x398] sm:$0xff] %v1068
    %1357 = vst [vmem:[#allocation2 + $0x3a0] sm:$0xff] %v1069
    %1358 = vst [vmem:[#allocation2 + $0x3a8] sm:$0xff] %v1070
    %1359 = vst [vmem:[#allocation2 + $0x3b0] sm:$0xff] %v1071
    %1360 = vst [vmem:[#allocation2 + $0x3b8] sm:$0xff] %v1072
    %1361 = vst [vmem:[#allocation2 + $0x3c0] sm:$0xff] %v1073
    %1362 = vst [vmem:[#allocation2 + $0x3c8] sm:$0xff] %v1074
    %1363 = vst [vmem:[#allocation2 + $0x3d0] sm:$0xff] %v1075
    %1364 = vst [vmem:[#allocation2 + $0x3d8] sm:$0xff] %v1076
    %1365 = vst [vmem:[#allocation2 + $0x3e0] sm:$0xff] %v1077
    %1366 = vst [vmem:[#allocation2 + $0x3e8] sm:$0xff] %v1078
    %1367 = vst [vmem:[#allocation2 + $0x3f0] sm:$0xff] %v1079
    %1368 = vst [vmem:[#allocation2 + $0x3f8] sm:$0xff] %v1080
    %1369 = vst [vmem:[#allocation2 + $0x400] sm:$0xff] %v1081
    %1370 = vst [vmem:[#allocation2 + $0x408] sm:$0xff] %v1082
    %1371 = vst [vmem:[#allocation2 + $0x410] sm:$0xff] %v1083
    %1372 = vst [vmem:[#allocation2 + $0x418] sm:$0xff] %v1084
    %1373 = vst [vmem:[#allocation2 + $0x420] sm:$0xff] %v1085
    %1374 = vst [vmem:[#allocation2 + $0x428] sm:$0xff] %v1086
    %1375 = vst [vmem:[#allocation2 + $0x430] sm:$0xff] %v1087
    %1376 = vst [vmem:[#allocation2 + $0x438] sm:$0xff] %v1088
    %1377 = vst [vmem:[#allocation2 + $0x440] sm:$0xff] %v1089
    %1378 = vst [vmem:[#allocation2 + $0x448] sm:$0xff] %v1090
    %1379 = vst [vmem:[#allocation2 + $0x450] sm:$0xff] %v1091
    %1380 = vst [vmem:[#allocation2 + $0x458] sm:$0xff] %v1092
    %1381 = vst [vmem:[#allocation2 + $0x460] sm:$0xff] %v1093
    %1382 = vst [vmem:[#allocation2 + $0x468] sm:$0xff] %v1094
    %1383 = vst [vmem:[#allocation2 + $0x470] sm:$0xff] %v1095
    %1384 = vst [vmem:[#allocation2 + $0x478] sm:$0xff] %v1096
    %1385 = vst [vmem:[#allocation2 + $0x480] sm:$0xff] %v1097
    %1386 = vst [vmem:[#allocation2 + $0x488] sm:$0xff] %v1098
    %1387 = vst [vmem:[#allocation2 + $0x490] sm:$0xff] %v1099
    %1388 = vst [vmem:[#allocation2 + $0x498] sm:$0xff] %v1100
    %1389 = vst [vmem:[#allocation2 + $0x4a0] sm:$0xff] %v1101
    %1390 = vst [vmem:[#allocation2 + $0x4a8] sm:$0xff] %v1102
    %1391 = vst [vmem:[#allocation2 + $0x4b0] sm:$0xff] %v1103
    %1392 = vst [vmem:[#allocation2 + $0x4b8] sm:$0xff] %v1104
    %1393 = vst [vmem:[#allocation2 + $0x4c0] sm:$0xff] %v1105
    %1394 = vst [vmem:[#allocation2 + $0x4c8] sm:$0xff] %v1106
    %1395 = vst [vmem:[#allocation2 + $0x4d0] sm:$0xff] %v1107
    %1396 = vst [vmem:[#allocation2 + $0x4d8] sm:$0xff] %v1108
    %1397 = vst [vmem:[#allocation2 + $0x4e0] sm:$0xff] %v1109
    %1398 = vst [vmem:[#allocation2 + $0x4e8] sm:$0xff] %v1110
    %1399 = vst [vmem:[#allocation2 + $0x4f0] sm:$0xff] %v1111
    %1400 = vst [vmem:[#allocation2 + $0x4f8] sm:$0xff] %v1112
    %1401 = vst [vmem:[#allocation2 + $0x500] sm:$0xff] %v1113
    %1402 = vst [vmem:[#allocation2 + $0x508] sm:$0xff] %v1114
    %1403 = vst [vmem:[#allocation2 + $0x510] sm:$0xff] %v1115
    %1404 = vst [vmem:[#allocation2 + $0x518] sm:$0xff] %v1116
    %1405 = vst [vmem:[#allocation2 + $0x520] sm:$0xff] %v1117
    %1406 = vst [vmem:[#allocation2 + $0x528] sm:$0xff] %v1118
    %1407 = vst [vmem:[#allocation2 + $0x530] sm:$0xff] %v1119
    %1408 = vst [vmem:[#allocation2 + $0x538] sm:$0xff] %v1120
    %1409 = vst [vmem:[#allocation2 + $0x540] sm:$0xff] %v1121
    %1410 = vst [vmem:[#allocation2 + $0x548] sm:$0xff] %v1122
    %1411 = vst [vmem:[#allocation2 + $0x550] sm:$0xff] %v1123
    %1412 = vst [vmem:[#allocation2 + $0x558] sm:$0xff] %v1124
    %1413 = vst [vmem:[#allocation2 + $0x560] sm:$0xff] %v1125
    %1414 = vst [vmem:[#allocation2 + $0x568] sm:$0xff] %v1126
    %1415 = vst [vmem:[#allocation2 + $0x570] sm:$0xff] %v1127
    %1416 = vst [vmem:[#allocation2 + $0x578] sm:$0xff] %v1128
    %1417 = vst [vmem:[#allocation2 + $0x580] sm:$0xff] %v1129
    %1418 = vst [vmem:[#allocation2 + $0x588] sm:$0xff] %v1130
    %1419 = vst [vmem:[#allocation2 + $0x590] sm:$0xff] %v1131
    %1420 = vst [vmem:[#allocation2 + $0x598] sm:$0xff] %v1132
    %1421 = vst [vmem:[#allocation2 + $0x5a0] sm:$0xff] %v1133
    %1422 = vst [vmem:[#allocation2 + $0x5a8] sm:$0xff] %v1134
    %1423 = vst [vmem:[#allocation2 + $0x5b0] sm:$0xff] %v1135
    %1424 = vst [vmem:[#allocation2 + $0x5b8] sm:$0xff] %v1136
    %1425 = vst [vmem:[#allocation2 + $0x5c0] sm:$0xff] %v1137
    %1426 = vst [vmem:[#allocation2 + $0x5c8] sm:$0xff] %v1138
    %1427 = vst [vmem:[#allocation2 + $0x5d0] sm:$0xff] %v1139
    %1428 = vst [vmem:[#allocation2 + $0x5d8] sm:$0xff] %v1140
    %1429 = vst [vmem:[#allocation2 + $0x5e0] sm:$0xff] %v1141
    %1430 = vst [vmem:[#allocation2 + $0x5e8] sm:$0xff] %v1142
    %1431 = vst [vmem:[#allocation2 + $0x5f0] sm:$0xff] %v1143
    %1432 = vst [vmem:[#allocation2 + $0x5f8] sm:$0xff] %v1144
    %1433 = vst [vmem:[#allocation2 + $0x600] sm:$0xff] %v1145
    %1434 = vst [vmem:[#allocation2 + $0x608] sm:$0xff] %v1146
    %1435 = vst [vmem:[#allocation2 + $0x610] sm:$0xff] %v1147
    %1436 = vst [vmem:[#allocation2 + $0x618] sm:$0xff] %v1148
    %1437 = vst [vmem:[#allocation2 + $0x620] sm:$0xff] %v1149
    %1438 = vst [vmem:[#allocation2 + $0x628] sm:$0xff] %v1150
    %1439 = vst [vmem:[#allocation2 + $0x630] sm:$0xff] %v1151
    %1440 = vst [vmem:[#allocation2 + $0x638] sm:$0xff] %v1152
    %1441 = vst [vmem:[#allocation2 + $0x640] sm:$0xff] %v1153
    %1442 = vst [vmem:[#allocation2 + $0x648] sm:$0xff] %v1154
    %1443 = vst [vmem:[#allocation2 + $0x650] sm:$0xff] %v1155
    %1444 = vst [vmem:[#allocation2 + $0x658] sm:$0xff] %v1156
    %1445 = vst [vmem:[#allocation2 + $0x660] sm:$0xff] %v1157
    %1446 = vst [vmem:[#allocation2 + $0x668] sm:$0xff] %v1158
    %1447 = vst [vmem:[#allocation2 + $0x670] sm:$0xff] %v1159
    %1448 = vst [vmem:[#allocation2 + $0x678] sm:$0xff] %v1160
    %1449 = vst [vmem:[#allocation2 + $0x680] sm:$0xff] %v1161
    %1450 = vst [vmem:[#allocation2 + $0x688] sm:$0xff] %v1162
    %1451 = vst [vmem:[#allocation2 + $0x690] sm:$0xff] %v1163
    %1452 = vst [vmem:[#allocation2 + $0x698] sm:$0xff] %v1164
    %1453 = vst [vmem:[#allocation2 + $0x6a0] sm:$0xff] %v1165
    %1454 = vst [vmem:[#allocation2 + $0x6a8] sm:$0xff] %v1166
    %1455 = vst [vmem:[#allocation2 + $0x6b0] sm:$0xff] %v1167
    %1456 = vst [vmem:[#allocation2 + $0x6b8] sm:$0xff] %v1168
    %1457 = vst [vmem:[#allocation2 + $0x6c0] sm:$0xff] %v1169
    %1458 = vst [vmem:[#allocation2 + $0x6c8] sm:$0xff] %v1170
    %1459 = vst [vmem:[#allocation2 + $0x6d0] sm:$0xff] %v1171
    %1460 = vst [vmem:[#allocation2 + $0x6d8] sm:$0xff] %v1172
    %1461 = vst [vmem:[#allocation2 + $0x6e0] sm:$0xff] %v1173
    %1462 = vst [vmem:[#allocation2 + $0x6e8] sm:$0xff] %v1174
    %1463 = vst [vmem:[#allocation2 + $0x6f0] sm:$0xff] %v1175
    %1464 = vst [vmem:[#allocation2 + $0x6f8] sm:$0xff] %v1176
    %1465 = vst [vmem:[#allocation2 + $0x700] sm:$0xff] %v1177
    %1466 = vst [vmem:[#allocation2 + $0x708] sm:$0xff] %v1178
    %1467 = vst [vmem:[#allocation2 + $0x710] sm:$0xff] %v1179
    %1468 = vst [vmem:[#allocation2 + $0x718] sm:$0xff] %v1180
    %1469 = vst [vmem:[#allocation2 + $0x720] sm:$0xff] %v1181
    %1470 = vst [vmem:[#allocation2 + $0x728] sm:$0xff] %v1182
    %1471 = vst [vmem:[#allocation2 + $0x730] sm:$0xff] %v1183
    %1472 = vst [vmem:[#allocation2 + $0x738] sm:$0xff] %v1184
    %1473 = vst [vmem:[#allocation2 + $0x740] sm:$0xff] %v1185
    %1474 = vst [vmem:[#allocation2 + $0x748] sm:$0xff] %v1186
    %1475 = vst [vmem:[#allocation2 + $0x750] sm:$0xff] %v1187
    %1476 = vst [vmem:[#allocation2 + $0x758] sm:$0xff] %v1188
    %1477 = vst [vmem:[#allocation2 + $0x760] sm:$0xff] %v1189
    %1478 = vst [vmem:[#allocation2 + $0x768] sm:$0xff] %v1190
    %1479 = vst [vmem:[#allocation2 + $0x770] sm:$0xff] %v1191
    %1480 = vst [vmem:[#allocation2 + $0x778] sm:$0xff] %v1192
    %1481 = vst [vmem:[#allocation2 + $0x780] sm:$0xff] %v1193
    %1482 = vst [vmem:[#allocation2 + $0x788] sm:$0xff] %v1194
    %1483 = vst [vmem:[#allocation2 + $0x790] sm:$0xff] %v1195
    %1484 = vst [vmem:[#allocation2 + $0x798] sm:$0xff] %v1196
    %1485 = vst [vmem:[#allocation2 + $0x7a0] sm:$0xff] %v1197
    %1486 = vst [vmem:[#allocation2 + $0x7a8] sm:$0xff] %v1198
    %1487 = vst [vmem:[#allocation2 + $0x7b0] sm:$0xff] %v1199
    %1488 = vst [vmem:[#allocation2 + $0x7b8] sm:$0xff] %v1200
    %1489 = vst [vmem:[#allocation2 + $0x7c0] sm:$0xff] %v1201
    %1490 = vst [vmem:[#allocation2 + $0x7c8] sm:$0xff] %v1202
    %1491 = vst [vmem:[#allocation2 + $0x7d0] sm:$0xff] %v1203
    %1492 = vst [vmem:[#allocation2 + $0x7d8] sm:$0xff] %v1204
    %1493 = vst [vmem:[#allocation2 + $0x7e0] sm:$0xff] %v1205
    %1494 = vst [vmem:[#allocation2 + $0x7e8] sm:$0xff] %v1206
    %1495 = vst [vmem:[#allocation2 + $0x7f0] sm:$0xff] %v1207
    %1496 = vst [vmem:[#allocation2 + $0x7f8] sm:$0xff] %v1208
    %1497 = vst [vmem:[#allocation2 + $0x800] sm:$0xff] %v1209
    %1498 = vst [vmem:[#allocation2 + $0x808] sm:$0xff] %v1210
    %1499 = vst [vmem:[#allocation2 + $0x810] sm:$0xff] %v1211
    %1500 = vst [vmem:[#allocation2 + $0x818] sm:$0xff] %v1212
    %1501 = vst [vmem:[#allocation2 + $0x820] sm:$0xff] %v1213
    %1502 = vst [vmem:[#allocation2 + $0x828] sm:$0xff] %v1214
    %1503 = vst [vmem:[#allocation2 + $0x830] sm:$0xff] %v1215
    %1504 = vst [vmem:[#allocation2 + $0x838] sm:$0xff] %v1216
    %1505 = vst [vmem:[#allocation2 + $0x840] sm:$0xff] %v1217
    %1506 = vst [vmem:[#allocation2 + $0x848] sm:$0xff] %v1218
    %1507 = vst [vmem:[#allocation2 + $0x850] sm:$0xff] %v1219
    %1508 = vst [vmem:[#allocation2 + $0x858] sm:$0xff] %v1220
    %1509 = vst [vmem:[#allocation2 + $0x860] sm:$0xff] %v1221
    %1510 = vst [vmem:[#allocation2 + $0x868] sm:$0xff] %v1222
    %1511 = vst [vmem:[#allocation2 + $0x870] sm:$0xff] %v1223
    %1512 = vst [vmem:[#allocation2 + $0x878] sm:$0xff] %v1224
    %1513 = vst [vmem:[#allocation2 + $0x880] sm:$0xff] %v1225
    %1514 = vst [vmem:[#allocation2 + $0x888] sm:$0xff] %v1226
    %1515 = vst [vmem:[#allocation2 + $0x890] sm:$0xff] %v1227
    %1516 = vst [vmem:[#allocation2 + $0x898] sm:$0xff] %v1228
    %1517 = vst [vmem:[#allocation2 + $0x8a0] sm:$0xff] %v1229
    %1518 = vst [vmem:[#allocation2 + $0x8a8] sm:$0xff] %v1230
    %1519 = vst [vmem:[#allocation2 + $0x8b0] sm:$0xff] %v1231
    %1520 = vst [vmem:[#allocation2 + $0x8b8] sm:$0xff] %v1232
    %1521 = vst [vmem:[#allocation2 + $0x8c0] sm:$0xff] %v1233
    %1522 = vst [vmem:[#allocation2 + $0x8c8] sm:$0xff] %v1234
    %1523 = vst [vmem:[#allocation2 + $0x8d0] sm:$0xff] %v1235
    %1524 = vst [vmem:[#allocation2 + $0x8d8] sm:$0xff] %v1236
    %1525 = vst [vmem:[#allocation2 + $0x8e0] sm:$0xff] %v1237
    %1526 = vst [vmem:[#allocation2 + $0x8e8] sm:$0xff] %v1238
    %1527 = vst [vmem:[#allocation2 + $0x8f0] sm:$0xff] %v1239
    %1528 = vst [vmem:[#allocation2 + $0x8f8] sm:$0xff] %v1240
    // Predicated region
    $region46: #{tpu_custom_call.1} parent=1 // pred_check
      %p1529 = pneg %p85
    $region47: #{tpu_custom_call.1} parent=1 // pred_check_branch
      %1531 = sbr.rel (%p1529) target = $region49
    $region48: #{tpu_custom_call.1} parent=1 // pred_region
      %v1532 = vld [vmem:[#allocation2] sm:$0xff]
      %v1533 = vld [vmem:[#allocation2 + $0x8] sm:$0xff]
      %v1534 = vld [vmem:[#allocation2 + $0x10] sm:$0xff]
      %v1535 = vld [vmem:[#allocation2 + $0x18] sm:$0xff]
      %v1536 = vld [vmem:[#allocation2 + $0x20] sm:$0xff]
      %v1537 = vld [vmem:[#allocation2 + $0x28] sm:$0xff]
      %v1538 = vld [vmem:[#allocation2 + $0x30] sm:$0xff]
      %v1539 = vld [vmem:[#allocation2 + $0x38] sm:$0xff]
      %v1540 = vld [vmem:[#allocation2 + $0x40] sm:$0xff]
      %v1541 = vld [vmem:[#allocation2 + $0x48] sm:$0xff]
      %v1542 = vld [vmem:[#allocation2 + $0x50] sm:$0xff]
      %v1543 = vld [vmem:[#allocation2 + $0x58] sm:$0xff]
      %v1544 = vld [vmem:[#allocation2 + $0x60] sm:$0xff]
      %v1545 = vld [vmem:[#allocation2 + $0x68] sm:$0xff]
      %v1546 = vld [vmem:[#allocation2 + $0x70] sm:$0xff]
      %v1547 = vld [vmem:[#allocation2 + $0x78] sm:$0xff]
      %v1548 = vld [vmem:[#allocation2 + $0x80] sm:$0xff]
      %v1549 = vld [vmem:[#allocation2 + $0x88] sm:$0xff]
      %v1550 = vld [vmem:[#allocation2 + $0x90] sm:$0xff]
      %v1551 = vld [vmem:[#allocation2 + $0x98] sm:$0xff]
      %v1552 = vld [vmem:[#allocation2 + $0xa0] sm:$0xff]
      %v1553 = vld [vmem:[#allocation2 + $0xa8] sm:$0xff]
      %v1554 = vld [vmem:[#allocation2 + $0xb0] sm:$0xff]
      %v1555 = vld [vmem:[#allocation2 + $0xb8] sm:$0xff]
      %v1556 = vld [vmem:[#allocation2 + $0xc0] sm:$0xff]
      %v1557 = vld [vmem:[#allocation2 + $0xc8] sm:$0xff]
      %v1558 = vld [vmem:[#allocation2 + $0xd0] sm:$0xff]
      %v1559 = vld [vmem:[#allocation2 + $0xd8] sm:$0xff]
      %v1560 = vld [vmem:[#allocation2 + $0xe0] sm:$0xff]
      %v1561 = vld [vmem:[#allocation2 + $0xe8] sm:$0xff]
      %v1562 = vld [vmem:[#allocation2 + $0xf0] sm:$0xff]
      %v1563 = vld [vmem:[#allocation2 + $0xf8] sm:$0xff]
      %v1564 = vld [vmem:[#allocation2 + $0x100] sm:$0xff]
      %v1565 = vld [vmem:[#allocation2 + $0x108] sm:$0xff]
      %v1566 = vld [vmem:[#allocation2 + $0x110] sm:$0xff]
      %v1567 = vld [vmem:[#allocation2 + $0x118] sm:$0xff]
      %v1568 = vld [vmem:[#allocation2 + $0x120] sm:$0xff]
      %v1569 = vld [vmem:[#allocation2 + $0x128] sm:$0xff]
      %v1570 = vld [vmem:[#allocation2 + $0x130] sm:$0xff]
      %v1571 = vld [vmem:[#allocation2 + $0x138] sm:$0xff]
      %v1572 = vld [vmem:[#allocation2 + $0x140] sm:$0xff]
      %v1573 = vld [vmem:[#allocation2 + $0x148] sm:$0xff]
      %v1574 = vld [vmem:[#allocation2 + $0x150] sm:$0xff]
      %v1575 = vld [vmem:[#allocation2 + $0x158] sm:$0xff]
      %v1576 = vld [vmem:[#allocation2 + $0x160] sm:$0xff]
      %v1577 = vld [vmem:[#allocation2 + $0x168] sm:$0xff]
      %v1578 = vld [vmem:[#allocation2 + $0x170] sm:$0xff]
      %v1579 = vld [vmem:[#allocation2 + $0x178] sm:$0xff]
      %v1580 = vld [vmem:[#allocation2 + $0x180] sm:$0xff]
      %v1581 = vld [vmem:[#allocation2 + $0x188] sm:$0xff]
      %v1582 = vld [vmem:[#allocation2 + $0x190] sm:$0xff]
      %v1583 = vld [vmem:[#allocation2 + $0x198] sm:$0xff]
      %v1584 = vld [vmem:[#allocation2 + $0x1a0] sm:$0xff]
      %v1585 = vld [vmem:[#allocation2 + $0x1a8] sm:$0xff]
      %v1586 = vld [vmem:[#allocation2 + $0x1b0] sm:$0xff]
      %v1587 = vld [vmem:[#allocation2 + $0x1b8] sm:$0xff]
      %v1588 = vld [vmem:[#allocation2 + $0x1c0] sm:$0xff]
      %v1589 = vld [vmem:[#allocation2 + $0x1c8] sm:$0xff]
      %v1590 = vld [vmem:[#allocation2 + $0x1d0] sm:$0xff]
      %v1591 = vld [vmem:[#allocation2 + $0x1d8] sm:$0xff]
      %v1592 = vld [vmem:[#allocation2 + $0x1e0] sm:$0xff]
      %v1593 = vld [vmem:[#allocation2 + $0x1e8] sm:$0xff]
      %v1594 = vld [vmem:[#allocation2 + $0x1f0] sm:$0xff]
      %v1595 = vld [vmem:[#allocation2 + $0x1f8] sm:$0xff]
      %v1596 = vld [vmem:[#allocation2 + $0x200] sm:$0xff]
      %v1597 = vld [vmem:[#allocation2 + $0x208] sm:$0xff]
      %v1598 = vld [vmem:[#allocation2 + $0x210] sm:$0xff]
      %v1599 = vld [vmem:[#allocation2 + $0x218] sm:$0xff]
      %v1600 = vld [vmem:[#allocation2 + $0x220] sm:$0xff]
      %v1601 = vld [vmem:[#allocation2 + $0x228] sm:$0xff]
      %v1602 = vld [vmem:[#allocation2 + $0x230] sm:$0xff]
      %v1603 = vld [vmem:[#allocation2 + $0x238] sm:$0xff]
      %v1604 = vld [vmem:[#allocation2 + $0x240] sm:$0xff]
      %v1605 = vld [vmem:[#allocation2 + $0x248] sm:$0xff]
      %v1606 = vld [vmem:[#allocation2 + $0x250] sm:$0xff]
      %v1607 = vld [vmem:[#allocation2 + $0x258] sm:$0xff]
      %v1608 = vld [vmem:[#allocation2 + $0x260] sm:$0xff]
      %v1609 = vld [vmem:[#allocation2 + $0x268] sm:$0xff]
      %v1610 = vld [vmem:[#allocation2 + $0x270] sm:$0xff]
      %v1611 = vld [vmem:[#allocation2 + $0x278] sm:$0xff]
      %v1612 = vld [vmem:[#allocation2 + $0x280] sm:$0xff]
      %v1613 = vld [vmem:[#allocation2 + $0x288] sm:$0xff]
      %v1614 = vld [vmem:[#allocation2 + $0x290] sm:$0xff]
      %v1615 = vld [vmem:[#allocation2 + $0x298] sm:$0xff]
      %v1616 = vld [vmem:[#allocation2 + $0x2a0] sm:$0xff]
      %v1617 = vld [vmem:[#allocation2 + $0x2a8] sm:$0xff]
      %v1618 = vld [vmem:[#allocation2 + $0x2b0] sm:$0xff]
      %v1619 = vld [vmem:[#allocation2 + $0x2b8] sm:$0xff]
      %v1620 = vld [vmem:[#allocation2 + $0x2c0] sm:$0xff]
      %v1621 = vld [vmem:[#allocation2 + $0x2c8] sm:$0xff]
      %v1622 = vld [vmem:[#allocation2 + $0x2d0] sm:$0xff]
      %v1623 = vld [vmem:[#allocation2 + $0x2d8] sm:$0xff]
      %v1624 = vld [vmem:[#allocation2 + $0x2e0] sm:$0xff]
      %v1625 = vld [vmem:[#allocation2 + $0x2e8] sm:$0xff]
      %v1626 = vld [vmem:[#allocation2 + $0x2f0] sm:$0xff]
      %v1627 = vld [vmem:[#allocation2 + $0x2f8] sm:$0xff]
      %v1628 = vld [vmem:[#allocation2 + $0x300] sm:$0xff]
      %v1629 = vld [vmem:[#allocation2 + $0x308] sm:$0xff]
      %v1630 = vld [vmem:[#allocation2 + $0x310] sm:$0xff]
      %v1631 = vld [vmem:[#allocation2 + $0x318] sm:$0xff]
      %v1632 = vld [vmem:[#allocation2 + $0x320] sm:$0xff]
      %v1633 = vld [vmem:[#allocation2 + $0x328] sm:$0xff]
      %v1634 = vld [vmem:[#allocation2 + $0x330] sm:$0xff]
      %v1635 = vld [vmem:[#allocation2 + $0x338] sm:$0xff]
      %v1636 = vld [vmem:[#allocation2 + $0x340] sm:$0xff]
      %v1637 = vld [vmem:[#allocation2 + $0x348] sm:$0xff]
      %v1638 = vld [vmem:[#allocation2 + $0x350] sm:$0xff]
      %v1639 = vld [vmem:[#allocation2 + $0x358] sm:$0xff]
      %v1640 = vld [vmem:[#allocation2 + $0x360] sm:$0xff]
      %v1641 = vld [vmem:[#allocation2 + $0x368] sm:$0xff]
      %v1642 = vld [vmem:[#allocation2 + $0x370] sm:$0xff]
      %v1643 = vld [vmem:[#allocation2 + $0x378] sm:$0xff]
      %v1644 = vld [vmem:[#allocation2 + $0x380] sm:$0xff]
      %v1645 = vld [vmem:[#allocation2 + $0x388] sm:$0xff]
      %v1646 = vld [vmem:[#allocation2 + $0x390] sm:$0xff]
      %v1647 = vld [vmem:[#allocation2 + $0x398] sm:$0xff]
      %v1648 = vld [vmem:[#allocation2 + $0x3a0] sm:$0xff]
      %v1649 = vld [vmem:[#allocation2 + $0x3a8] sm:$0xff]
      %v1650 = vld [vmem:[#allocation2 + $0x3b0] sm:$0xff]
      %v1651 = vld [vmem:[#allocation2 + $0x3b8] sm:$0xff]
      %v1652 = vld [vmem:[#allocation2 + $0x3c0] sm:$0xff]
      %v1653 = vld [vmem:[#allocation2 + $0x3c8] sm:$0xff]
      %v1654 = vld [vmem:[#allocation2 + $0x3d0] sm:$0xff]
      %v1655 = vld [vmem:[#allocation2 + $0x3d8] sm:$0xff]
      %v1656 = vld [vmem:[#allocation2 + $0x3e0] sm:$0xff]
      %v1657 = vld [vmem:[#allocation2 + $0x3e8] sm:$0xff]
      %v1658 = vld [vmem:[#allocation2 + $0x3f0] sm:$0xff]
      %v1659 = vld [vmem:[#allocation2 + $0x3f8] sm:$0xff]
      %v1660 = vld [vmem:[#allocation2 + $0x400] sm:$0xff]
      %v1661 = vld [vmem:[#allocation2 + $0x408] sm:$0xff]
      %v1662 = vld [vmem:[#allocation2 + $0x410] sm:$0xff]
      %v1663 = vld [vmem:[#allocation2 + $0x418] sm:$0xff]
      %v1664 = vld [vmem:[#allocation2 + $0x420] sm:$0xff]
      %v1665 = vld [vmem:[#allocation2 + $0x428] sm:$0xff]
      %v1666 = vld [vmem:[#allocation2 + $0x430] sm:$0xff]
      %v1667 = vld [vmem:[#allocation2 + $0x438] sm:$0xff]
      %v1668 = vld [vmem:[#allocation2 + $0x440] sm:$0xff]
      %v1669 = vld [vmem:[#allocation2 + $0x448] sm:$0xff]
      %v1670 = vld [vmem:[#allocation2 + $0x450] sm:$0xff]
      %v1671 = vld [vmem:[#allocation2 + $0x458] sm:$0xff]
      %v1672 = vld [vmem:[#allocation2 + $0x460] sm:$0xff]
      %v1673 = vld [vmem:[#allocation2 + $0x468] sm:$0xff]
      %v1674 = vld [vmem:[#allocation2 + $0x470] sm:$0xff]
      %v1675 = vld [vmem:[#allocation2 + $0x478] sm:$0xff]
      %v1676 = vld [vmem:[#allocation2 + $0x480] sm:$0xff]
      %v1677 = vld [vmem:[#allocation2 + $0x488] sm:$0xff]
      %v1678 = vld [vmem:[#allocation2 + $0x490] sm:$0xff]
      %v1679 = vld [vmem:[#allocation2 + $0x498] sm:$0xff]
      %v1680 = vld [vmem:[#allocation2 + $0x4a0] sm:$0xff]
      %v1681 = vld [vmem:[#allocation2 + $0x4a8] sm:$0xff]
      %v1682 = vld [vmem:[#allocation2 + $0x4b0] sm:$0xff]
      %v1683 = vld [vmem:[#allocation2 + $0x4b8] sm:$0xff]
      %v1684 = vld [vmem:[#allocation2 + $0x4c0] sm:$0xff]
      %v1685 = vld [vmem:[#allocation2 + $0x4c8] sm:$0xff]
      %v1686 = vld [vmem:[#allocation2 + $0x4d0] sm:$0xff]
      %v1687 = vld [vmem:[#allocation2 + $0x4d8] sm:$0xff]
      %v1688 = vld [vmem:[#allocation2 + $0x4e0] sm:$0xff]
      %v1689 = vld [vmem:[#allocation2 + $0x4e8] sm:$0xff]
      %v1690 = vld [vmem:[#allocation2 + $0x4f0] sm:$0xff]
      %v1691 = vld [vmem:[#allocation2 + $0x4f8] sm:$0xff]
      %v1692 = vld [vmem:[#allocation2 + $0x500] sm:$0xff]
      %v1693 = vld [vmem:[#allocation2 + $0x508] sm:$0xff]
      %v1694 = vld [vmem:[#allocation2 + $0x510] sm:$0xff]
      %v1695 = vld [vmem:[#allocation2 + $0x518] sm:$0xff]
      %v1696 = vld [vmem:[#allocation2 + $0x520] sm:$0xff]
      %v1697 = vld [vmem:[#allocation2 + $0x528] sm:$0xff]
      %v1698 = vld [vmem:[#allocation2 + $0x530] sm:$0xff]
      %v1699 = vld [vmem:[#allocation2 + $0x538] sm:$0xff]
      %v1700 = vld [vmem:[#allocation2 + $0x540] sm:$0xff]
      %v1701 = vld [vmem:[#allocation2 + $0x548] sm:$0xff]
      %v1702 = vld [vmem:[#allocation2 + $0x550] sm:$0xff]
      %v1703 = vld [vmem:[#allocation2 + $0x558] sm:$0xff]
      %v1704 = vld [vmem:[#allocation2 + $0x560] sm:$0xff]
      %v1705 = vld [vmem:[#allocation2 + $0x568] sm:$0xff]
      %v1706 = vld [vmem:[#allocation2 + $0x570] sm:$0xff]
      %v1707 = vld [vmem:[#allocation2 + $0x578] sm:$0xff]
      %v1708 = vld [vmem:[#allocation2 + $0x580] sm:$0xff]
      %v1709 = vld [vmem:[#allocation2 + $0x588] sm:$0xff]
      %v1710 = vld [vmem:[#allocation2 + $0x590] sm:$0xff]
      %v1711 = vld [vmem:[#allocation2 + $0x598] sm:$0xff]
      %v1712 = vld [vmem:[#allocation2 + $0x5a0] sm:$0xff]
      %v1713 = vld [vmem:[#allocation2 + $0x5a8] sm:$0xff]
      %v1714 = vld [vmem:[#allocation2 + $0x5b0] sm:$0xff]
      %v1715 = vld [vmem:[#allocation2 + $0x5b8] sm:$0xff]
      %v1716 = vld [vmem:[#allocation2 + $0x5c0] sm:$0xff]
      %v1717 = vld [vmem:[#allocation2 + $0x5c8] sm:$0xff]
      %v1718 = vld [vmem:[#allocation2 + $0x5d0] sm:$0xff]
      %v1719 = vld [vmem:[#allocation2 + $0x5d8] sm:$0xff]
      %v1720 = vld [vmem:[#allocation2 + $0x5e0] sm:$0xff]
      %v1721 = vld [vmem:[#allocation2 + $0x5e8] sm:$0xff]
      %v1722 = vld [vmem:[#allocation2 + $0x5f0] sm:$0xff]
      %v1723 = vld [vmem:[#allocation2 + $0x5f8] sm:$0xff]
      %v1724 = vld [vmem:[#allocation2 + $0x600] sm:$0xff]
      %v1725 = vld [vmem:[#allocation2 + $0x608] sm:$0xff]
      %v1726 = vld [vmem:[#allocation2 + $0x610] sm:$0xff]
      %v1727 = vld [vmem:[#allocation2 + $0x618] sm:$0xff]
      %v1728 = vld [vmem:[#allocation2 + $0x620] sm:$0xff]
      %v1729 = vld [vmem:[#allocation2 + $0x628] sm:$0xff]
      %v1730 = vld [vmem:[#allocation2 + $0x630] sm:$0xff]
      %v1731 = vld [vmem:[#allocation2 + $0x638] sm:$0xff]
      %v1732 = vld [vmem:[#allocation2 + $0x640] sm:$0xff]
      %v1733 = vld [vmem:[#allocation2 + $0x648] sm:$0xff]
      %v1734 = vld [vmem:[#allocation2 + $0x650] sm:$0xff]
      %v1735 = vld [vmem:[#allocation2 + $0x658] sm:$0xff]
      %v1736 = vld [vmem:[#allocation2 + $0x660] sm:$0xff]
      %v1737 = vld [vmem:[#allocation2 + $0x668] sm:$0xff]
      %v1738 = vld [vmem:[#allocation2 + $0x670] sm:$0xff]
      %v1739 = vld [vmem:[#allocation2 + $0x678] sm:$0xff]
      %v1740 = vld [vmem:[#allocation2 + $0x680] sm:$0xff]
      %v1741 = vld [vmem:[#allocation2 + $0x688] sm:$0xff]
      %v1742 = vld [vmem:[#allocation2 + $0x690] sm:$0xff]
      %v1743 = vld [vmem:[#allocation2 + $0x698] sm:$0xff]
      %v1744 = vld [vmem:[#allocation2 + $0x6a0] sm:$0xff]
      %v1745 = vld [vmem:[#allocation2 + $0x6a8] sm:$0xff]
      %v1746 = vld [vmem:[#allocation2 + $0x6b0] sm:$0xff]
      %v1747 = vld [vmem:[#allocation2 + $0x6b8] sm:$0xff]
      %v1748 = vld [vmem:[#allocation2 + $0x6c0] sm:$0xff]
      %v1749 = vld [vmem:[#allocation2 + $0x6c8] sm:$0xff]
      %v1750 = vld [vmem:[#allocation2 + $0x6d0] sm:$0xff]
      %v1751 = vld [vmem:[#allocation2 + $0x6d8] sm:$0xff]
      %v1752 = vld [vmem:[#allocation2 + $0x6e0] sm:$0xff]
      %v1753 = vld [vmem:[#allocation2 + $0x6e8] sm:$0xff]
      %v1754 = vld [vmem:[#allocation2 + $0x6f0] sm:$0xff]
      %v1755 = vld [vmem:[#allocation2 + $0x6f8] sm:$0xff]
      %v1756 = vld [vmem:[#allocation2 + $0x700] sm:$0xff]
      %v1757 = vld [vmem:[#allocation2 + $0x708] sm:$0xff]
      %v1758 = vld [vmem:[#allocation2 + $0x710] sm:$0xff]
      %v1759 = vld [vmem:[#allocation2 + $0x718] sm:$0xff]
      %v1760 = vld [vmem:[#allocation2 + $0x720] sm:$0xff]
      %v1761 = vld [vmem:[#allocation2 + $0x728] sm:$0xff]
      %v1762 = vld [vmem:[#allocation2 + $0x730] sm:$0xff]
      %v1763 = vld [vmem:[#allocation2 + $0x738] sm:$0xff]
      %v1764 = vld [vmem:[#allocation2 + $0x740] sm:$0xff]
      %v1765 = vld [vmem:[#allocation2 + $0x748] sm:$0xff]
      %v1766 = vld [vmem:[#allocation2 + $0x750] sm:$0xff]
      %v1767 = vld [vmem:[#allocation2 + $0x758] sm:$0xff]
      %v1768 = vld [vmem:[#allocation2 + $0x760] sm:$0xff]
      %v1769 = vld [vmem:[#allocation2 + $0x768] sm:$0xff]
      %v1770 = vld [vmem:[#allocation2 + $0x770] sm:$0xff]
      %v1771 = vld [vmem:[#allocation2 + $0x778] sm:$0xff]
      %v1772 = vld [vmem:[#allocation2 + $0x780] sm:$0xff]
      %v1773 = vld [vmem:[#allocation2 + $0x788] sm:$0xff]
      %v1774 = vld [vmem:[#allocation2 + $0x790] sm:$0xff]
      %v1775 = vld [vmem:[#allocation2 + $0x798] sm:$0xff]
      %v1776 = vld [vmem:[#allocation2 + $0x7a0] sm:$0xff]
      %v1777 = vld [vmem:[#allocation2 + $0x7a8] sm:$0xff]
      %v1778 = vld [vmem:[#allocation2 + $0x7b0] sm:$0xff]
      %v1779 = vld [vmem:[#allocation2 + $0x7b8] sm:$0xff]
      %v1780 = vld [vmem:[#allocation2 + $0x7c0] sm:$0xff]
      %v1781 = vld [vmem:[#allocation2 + $0x7c8] sm:$0xff]
      %v1782 = vld [vmem:[#allocation2 + $0x7d0] sm:$0xff]
      %v1783 = vld [vmem:[#allocation2 + $0x7d8] sm:$0xff]
      %v1784 = vld [vmem:[#allocation2 + $0x7e0] sm:$0xff]
      %v1785 = vld [vmem:[#allocation2 + $0x7e8] sm:$0xff]
      %v1786 = vld [vmem:[#allocation2 + $0x7f0] sm:$0xff]
      %v1787 = vld [vmem:[#allocation2 + $0x7f8] sm:$0xff]
      %v1788 = vld [vmem:[#allocation2 + $0x800] sm:$0xff]
      %v1789 = vld [vmem:[#allocation2 + $0x808] sm:$0xff]
      %v1790 = vld [vmem:[#allocation2 + $0x810] sm:$0xff]
      %v1791 = vld [vmem:[#allocation2 + $0x818] sm:$0xff]
      %v1792 = vld [vmem:[#allocation2 + $0x820] sm:$0xff]
      %v1793 = vld [vmem:[#allocation2 + $0x828] sm:$0xff]
      %v1794 = vld [vmem:[#allocation2 + $0x830] sm:$0xff]
      %v1795 = vld [vmem:[#allocation2 + $0x838] sm:$0xff]
      %v1796 = vld [vmem:[#allocation2 + $0x840] sm:$0xff]
      %v1797 = vld [vmem:[#allocation2 + $0x848] sm:$0xff]
      %v1798 = vld [vmem:[#allocation2 + $0x850] sm:$0xff]
      %v1799 = vld [vmem:[#allocation2 + $0x858] sm:$0xff]
      %v1800 = vld [vmem:[#allocation2 + $0x860] sm:$0xff]
      %v1801 = vld [vmem:[#allocation2 + $0x868] sm:$0xff]
      %v1802 = vld [vmem:[#allocation2 + $0x870] sm:$0xff]
      %v1803 = vld [vmem:[#allocation2 + $0x878] sm:$0xff]
      %v1804 = vld [vmem:[#allocation2 + $0x880] sm:$0xff]
      %v1805 = vld [vmem:[#allocation2 + $0x888] sm:$0xff]
      %v1806 = vld [vmem:[#allocation2 + $0x890] sm:$0xff]
      %v1807 = vld [vmem:[#allocation2 + $0x898] sm:$0xff]
      %v1808 = vld [vmem:[#allocation2 + $0x8a0] sm:$0xff]
      %v1809 = vld [vmem:[#allocation2 + $0x8a8] sm:$0xff]
      %v1810 = vld [vmem:[#allocation2 + $0x8b0] sm:$0xff]
      %v1811 = vld [vmem:[#allocation2 + $0x8b8] sm:$0xff]
      %v1812 = vld [vmem:[#allocation2 + $0x8c0] sm:$0xff]
      %v1813 = vld [vmem:[#allocation2 + $0x8c8] sm:$0xff]
      %v1814 = vld [vmem:[#allocation2 + $0x8d0] sm:$0xff]
      %v1815 = vld [vmem:[#allocation2 + $0x8d8] sm:$0xff]
      %v1816 = vld [vmem:[#allocation2 + $0x8e0] sm:$0xff]
      %v1817 = vld [vmem:[#allocation2 + $0x8e8] sm:$0xff]
      %v1818 = vld [vmem:[#allocation2 + $0x8f0] sm:$0xff]
      %v1819 = vld [vmem:[#allocation2 + $0x8f8] sm:$0xff]
      %1820 = vadd.xlane.f32.xlu0 %v1532
      %v1821 = vpop.xlane.xlu0 %1820
      %1822 = vadd.xlane.f32.xlu0 %v1533
      %v1823 = vpop.xlane.xlu0 %1822
      %1824 = vadd.xlane.f32.xlu0 %v1534
      %v1825 = vpop.xlane.xlu0 %1824
      %1826 = vadd.xlane.f32.xlu0 %v1535
      %v1827 = vpop.xlane.xlu0 %1826
      %1828 = vadd.xlane.f32.xlu0 %v1536
      %v1829 = vpop.xlane.xlu0 %1828
      %1830 = vadd.xlane.f32.xlu0 %v1537
      %v1831 = vpop.xlane.xlu0 %1830
      %1832 = vadd.xlane.f32.xlu0 %v1538
      %v1833 = vpop.xlane.xlu0 %1832
      %1834 = vadd.xlane.f32.xlu0 %v1539
      %v1835 = vpop.xlane.xlu0 %1834
      %1836 = vadd.xlane.f32.xlu0 %v1540
      %v1837 = vpop.xlane.xlu0 %1836
      %1838 = vadd.xlane.f32.xlu0 %v1541
      %v1839 = vpop.xlane.xlu0 %1838
      %1840 = vadd.xlane.f32.xlu0 %v1542
      %v1841 = vpop.xlane.xlu0 %1840
      %1842 = vadd.xlane.f32.xlu0 %v1543
      %v1843 = vpop.xlane.xlu0 %1842
      %1844 = vadd.xlane.f32.xlu0 %v1544
      %v1845 = vpop.xlane.xlu0 %1844
      %1846 = vadd.xlane.f32.xlu0 %v1545
      %v1847 = vpop.xlane.xlu0 %1846
      %1848 = vadd.xlane.f32.xlu0 %v1546
      %v1849 = vpop.xlane.xlu0 %1848
      %1850 = vadd.xlane.f32.xlu0 %v1547
      %v1851 = vpop.xlane.xlu0 %1850
      %1852 = vadd.xlane.f32.xlu0 %v1548
      %v1853 = vpop.xlane.xlu0 %1852
      %1854 = vadd.xlane.f32.xlu0 %v1549
      %v1855 = vpop.xlane.xlu0 %1854
      %1856 = vadd.xlane.f32.xlu0 %v1550
      %v1857 = vpop.xlane.xlu0 %1856
      %1858 = vadd.xlane.f32.xlu0 %v1551
      %v1859 = vpop.xlane.xlu0 %1858
      %1860 = vadd.xlane.f32.xlu0 %v1552
      %v1861 = vpop.xlane.xlu0 %1860
      %1862 = vadd.xlane.f32.xlu0 %v1553
      %v1863 = vpop.xlane.xlu0 %1862
      %1864 = vadd.xlane.f32.xlu0 %v1554
      %v1865 = vpop.xlane.xlu0 %1864
      %1866 = vadd.xlane.f32.xlu0 %v1555
      %v1867 = vpop.xlane.xlu0 %1866
      %1868 = vadd.xlane.f32.xlu0 %v1556
      %v1869 = vpop.xlane.xlu0 %1868
      %1870 = vadd.xlane.f32.xlu0 %v1557
      %v1871 = vpop.xlane.xlu0 %1870
      %1872 = vadd.xlane.f32.xlu0 %v1558
      %v1873 = vpop.xlane.xlu0 %1872
      %1874 = vadd.xlane.f32.xlu0 %v1559
      %v1875 = vpop.xlane.xlu0 %1874
      %1876 = vadd.xlane.f32.xlu0 %v1560
      %v1877 = vpop.xlane.xlu0 %1876
      %1878 = vadd.xlane.f32.xlu0 %v1561
      %v1879 = vpop.xlane.xlu0 %1878
      %1880 = vadd.xlane.f32.xlu0 %v1562
      %v1881 = vpop.xlane.xlu0 %1880
      %1882 = vadd.xlane.f32.xlu0 %v1563
      %v1883 = vpop.xlane.xlu0 %1882
      %1884 = vadd.xlane.f32.xlu0 %v1564
      %v1885 = vpop.xlane.xlu0 %1884
      %1886 = vadd.xlane.f32.xlu0 %v1565
      %v1887 = vpop.xlane.xlu0 %1886
      %1888 = vadd.xlane.f32.xlu0 %v1566
      %v1889 = vpop.xlane.xlu0 %1888
      %1890 = vadd.xlane.f32.xlu0 %v1567
      %v1891 = vpop.xlane.xlu0 %1890
      %1892 = vadd.xlane.f32.xlu0 %v1568
      %v1893 = vpop.xlane.xlu0 %1892
      %1894 = vadd.xlane.f32.xlu0 %v1569
      %v1895 = vpop.xlane.xlu0 %1894
      %1896 = vadd.xlane.f32.xlu0 %v1570
      %v1897 = vpop.xlane.xlu0 %1896
      %1898 = vadd.xlane.f32.xlu0 %v1571
      %v1899 = vpop.xlane.xlu0 %1898
      %1900 = vadd.xlane.f32.xlu0 %v1572
      %v1901 = vpop.xlane.xlu0 %1900
      %1902 = vadd.xlane.f32.xlu0 %v1573
      %v1903 = vpop.xlane.xlu0 %1902
      %1904 = vadd.xlane.f32.xlu0 %v1574
      %v1905 = vpop.xlane.xlu0 %1904
      %1906 = vadd.xlane.f32.xlu0 %v1575
      %v1907 = vpop.xlane.xlu0 %1906
      %1908 = vadd.xlane.f32.xlu0 %v1576
      %v1909 = vpop.xlane.xlu0 %1908
      %1910 = vadd.xlane.f32.xlu0 %v1577
      %v1911 = vpop.xlane.xlu0 %1910
      %1912 = vadd.xlane.f32.xlu0 %v1578
      %v1913 = vpop.xlane.xlu0 %1912
      %1914 = vadd.xlane.f32.xlu0 %v1579
      %v1915 = vpop.xlane.xlu0 %1914
      %1916 = vadd.xlane.f32.xlu0 %v1580
      %v1917 = vpop.xlane.xlu0 %1916
      %1918 = vadd.xlane.f32.xlu0 %v1581
      %v1919 = vpop.xlane.xlu0 %1918
      %1920 = vadd.xlane.f32.xlu0 %v1582
      %v1921 = vpop.xlane.xlu0 %1920
      %1922 = vadd.xlane.f32.xlu0 %v1583
      %v1923 = vpop.xlane.xlu0 %1922
      %1924 = vadd.xlane.f32.xlu0 %v1584
      %v1925 = vpop.xlane.xlu0 %1924
      %1926 = vadd.xlane.f32.xlu0 %v1585
      %v1927 = vpop.xlane.xlu0 %1926
      %1928 = vadd.xlane.f32.xlu0 %v1586
      %v1929 = vpop.xlane.xlu0 %1928
      %1930 = vadd.xlane.f32.xlu0 %v1587
      %v1931 = vpop.xlane.xlu0 %1930
      %1932 = vadd.xlane.f32.xlu0 %v1588
      %v1933 = vpop.xlane.xlu0 %1932
      %1934 = vadd.xlane.f32.xlu0 %v1589
      %v1935 = vpop.xlane.xlu0 %1934
      %1936 = vadd.xlane.f32.xlu0 %v1590
      %v1937 = vpop.xlane.xlu0 %1936
      %1938 = vadd.xlane.f32.xlu0 %v1591
      %v1939 = vpop.xlane.xlu0 %1938
      %1940 = vadd.xlane.f32.xlu0 %v1592
      %v1941 = vpop.xlane.xlu0 %1940
      %1942 = vadd.xlane.f32.xlu0 %v1593
      %v1943 = vpop.xlane.xlu0 %1942
      %1944 = vadd.xlane.f32.xlu0 %v1594
      %v1945 = vpop.xlane.xlu0 %1944
      %1946 = vadd.xlane.f32.xlu0 %v1595
      %v1947 = vpop.xlane.xlu0 %1946
      %1948 = vadd.xlane.f32.xlu0 %v1596
      %v1949 = vpop.xlane.xlu0 %1948
      %1950 = vadd.xlane.f32.xlu0 %v1597
      %v1951 = vpop.xlane.xlu0 %1950
      %1952 = vadd.xlane.f32.xlu0 %v1598
      %v1953 = vpop.xlane.xlu0 %1952
      %1954 = vadd.xlane.f32.xlu0 %v1599
      %v1955 = vpop.xlane.xlu0 %1954
      %1956 = vadd.xlane.f32.xlu0 %v1600
      %v1957 = vpop.xlane.xlu0 %1956
      %1958 = vadd.xlane.f32.xlu0 %v1601
      %v1959 = vpop.xlane.xlu0 %1958
      %1960 = vadd.xlane.f32.xlu0 %v1602
      %v1961 = vpop.xlane.xlu0 %1960
      %1962 = vadd.xlane.f32.xlu0 %v1603
      %v1963 = vpop.xlane.xlu0 %1962
      %1964 = vadd.xlane.f32.xlu0 %v1604
      %v1965 = vpop.xlane.xlu0 %1964
      %1966 = vadd.xlane.f32.xlu0 %v1605
      %v1967 = vpop.xlane.xlu0 %1966
      %1968 = vadd.xlane.f32.xlu0 %v1606
      %v1969 = vpop.xlane.xlu0 %1968
      %1970 = vadd.xlane.f32.xlu0 %v1607
      %v1971 = vpop.xlane.xlu0 %1970
      %1972 = vadd.xlane.f32.xlu0 %v1608
      %v1973 = vpop.xlane.xlu0 %1972
      %1974 = vadd.xlane.f32.xlu0 %v1609
      %v1975 = vpop.xlane.xlu0 %1974
      %1976 = vadd.xlane.f32.xlu0 %v1610
      %v1977 = vpop.xlane.xlu0 %1976
      %1978 = vadd.xlane.f32.xlu0 %v1611
      %v1979 = vpop.xlane.xlu0 %1978
      %1980 = vadd.xlane.f32.xlu0 %v1612
      %v1981 = vpop.xlane.xlu0 %1980
      %1982 = vadd.xlane.f32.xlu0 %v1613
      %v1983 = vpop.xlane.xlu0 %1982
      %1984 = vadd.xlane.f32.xlu0 %v1614
      %v1985 = vpop.xlane.xlu0 %1984
      %1986 = vadd.xlane.f32.xlu0 %v1615
      %v1987 = vpop.xlane.xlu0 %1986
      %1988 = vadd.xlane.f32.xlu0 %v1616
      %v1989 = vpop.xlane.xlu0 %1988
      %1990 = vadd.xlane.f32.xlu0 %v1617
      %v1991 = vpop.xlane.xlu0 %1990
      %1992 = vadd.xlane.f32.xlu0 %v1618
      %v1993 = vpop.xlane.xlu0 %1992
      %1994 = vadd.xlane.f32.xlu0 %v1619
      %v1995 = vpop.xlane.xlu0 %1994
      %1996 = vadd.xlane.f32.xlu0 %v1620
      %v1997 = vpop.xlane.xlu0 %1996
      %1998 = vadd.xlane.f32.xlu0 %v1621
      %v1999 = vpop.xlane.xlu0 %1998
      %2000 = vadd.xlane.f32.xlu0 %v1622
      %v2001 = vpop.xlane.xlu0 %2000
      %2002 = vadd.xlane.f32.xlu0 %v1623
      %v2003 = vpop.xlane.xlu0 %2002
      %2004 = vadd.xlane.f32.xlu0 %v1624
      %v2005 = vpop.xlane.xlu0 %2004
      %2006 = vadd.xlane.f32.xlu0 %v1625
      %v2007 = vpop.xlane.xlu0 %2006
      %2008 = vadd.xlane.f32.xlu0 %v1626
      %v2009 = vpop.xlane.xlu0 %2008
      %2010 = vadd.xlane.f32.xlu0 %v1627
      %v2011 = vpop.xlane.xlu0 %2010
      %2012 = vadd.xlane.f32.xlu0 %v1628
      %v2013 = vpop.xlane.xlu0 %2012
      %2014 = vadd.xlane.f32.xlu0 %v1629
      %v2015 = vpop.xlane.xlu0 %2014
      %2016 = vadd.xlane.f32.xlu0 %v1630
      %v2017 = vpop.xlane.xlu0 %2016
      %2018 = vadd.xlane.f32.xlu0 %v1631
      %v2019 = vpop.xlane.xlu0 %2018
      %2020 = vadd.xlane.f32.xlu0 %v1632
      %v2021 = vpop.xlane.xlu0 %2020
      %2022 = vadd.xlane.f32.xlu0 %v1633
      %v2023 = vpop.xlane.xlu0 %2022
      %2024 = vadd.xlane.f32.xlu0 %v1634
      %v2025 = vpop.xlane.xlu0 %2024
      %2026 = vadd.xlane.f32.xlu0 %v1635
      %v2027 = vpop.xlane.xlu0 %2026
      %2028 = vadd.xlane.f32.xlu0 %v1636
      %v2029 = vpop.xlane.xlu0 %2028
      %2030 = vadd.xlane.f32.xlu0 %v1637
      %v2031 = vpop.xlane.xlu0 %2030
      %2032 = vadd.xlane.f32.xlu0 %v1638
      %v2033 = vpop.xlane.xlu0 %2032
      %2034 = vadd.xlane.f32.xlu0 %v1639
      %v2035 = vpop.xlane.xlu0 %2034
      %2036 = vadd.xlane.f32.xlu0 %v1640
      %v2037 = vpop.xlane.xlu0 %2036
      %2038 = vadd.xlane.f32.xlu0 %v1641
      %v2039 = vpop.xlane.xlu0 %2038
      %2040 = vadd.xlane.f32.xlu0 %v1642
      %v2041 = vpop.xlane.xlu0 %2040
      %2042 = vadd.xlane.f32.xlu0 %v1643
      %v2043 = vpop.xlane.xlu0 %2042
      %2044 = vadd.xlane.f32.xlu0 %v1644
      %v2045 = vpop.xlane.xlu0 %2044
      %2046 = vadd.xlane.f32.xlu0 %v1645
      %v2047 = vpop.xlane.xlu0 %2046
      %2048 = vadd.xlane.f32.xlu0 %v1646
      %v2049 = vpop.xlane.xlu0 %2048
      %2050 = vadd.xlane.f32.xlu0 %v1647
      %v2051 = vpop.xlane.xlu0 %2050
      %2052 = vadd.xlane.f32.xlu0 %v1648
      %v2053 = vpop.xlane.xlu0 %2052
      %2054 = vadd.xlane.f32.xlu0 %v1649
      %v2055 = vpop.xlane.xlu0 %2054
      %2056 = vadd.xlane.f32.xlu0 %v1650
      %v2057 = vpop.xlane.xlu0 %2056
      %2058 = vadd.xlane.f32.xlu0 %v1651
      %v2059 = vpop.xlane.xlu0 %2058
      %2060 = vadd.xlane.f32.xlu0 %v1652
      %v2061 = vpop.xlane.xlu0 %2060
      %2062 = vadd.xlane.f32.xlu0 %v1653
      %v2063 = vpop.xlane.xlu0 %2062
      %2064 = vadd.xlane.f32.xlu0 %v1654
      %v2065 = vpop.xlane.xlu0 %2064
      %2066 = vadd.xlane.f32.xlu0 %v1655
      %v2067 = vpop.xlane.xlu0 %2066
      %2068 = vadd.xlane.f32.xlu0 %v1656
      %v2069 = vpop.xlane.xlu0 %2068
      %2070 = vadd.xlane.f32.xlu0 %v1657
      %v2071 = vpop.xlane.xlu0 %2070
      %2072 = vadd.xlane.f32.xlu0 %v1658
      %v2073 = vpop.xlane.xlu0 %2072
      %2074 = vadd.xlane.f32.xlu0 %v1659
      %v2075 = vpop.xlane.xlu0 %2074
      %2076 = vadd.xlane.f32.xlu0 %v1660
      %v2077 = vpop.xlane.xlu0 %2076
      %2078 = vadd.xlane.f32.xlu0 %v1661
      %v2079 = vpop.xlane.xlu0 %2078
      %2080 = vadd.xlane.f32.xlu0 %v1662
      %v2081 = vpop.xlane.xlu0 %2080
      %2082 = vadd.xlane.f32.xlu0 %v1663
      %v2083 = vpop.xlane.xlu0 %2082
      %2084 = vadd.xlane.f32.xlu0 %v1664
      %v2085 = vpop.xlane.xlu0 %2084
      %2086 = vadd.xlane.f32.xlu0 %v1665
      %v2087 = vpop.xlane.xlu0 %2086
      %2088 = vadd.xlane.f32.xlu0 %v1666
      %v2089 = vpop.xlane.xlu0 %2088
      %2090 = vadd.xlane.f32.xlu0 %v1667
      %v2091 = vpop.xlane.xlu0 %2090
      %2092 = vadd.xlane.f32.xlu0 %v1668
      %v2093 = vpop.xlane.xlu0 %2092
      %2094 = vadd.xlane.f32.xlu0 %v1669
      %v2095 = vpop.xlane.xlu0 %2094
      %2096 = vadd.xlane.f32.xlu0 %v1670
      %v2097 = vpop.xlane.xlu0 %2096
      %2098 = vadd.xlane.f32.xlu0 %v1671
      %v2099 = vpop.xlane.xlu0 %2098
      %2100 = vadd.xlane.f32.xlu0 %v1672
      %v2101 = vpop.xlane.xlu0 %2100
      %2102 = vadd.xlane.f32.xlu0 %v1673
      %v2103 = vpop.xlane.xlu0 %2102
      %2104 = vadd.xlane.f32.xlu0 %v1674
      %v2105 = vpop.xlane.xlu0 %2104
      %2106 = vadd.xlane.f32.xlu0 %v1675
      %v2107 = vpop.xlane.xlu0 %2106
      %2108 = vadd.xlane.f32.xlu0 %v1676
      %v2109 = vpop.xlane.xlu0 %2108
      %2110 = vadd.xlane.f32.xlu0 %v1677
      %v2111 = vpop.xlane.xlu0 %2110
      %2112 = vadd.xlane.f32.xlu0 %v1678
      %v2113 = vpop.xlane.xlu0 %2112
      %2114 = vadd.xlane.f32.xlu0 %v1679
      %v2115 = vpop.xlane.xlu0 %2114
      %2116 = vadd.xlane.f32.xlu0 %v1680
      %v2117 = vpop.xlane.xlu0 %2116
      %2118 = vadd.xlane.f32.xlu0 %v1681
      %v2119 = vpop.xlane.xlu0 %2118
      %2120 = vadd.xlane.f32.xlu0 %v1682
      %v2121 = vpop.xlane.xlu0 %2120
      %2122 = vadd.xlane.f32.xlu0 %v1683
      %v2123 = vpop.xlane.xlu0 %2122
      %2124 = vadd.xlane.f32.xlu0 %v1684
      %v2125 = vpop.xlane.xlu0 %2124
      %2126 = vadd.xlane.f32.xlu0 %v1685
      %v2127 = vpop.xlane.xlu0 %2126
      %2128 = vadd.xlane.f32.xlu0 %v1686
      %v2129 = vpop.xlane.xlu0 %2128
      %2130 = vadd.xlane.f32.xlu0 %v1687
      %v2131 = vpop.xlane.xlu0 %2130
      %2132 = vadd.xlane.f32.xlu0 %v1688
      %v2133 = vpop.xlane.xlu0 %2132
      %2134 = vadd.xlane.f32.xlu0 %v1689
      %v2135 = vpop.xlane.xlu0 %2134
      %2136 = vadd.xlane.f32.xlu0 %v1690
      %v2137 = vpop.xlane.xlu0 %2136
      %2138 = vadd.xlane.f32.xlu0 %v1691
      %v2139 = vpop.xlane.xlu0 %2138
      %2140 = vadd.xlane.f32.xlu0 %v1692
      %v2141 = vpop.xlane.xlu0 %2140
      %2142 = vadd.xlane.f32.xlu0 %v1693
      %v2143 = vpop.xlane.xlu0 %2142
      %2144 = vadd.xlane.f32.xlu0 %v1694
      %v2145 = vpop.xlane.xlu0 %2144
      %2146 = vadd.xlane.f32.xlu0 %v1695
      %v2147 = vpop.xlane.xlu0 %2146
      %2148 = vadd.xlane.f32.xlu0 %v1696
      %v2149 = vpop.xlane.xlu0 %2148
      %2150 = vadd.xlane.f32.xlu0 %v1697
      %v2151 = vpop.xlane.xlu0 %2150
      %2152 = vadd.xlane.f32.xlu0 %v1698
      %v2153 = vpop.xlane.xlu0 %2152
      %2154 = vadd.xlane.f32.xlu0 %v1699
      %v2155 = vpop.xlane.xlu0 %2154
      %2156 = vadd.xlane.f32.xlu0 %v1700
      %v2157 = vpop.xlane.xlu0 %2156
      %2158 = vadd.xlane.f32.xlu0 %v1701
      %v2159 = vpop.xlane.xlu0 %2158
      %2160 = vadd.xlane.f32.xlu0 %v1702
      %v2161 = vpop.xlane.xlu0 %2160
      %2162 = vadd.xlane.f32.xlu0 %v1703
      %v2163 = vpop.xlane.xlu0 %2162
      %2164 = vadd.xlane.f32.xlu0 %v1704
      %v2165 = vpop.xlane.xlu0 %2164
      %2166 = vadd.xlane.f32.xlu0 %v1705
      %v2167 = vpop.xlane.xlu0 %2166
      %2168 = vadd.xlane.f32.xlu0 %v1706
      %v2169 = vpop.xlane.xlu0 %2168
      %2170 = vadd.xlane.f32.xlu0 %v1707
      %v2171 = vpop.xlane.xlu0 %2170
      %2172 = vadd.xlane.f32.xlu0 %v1708
      %v2173 = vpop.xlane.xlu0 %2172
      %2174 = vadd.xlane.f32.xlu0 %v1709
      %v2175 = vpop.xlane.xlu0 %2174
      %2176 = vadd.xlane.f32.xlu0 %v1710
      %v2177 = vpop.xlane.xlu0 %2176
      %2178 = vadd.xlane.f32.xlu0 %v1711
      %v2179 = vpop.xlane.xlu0 %2178
      %2180 = vadd.xlane.f32.xlu0 %v1712
      %v2181 = vpop.xlane.xlu0 %2180
      %2182 = vadd.xlane.f32.xlu0 %v1713
      %v2183 = vpop.xlane.xlu0 %2182
      %2184 = vadd.xlane.f32.xlu0 %v1714
      %v2185 = vpop.xlane.xlu0 %2184
      %2186 = vadd.xlane.f32.xlu0 %v1715
      %v2187 = vpop.xlane.xlu0 %2186
      %2188 = vadd.xlane.f32.xlu0 %v1716
      %v2189 = vpop.xlane.xlu0 %2188
      %2190 = vadd.xlane.f32.xlu0 %v1717
      %v2191 = vpop.xlane.xlu0 %2190
      %2192 = vadd.xlane.f32.xlu0 %v1718
      %v2193 = vpop.xlane.xlu0 %2192
      %2194 = vadd.xlane.f32.xlu0 %v1719
      %v2195 = vpop.xlane.xlu0 %2194
      %2196 = vadd.xlane.f32.xlu0 %v1720
      %v2197 = vpop.xlane.xlu0 %2196
      %2198 = vadd.xlane.f32.xlu0 %v1721
      %v2199 = vpop.xlane.xlu0 %2198
      %2200 = vadd.xlane.f32.xlu0 %v1722
      %v2201 = vpop.xlane.xlu0 %2200
      %2202 = vadd.xlane.f32.xlu0 %v1723
      %v2203 = vpop.xlane.xlu0 %2202
      %2204 = vadd.xlane.f32.xlu0 %v1724
      %v2205 = vpop.xlane.xlu0 %2204
      %2206 = vadd.xlane.f32.xlu0 %v1725
      %v2207 = vpop.xlane.xlu0 %2206
      %2208 = vadd.xlane.f32.xlu0 %v1726
      %v2209 = vpop.xlane.xlu0 %2208
      %2210 = vadd.xlane.f32.xlu0 %v1727
      %v2211 = vpop.xlane.xlu0 %2210
      %2212 = vadd.xlane.f32.xlu0 %v1728
      %v2213 = vpop.xlane.xlu0 %2212
      %2214 = vadd.xlane.f32.xlu0 %v1729
      %v2215 = vpop.xlane.xlu0 %2214
      %2216 = vadd.xlane.f32.xlu0 %v1730
      %v2217 = vpop.xlane.xlu0 %2216
      %2218 = vadd.xlane.f32.xlu0 %v1731
      %v2219 = vpop.xlane.xlu0 %2218
      %2220 = vadd.xlane.f32.xlu0 %v1732
      %v2221 = vpop.xlane.xlu0 %2220
      %2222 = vadd.xlane.f32.xlu0 %v1733
      %v2223 = vpop.xlane.xlu0 %2222
      %2224 = vadd.xlane.f32.xlu0 %v1734
      %v2225 = vpop.xlane.xlu0 %2224
      %2226 = vadd.xlane.f32.xlu0 %v1735
      %v2227 = vpop.xlane.xlu0 %2226
      %2228 = vadd.xlane.f32.xlu0 %v1736
      %v2229 = vpop.xlane.xlu0 %2228
      %2230 = vadd.xlane.f32.xlu0 %v1737
      %v2231 = vpop.xlane.xlu0 %2230
      %2232 = vadd.xlane.f32.xlu0 %v1738
      %v2233 = vpop.xlane.xlu0 %2232
      %2234 = vadd.xlane.f32.xlu0 %v1739
      %v2235 = vpop.xlane.xlu0 %2234
      %2236 = vadd.xlane.f32.xlu0 %v1740
      %v2237 = vpop.xlane.xlu0 %2236
      %2238 = vadd.xlane.f32.xlu0 %v1741
      %v2239 = vpop.xlane.xlu0 %2238
      %2240 = vadd.xlane.f32.xlu0 %v1742
      %v2241 = vpop.xlane.xlu0 %2240
      %2242 = vadd.xlane.f32.xlu0 %v1743
      %v2243 = vpop.xlane.xlu0 %2242
      %2244 = vadd.xlane.f32.xlu0 %v1744
      %v2245 = vpop.xlane.xlu0 %2244
      %2246 = vadd.xlane.f32.xlu0 %v1745
      %v2247 = vpop.xlane.xlu0 %2246
      %2248 = vadd.xlane.f32.xlu0 %v1746
      %v2249 = vpop.xlane.xlu0 %2248
      %2250 = vadd.xlane.f32.xlu0 %v1747
      %v2251 = vpop.xlane.xlu0 %2250
      %2252 = vadd.xlane.f32.xlu0 %v1748
      %v2253 = vpop.xlane.xlu0 %2252
      %2254 = vadd.xlane.f32.xlu0 %v1749
      %v2255 = vpop.xlane.xlu0 %2254
      %2256 = vadd.xlane.f32.xlu0 %v1750
      %v2257 = vpop.xlane.xlu0 %2256
      %2258 = vadd.xlane.f32.xlu0 %v1751
      %v2259 = vpop.xlane.xlu0 %2258
      %2260 = vadd.xlane.f32.xlu0 %v1752
      %v2261 = vpop.xlane.xlu0 %2260
      %2262 = vadd.xlane.f32.xlu0 %v1753
      %v2263 = vpop.xlane.xlu0 %2262
      %2264 = vadd.xlane.f32.xlu0 %v1754
      %v2265 = vpop.xlane.xlu0 %2264
      %2266 = vadd.xlane.f32.xlu0 %v1755
      %v2267 = vpop.xlane.xlu0 %2266
      %2268 = vadd.xlane.f32.xlu0 %v1756
      %v2269 = vpop.xlane.xlu0 %2268
      %2270 = vadd.xlane.f32.xlu0 %v1757
      %v2271 = vpop.xlane.xlu0 %2270
      %2272 = vadd.xlane.f32.xlu0 %v1758
      %v2273 = vpop.xlane.xlu0 %2272
      %2274 = vadd.xlane.f32.xlu0 %v1759
      %v2275 = vpop.xlane.xlu0 %2274
      %2276 = vadd.xlane.f32.xlu0 %v1760
      %v2277 = vpop.xlane.xlu0 %2276
      %2278 = vadd.xlane.f32.xlu0 %v1761
      %v2279 = vpop.xlane.xlu0 %2278
      %2280 = vadd.xlane.f32.xlu0 %v1762
      %v2281 = vpop.xlane.xlu0 %2280
      %2282 = vadd.xlane.f32.xlu0 %v1763
      %v2283 = vpop.xlane.xlu0 %2282
      %2284 = vadd.xlane.f32.xlu0 %v1764
      %v2285 = vpop.xlane.xlu0 %2284
      %2286 = vadd.xlane.f32.xlu0 %v1765
      %v2287 = vpop.xlane.xlu0 %2286
      %2288 = vadd.xlane.f32.xlu0 %v1766
      %v2289 = vpop.xlane.xlu0 %2288
      %2290 = vadd.xlane.f32.xlu0 %v1767
      %v2291 = vpop.xlane.xlu0 %2290
      %2292 = vadd.xlane.f32.xlu0 %v1768
      %v2293 = vpop.xlane.xlu0 %2292
      %2294 = vadd.xlane.f32.xlu0 %v1769
      %v2295 = vpop.xlane.xlu0 %2294
      %2296 = vadd.xlane.f32.xlu0 %v1770
      %v2297 = vpop.xlane.xlu0 %2296
      %2298 = vadd.xlane.f32.xlu0 %v1771
      %v2299 = vpop.xlane.xlu0 %2298
      %2300 = vadd.xlane.f32.xlu0 %v1772
      %v2301 = vpop.xlane.xlu0 %2300
      %2302 = vadd.xlane.f32.xlu0 %v1773
      %v2303 = vpop.xlane.xlu0 %2302
      %2304 = vadd.xlane.f32.xlu0 %v1774
      %v2305 = vpop.xlane.xlu0 %2304
      %2306 = vadd.xlane.f32.xlu0 %v1775
      %v2307 = vpop.xlane.xlu0 %2306
      %2308 = vadd.xlane.f32.xlu0 %v1776
      %v2309 = vpop.xlane.xlu0 %2308
      %2310 = vadd.xlane.f32.xlu0 %v1777
      %v2311 = vpop.xlane.xlu0 %2310
      %2312 = vadd.xlane.f32.xlu0 %v1778
      %v2313 = vpop.xlane.xlu0 %2312
      %2314 = vadd.xlane.f32.xlu0 %v1779
      %v2315 = vpop.xlane.xlu0 %2314
      %2316 = vadd.xlane.f32.xlu0 %v1780
      %v2317 = vpop.xlane.xlu0 %2316
      %2318 = vadd.xlane.f32.xlu0 %v1781
      %v2319 = vpop.xlane.xlu0 %2318
      %2320 = vadd.xlane.f32.xlu0 %v1782
      %v2321 = vpop.xlane.xlu0 %2320
      %2322 = vadd.xlane.f32.xlu0 %v1783
      %v2323 = vpop.xlane.xlu0 %2322
      %2324 = vadd.xlane.f32.xlu0 %v1784
      %v2325 = vpop.xlane.xlu0 %2324
      %2326 = vadd.xlane.f32.xlu0 %v1785
      %v2327 = vpop.xlane.xlu0 %2326
      %2328 = vadd.xlane.f32.xlu0 %v1786
      %v2329 = vpop.xlane.xlu0 %2328
      %2330 = vadd.xlane.f32.xlu0 %v1787
      %v2331 = vpop.xlane.xlu0 %2330
      %2332 = vadd.xlane.f32.xlu0 %v1788
      %v2333 = vpop.xlane.xlu0 %2332
      %2334 = vadd.xlane.f32.xlu0 %v1789
      %v2335 = vpop.xlane.xlu0 %2334
      %2336 = vadd.xlane.f32.xlu0 %v1790
      %v2337 = vpop.xlane.xlu0 %2336
      %2338 = vadd.xlane.f32.xlu0 %v1791
      %v2339 = vpop.xlane.xlu0 %2338
      %2340 = vadd.xlane.f32.xlu0 %v1792
      %v2341 = vpop.xlane.xlu0 %2340
      %2342 = vadd.xlane.f32.xlu0 %v1793
      %v2343 = vpop.xlane.xlu0 %2342
      %2344 = vadd.xlane.f32.xlu0 %v1794
      %v2345 = vpop.xlane.xlu0 %2344
      %2346 = vadd.xlane.f32.xlu0 %v1795
      %v2347 = vpop.xlane.xlu0 %2346
      %2348 = vadd.xlane.f32.xlu0 %v1796
      %v2349 = vpop.xlane.xlu0 %2348
      %2350 = vadd.xlane.f32.xlu0 %v1797
      %v2351 = vpop.xlane.xlu0 %2350
      %2352 = vadd.xlane.f32.xlu0 %v1798
      %v2353 = vpop.xlane.xlu0 %2352
      %2354 = vadd.xlane.f32.xlu0 %v1799
      %v2355 = vpop.xlane.xlu0 %2354
      %2356 = vadd.xlane.f32.xlu0 %v1800
      %v2357 = vpop.xlane.xlu0 %2356
      %2358 = vadd.xlane.f32.xlu0 %v1801
      %v2359 = vpop.xlane.xlu0 %2358
      %2360 = vadd.xlane.f32.xlu0 %v1802
      %v2361 = vpop.xlane.xlu0 %2360
      %2362 = vadd.xlane.f32.xlu0 %v1803
      %v2363 = vpop.xlane.xlu0 %2362
      %2364 = vadd.xlane.f32.xlu0 %v1804
      %v2365 = vpop.xlane.xlu0 %2364
      %2366 = vadd.xlane.f32.xlu0 %v1805
      %v2367 = vpop.xlane.xlu0 %2366
      %2368 = vadd.xlane.f32.xlu0 %v1806
      %v2369 = vpop.xlane.xlu0 %2368
      %2370 = vadd.xlane.f32.xlu0 %v1807
      %v2371 = vpop.xlane.xlu0 %2370
      %2372 = vadd.xlane.f32.xlu0 %v1808
      %v2373 = vpop.xlane.xlu0 %2372
      %2374 = vadd.xlane.f32.xlu0 %v1809
      %v2375 = vpop.xlane.xlu0 %2374
      %2376 = vadd.xlane.f32.xlu0 %v1810
      %v2377 = vpop.xlane.xlu0 %2376
      %2378 = vadd.xlane.f32.xlu0 %v1811
      %v2379 = vpop.xlane.xlu0 %2378
      %2380 = vadd.xlane.f32.xlu0 %v1812
      %v2381 = vpop.xlane.xlu0 %2380
      %2382 = vadd.xlane.f32.xlu0 %v1813
      %v2383 = vpop.xlane.xlu0 %2382
      %2384 = vadd.xlane.f32.xlu0 %v1814
      %v2385 = vpop.xlane.xlu0 %2384
      %2386 = vadd.xlane.f32.xlu0 %v1815
      %v2387 = vpop.xlane.xlu0 %2386
      %2388 = vadd.xlane.f32.xlu0 %v1816
      %v2389 = vpop.xlane.xlu0 %2388
      %2390 = vadd.xlane.f32.xlu0 %v1817
      %v2391 = vpop.xlane.xlu0 %2390
      %2392 = vadd.xlane.f32.xlu0 %v1818
      %v2393 = vpop.xlane.xlu0 %2392
      %2394 = vadd.xlane.f32.xlu0 %v1819
      %v2395 = vpop.xlane.xlu0 %2394
      %v2396 = vmul.f32 %v1821, 0.015625
      %v2397 = vmul.f32 %v1823, 0.015625
      %v2398 = vmul.f32 %v1825, 0.015625
      %v2399 = vmul.f32 %v1827, 0.015625
      %v2400 = vmul.f32 %v1829, 0.015625
      %v2401 = vmul.f32 %v1831, 0.015625
      %v2402 = vmul.f32 %v1833, 0.015625
      %v2403 = vmul.f32 %v1835, 0.015625
      %v2404 = vmul.f32 %v1837, 0.015625
      %v2405 = vmul.f32 %v1839, 0.015625
      %v2406 = vmul.f32 %v1841, 0.015625
      %v2407 = vmul.f32 %v1843, 0.015625
      %v2408 = vmul.f32 %v1845, 0.015625
      %v2409 = vmul.f32 %v1847, 0.015625
      %v2410 = vmul.f32 %v1849, 0.015625
      %v2411 = vmul.f32 %v1851, 0.015625
      %v2412 = vmul.f32 %v1853, 0.015625
      %v2413 = vmul.f32 %v1855, 0.015625
      %v2414 = vmul.f32 %v1857, 0.015625
      %v2415 = vmul.f32 %v1859, 0.015625
      %v2416 = vmul.f32 %v1861, 0.015625
      %v2417 = vmul.f32 %v1863, 0.015625
      %v2418 = vmul.f32 %v1865, 0.015625
      %v2419 = vmul.f32 %v1867, 0.015625
      %v2420 = vmul.f32 %v1869, 0.015625
      %v2421 = vmul.f32 %v1871, 0.015625
      %v2422 = vmul.f32 %v1873, 0.015625
      %v2423 = vmul.f32 %v1875, 0.015625
      %v2424 = vmul.f32 %v1877, 0.015625
      %v2425 = vmul.f32 %v1879, 0.015625
      %v2426 = vmul.f32 %v1881, 0.015625
      %v2427 = vmul.f32 %v1883, 0.015625
      %v2428 = vmul.f32 %v1885, 0.015625
      %v2429 = vmul.f32 %v1887, 0.015625
      %v2430 = vmul.f32 %v1889, 0.015625
      %v2431 = vmul.f32 %v1891, 0.015625
      %v2432 = vmul.f32 %v1893, 0.015625
      %v2433 = vmul.f32 %v1895, 0.015625
      %v2434 = vmul.f32 %v1897, 0.015625
      %v2435 = vmul.f32 %v1899, 0.015625
      %v2436 = vmul.f32 %v1901, 0.015625
      %v2437 = vmul.f32 %v1903, 0.015625
      %v2438 = vmul.f32 %v1905, 0.015625
      %v2439 = vmul.f32 %v1907, 0.015625
      %v2440 = vmul.f32 %v1909, 0.015625
      %v2441 = vmul.f32 %v1911, 0.015625
      %v2442 = vmul.f32 %v1913, 0.015625
      %v2443 = vmul.f32 %v1915, 0.015625
      %v2444 = vmul.f32 %v1917, 0.015625
      %v2445 = vmul.f32 %v1919, 0.015625
      %v2446 = vmul.f32 %v1921, 0.015625
      %v2447 = vmul.f32 %v1923, 0.015625
      %v2448 = vmul.f32 %v1925, 0.015625
      %v2449 = vmul.f32 %v1927, 0.015625
      %v2450 = vmul.f32 %v1929, 0.015625
      %v2451 = vmul.f32 %v1931, 0.015625
      %v2452 = vmul.f32 %v1933, 0.015625
      %v2453 = vmul.f32 %v1935, 0.015625
      %v2454 = vmul.f32 %v1937, 0.015625
      %v2455 = vmul.f32 %v1939, 0.015625
      %v2456 = vmul.f32 %v1941, 0.015625
      %v2457 = vmul.f32 %v1943, 0.015625
      %v2458 = vmul.f32 %v1945, 0.015625
      %v2459 = vmul.f32 %v1947, 0.015625
      %v2460 = vmul.f32 %v1949, 0.015625
      %v2461 = vmul.f32 %v1951, 0.015625
      %v2462 = vmul.f32 %v1953, 0.015625
      %v2463 = vmul.f32 %v1955, 0.015625
      %v2464 = vmul.f32 %v1957, 0.015625
      %v2465 = vmul.f32 %v1959, 0.015625
      %v2466 = vmul.f32 %v1961, 0.015625
      %v2467 = vmul.f32 %v1963, 0.015625
      %v2468 = vmul.f32 %v1965, 0.015625
      %v2469 = vmul.f32 %v1967, 0.015625
      %v2470 = vmul.f32 %v1969, 0.015625
      %v2471 = vmul.f32 %v1971, 0.015625
      %v2472 = vmul.f32 %v1973, 0.015625
      %v2473 = vmul.f32 %v1975, 0.015625
      %v2474 = vmul.f32 %v1977, 0.015625
      %v2475 = vmul.f32 %v1979, 0.015625
      %v2476 = vmul.f32 %v1981, 0.015625
      %v2477 = vmul.f32 %v1983, 0.015625
      %v2478 = vmul.f32 %v1985, 0.015625
      %v2479 = vmul.f32 %v1987, 0.015625
      %v2480 = vmul.f32 %v1989, 0.015625
      %v2481 = vmul.f32 %v1991, 0.015625
      %v2482 = vmul.f32 %v1993, 0.015625
      %v2483 = vmul.f32 %v1995, 0.015625
      %v2484 = vmul.f32 %v1997, 0.015625
      %v2485 = vmul.f32 %v1999, 0.015625
      %v2486 = vmul.f32 %v2001, 0.015625
      %v2487 = vmul.f32 %v2003, 0.015625
      %v2488 = vmul.f32 %v2005, 0.015625
      %v2489 = vmul.f32 %v2007, 0.015625
      %v2490 = vmul.f32 %v2009, 0.015625
      %v2491 = vmul.f32 %v2011, 0.015625
      %v2492 = vmul.f32 %v2013, 0.015625
      %v2493 = vmul.f32 %v2015, 0.015625
      %v2494 = vmul.f32 %v2017, 0.015625
      %v2495 = vmul.f32 %v2019, 0.015625
      %v2496 = vmul.f32 %v2021, 0.015625
      %v2497 = vmul.f32 %v2023, 0.015625
      %v2498 = vmul.f32 %v2025, 0.015625
      %v2499 = vmul.f32 %v2027, 0.015625
      %v2500 = vmul.f32 %v2029, 0.015625
      %v2501 = vmul.f32 %v2031, 0.015625
      %v2502 = vmul.f32 %v2033, 0.015625
      %v2503 = vmul.f32 %v2035, 0.015625
      %v2504 = vmul.f32 %v2037, 0.015625
      %v2505 = vmul.f32 %v2039, 0.015625
      %v2506 = vmul.f32 %v2041, 0.015625
      %v2507 = vmul.f32 %v2043, 0.015625
      %v2508 = vmul.f32 %v2045, 0.015625
      %v2509 = vmul.f32 %v2047, 0.015625
      %v2510 = vmul.f32 %v2049, 0.015625
      %v2511 = vmul.f32 %v2051, 0.015625
      %v2512 = vmul.f32 %v2053, 0.015625
      %v2513 = vmul.f32 %v2055, 0.015625
      %v2514 = vmul.f32 %v2057, 0.015625
      %v2515 = vmul.f32 %v2059, 0.015625
      %v2516 = vmul.f32 %v2061, 0.015625
      %v2517 = vmul.f32 %v2063, 0.015625
      %v2518 = vmul.f32 %v2065, 0.015625
      %v2519 = vmul.f32 %v2067, 0.015625
      %v2520 = vmul.f32 %v2069, 0.015625
      %v2521 = vmul.f32 %v2071, 0.015625
      %v2522 = vmul.f32 %v2073, 0.015625
      %v2523 = vmul.f32 %v2075, 0.015625
      %v2524 = vmul.f32 %v2077, 0.015625
      %v2525 = vmul.f32 %v2079, 0.015625
      %v2526 = vmul.f32 %v2081, 0.015625
      %v2527 = vmul.f32 %v2083, 0.015625
      %v2528 = vmul.f32 %v2085, 0.015625
      %v2529 = vmul.f32 %v2087, 0.015625
      %v2530 = vmul.f32 %v2089, 0.015625
      %v2531 = vmul.f32 %v2091, 0.015625
      %v2532 = vmul.f32 %v2093, 0.015625
      %v2533 = vmul.f32 %v2095, 0.015625
      %v2534 = vmul.f32 %v2097, 0.015625
      %v2535 = vmul.f32 %v2099, 0.015625
      %v2536 = vmul.f32 %v2101, 0.015625
      %v2537 = vmul.f32 %v2103, 0.015625
      %v2538 = vmul.f32 %v2105, 0.015625
      %v2539 = vmul.f32 %v2107, 0.015625
      %v2540 = vmul.f32 %v2109, 0.015625
      %v2541 = vmul.f32 %v2111, 0.015625
      %v2542 = vmul.f32 %v2113, 0.015625
      %v2543 = vmul.f32 %v2115, 0.015625
      %v2544 = vmul.f32 %v2117, 0.015625
      %v2545 = vmul.f32 %v2119, 0.015625
      %v2546 = vmul.f32 %v2121, 0.015625
      %v2547 = vmul.f32 %v2123, 0.015625
      %v2548 = vmul.f32 %v2125, 0.015625
      %v2549 = vmul.f32 %v2127, 0.015625
      %v2550 = vmul.f32 %v2129, 0.015625
      %v2551 = vmul.f32 %v2131, 0.015625
      %v2552 = vmul.f32 %v2133, 0.015625
      %v2553 = vmul.f32 %v2135, 0.015625
      %v2554 = vmul.f32 %v2137, 0.015625
      %v2555 = vmul.f32 %v2139, 0.015625
      %v2556 = vmul.f32 %v2141, 0.015625
      %v2557 = vmul.f32 %v2143, 0.015625
      %v2558 = vmul.f32 %v2145, 0.015625
      %v2559 = vmul.f32 %v2147, 0.015625
      %v2560 = vmul.f32 %v2149, 0.015625
      %v2561 = vmul.f32 %v2151, 0.015625
      %v2562 = vmul.f32 %v2153, 0.015625
      %v2563 = vmul.f32 %v2155, 0.015625
      %v2564 = vmul.f32 %v2157, 0.015625
      %v2565 = vmul.f32 %v2159, 0.015625
      %v2566 = vmul.f32 %v2161, 0.015625
      %v2567 = vmul.f32 %v2163, 0.015625
      %v2568 = vmul.f32 %v2165, 0.015625
      %v2569 = vmul.f32 %v2167, 0.015625
      %v2570 = vmul.f32 %v2169, 0.015625
      %v2571 = vmul.f32 %v2171, 0.015625
      %v2572 = vmul.f32 %v2173, 0.015625
      %v2573 = vmul.f32 %v2175, 0.015625
      %v2574 = vmul.f32 %v2177, 0.015625
      %v2575 = vmul.f32 %v2179, 0.015625
      %v2576 = vmul.f32 %v2181, 0.015625
      %v2577 = vmul.f32 %v2183, 0.015625
      %v2578 = vmul.f32 %v2185, 0.015625
      %v2579 = vmul.f32 %v2187, 0.015625
      %v2580 = vmul.f32 %v2189, 0.015625
      %v2581 = vmul.f32 %v2191, 0.015625
      %v2582 = vmul.f32 %v2193, 0.015625
      %v2583 = vmul.f32 %v2195, 0.015625
      %v2584 = vmul.f32 %v2197, 0.015625
      %v2585 = vmul.f32 %v2199, 0.015625
      %v2586 = vmul.f32 %v2201, 0.015625
      %v2587 = vmul.f32 %v2203, 0.015625
      %v2588 = vmul.f32 %v2205, 0.015625
      %v2589 = vmul.f32 %v2207, 0.015625
      %v2590 = vmul.f32 %v2209, 0.015625
      %v2591 = vmul.f32 %v2211, 0.015625
      %v2592 = vmul.f32 %v2213, 0.015625
      %v2593 = vmul.f32 %v2215, 0.015625
      %v2594 = vmul.f32 %v2217, 0.015625
      %v2595 = vmul.f32 %v2219, 0.015625
      %v2596 = vmul.f32 %v2221, 0.015625
      %v2597 = vmul.f32 %v2223, 0.015625
      %v2598 = vmul.f32 %v2225, 0.015625
      %v2599 = vmul.f32 %v2227, 0.015625
      %v2600 = vmul.f32 %v2229, 0.015625
      %v2601 = vmul.f32 %v2231, 0.015625
      %v2602 = vmul.f32 %v2233, 0.015625
      %v2603 = vmul.f32 %v2235, 0.015625
      %v2604 = vmul.f32 %v2237, 0.015625
      %v2605 = vmul.f32 %v2239, 0.015625
      %v2606 = vmul.f32 %v2241, 0.015625
      %v2607 = vmul.f32 %v2243, 0.015625
      %v2608 = vmul.f32 %v2245, 0.015625
      %v2609 = vmul.f32 %v2247, 0.015625
      %v2610 = vmul.f32 %v2249, 0.015625
      %v2611 = vmul.f32 %v2251, 0.015625
      %v2612 = vmul.f32 %v2253, 0.015625
      %v2613 = vmul.f32 %v2255, 0.015625
      %v2614 = vmul.f32 %v2257, 0.015625
      %v2615 = vmul.f32 %v2259, 0.015625
      %v2616 = vmul.f32 %v2261, 0.015625
      %v2617 = vmul.f32 %v2263, 0.015625
      %v2618 = vmul.f32 %v2265, 0.015625
      %v2619 = vmul.f32 %v2267, 0.015625
      %v2620 = vmul.f32 %v2269, 0.015625
      %v2621 = vmul.f32 %v2271, 0.015625
      %v2622 = vmul.f32 %v2273, 0.015625
      %v2623 = vmul.f32 %v2275, 0.015625
      %v2624 = vmul.f32 %v2277, 0.015625
      %v2625 = vmul.f32 %v2279, 0.015625
      %v2626 = vmul.f32 %v2281, 0.015625
      %v2627 = vmul.f32 %v2283, 0.015625
      %v2628 = vmul.f32 %v2285, 0.015625
      %v2629 = vmul.f32 %v2287, 0.015625
      %v2630 = vmul.f32 %v2289, 0.015625
      %v2631 = vmul.f32 %v2291, 0.015625
      %v2632 = vmul.f32 %v2293, 0.015625
      %v2633 = vmul.f32 %v2295, 0.015625
      %v2634 = vmul.f32 %v2297, 0.015625
      %v2635 = vmul.f32 %v2299, 0.015625
      %v2636 = vmul.f32 %v2301, 0.015625
      %v2637 = vmul.f32 %v2303, 0.015625
      %v2638 = vmul.f32 %v2305, 0.015625
      %v2639 = vmul.f32 %v2307, 0.015625
      %v2640 = vmul.f32 %v2309, 0.015625
      %v2641 = vmul.f32 %v2311, 0.015625
      %v2642 = vmul.f32 %v2313, 0.015625
      %v2643 = vmul.f32 %v2315, 0.015625
      %v2644 = vmul.f32 %v2317, 0.015625
      %v2645 = vmul.f32 %v2319, 0.015625
      %v2646 = vmul.f32 %v2321, 0.015625
      %v2647 = vmul.f32 %v2323, 0.015625
      %v2648 = vmul.f32 %v2325, 0.015625
      %v2649 = vmul.f32 %v2327, 0.015625
      %v2650 = vmul.f32 %v2329, 0.015625
      %v2651 = vmul.f32 %v2331, 0.015625
      %v2652 = vmul.f32 %v2333, 0.015625
      %v2653 = vmul.f32 %v2335, 0.015625
      %v2654 = vmul.f32 %v2337, 0.015625
      %v2655 = vmul.f32 %v2339, 0.015625
      %v2656 = vmul.f32 %v2341, 0.015625
      %v2657 = vmul.f32 %v2343, 0.015625
      %v2658 = vmul.f32 %v2345, 0.015625
      %v2659 = vmul.f32 %v2347, 0.015625
      %v2660 = vmul.f32 %v2349, 0.015625
      %v2661 = vmul.f32 %v2351, 0.015625
      %v2662 = vmul.f32 %v2353, 0.015625
      %v2663 = vmul.f32 %v2355, 0.015625
      %v2664 = vmul.f32 %v2357, 0.015625
      %v2665 = vmul.f32 %v2359, 0.015625
      %v2666 = vmul.f32 %v2361, 0.015625
      %v2667 = vmul.f32 %v2363, 0.015625
      %v2668 = vmul.f32 %v2365, 0.015625
      %v2669 = vmul.f32 %v2367, 0.015625
      %v2670 = vmul.f32 %v2369, 0.015625
      %v2671 = vmul.f32 %v2371, 0.015625
      %v2672 = vmul.f32 %v2373, 0.015625
      %v2673 = vmul.f32 %v2375, 0.015625
      %v2674 = vmul.f32 %v2377, 0.015625
      %v2675 = vmul.f32 %v2379, 0.015625
      %v2676 = vmul.f32 %v2381, 0.015625
      %v2677 = vmul.f32 %v2383, 0.015625
      %v2678 = vmul.f32 %v2385, 0.015625
      %v2679 = vmul.f32 %v2387, 0.015625
      %v2680 = vmul.f32 %v2389, 0.015625
      %v2681 = vmul.f32 %v2391, 0.015625
      %v2682 = vmul.f32 %v2393, 0.015625
      %v2683 = vmul.f32 %v2395, 0.015625
      %v2684 = vld [vmem:[#allocation6] sm:$0xff]
      %v2685 = vld [vmem:[#allocation6 + $0x8] sm:$0xff]
      %v2686 = vld [vmem:[#allocation6 + $0x10] sm:$0xff]
      %v2687 = vld [vmem:[#allocation6 + $0x18] sm:$0xff]
      %v2688 = vld [vmem:[#allocation6 + $0x20] sm:$0xff]
      %v2689 = vld [vmem:[#allocation6 + $0x28] sm:$0xff]
      %v2690 = vld [vmem:[#allocation6 + $0x30] sm:$0xff]
      %v2691 = vld [vmem:[#allocation6 + $0x38] sm:$0xff]
      %v2692 = vld [vmem:[#allocation6 + $0x40] sm:$0xff]
      %v2693 = vld [vmem:[#allocation6 + $0x48] sm:$0xff]
      %v2694 = vld [vmem:[#allocation6 + $0x50] sm:$0xff]
      %v2695 = vld [vmem:[#allocation6 + $0x58] sm:$0xff]
      %v2696 = vld [vmem:[#allocation6 + $0x60] sm:$0xff]
      %v2697 = vld [vmem:[#allocation6 + $0x68] sm:$0xff]
      %v2698 = vld [vmem:[#allocation6 + $0x70] sm:$0xff]
      %v2699 = vld [vmem:[#allocation6 + $0x78] sm:$0xff]
      %v2700 = vld [vmem:[#allocation6 + $0x80] sm:$0xff]
      %v2701 = vld [vmem:[#allocation6 + $0x88] sm:$0xff]
      %v2702 = vld [vmem:[#allocation6 + $0x90] sm:$0xff]
      %v2703 = vld [vmem:[#allocation6 + $0x98] sm:$0xff]
      %v2704 = vld [vmem:[#allocation6 + $0xa0] sm:$0xff]
      %v2705 = vld [vmem:[#allocation6 + $0xa8] sm:$0xff]
      %v2706 = vld [vmem:[#allocation6 + $0xb0] sm:$0xff]
      %v2707 = vld [vmem:[#allocation6 + $0xb8] sm:$0xff]
      %v2708 = vld [vmem:[#allocation6 + $0xc0] sm:$0xff]
      %v2709 = vld [vmem:[#allocation6 + $0xc8] sm:$0xff]
      %v2710 = vld [vmem:[#allocation6 + $0xd0] sm:$0xff]
      %v2711 = vld [vmem:[#allocation6 + $0xd8] sm:$0xff]
      %v2712 = vld [vmem:[#allocation6 + $0xe0] sm:$0xff]
      %v2713 = vld [vmem:[#allocation6 + $0xe8] sm:$0xff]
      %v2714 = vld [vmem:[#allocation6 + $0xf0] sm:$0xff]
      %v2715 = vld [vmem:[#allocation6 + $0xf8] sm:$0xff]
      %v2716 = vld [vmem:[#allocation6 + $0x100] sm:$0xff]
      %v2717 = vld [vmem:[#allocation6 + $0x108] sm:$0xff]
      %v2718 = vld [vmem:[#allocation6 + $0x110] sm:$0xff]
      %v2719 = vld [vmem:[#allocation6 + $0x118] sm:$0xff]
      %v2720 = vld [vmem:[#allocation6 + $0x120] sm:$0xff]
      %v2721 = vld [vmem:[#allocation6 + $0x128] sm:$0xff]
      %v2722 = vld [vmem:[#allocation6 + $0x130] sm:$0xff]
      %v2723 = vld [vmem:[#allocation6 + $0x138] sm:$0xff]
      %v2724 = vld [vmem:[#allocation6 + $0x140] sm:$0xff]
      %v2725 = vld [vmem:[#allocation6 + $0x148] sm:$0xff]
      %v2726 = vld [vmem:[#allocation6 + $0x150] sm:$0xff]
      %v2727 = vld [vmem:[#allocation6 + $0x158] sm:$0xff]
      %v2728 = vld [vmem:[#allocation6 + $0x160] sm:$0xff]
      %v2729 = vld [vmem:[#allocation6 + $0x168] sm:$0xff]
      %v2730 = vld [vmem:[#allocation6 + $0x170] sm:$0xff]
      %v2731 = vld [vmem:[#allocation6 + $0x178] sm:$0xff]
      %v2732 = vld [vmem:[#allocation6 + $0x180] sm:$0xff]
      %v2733 = vld [vmem:[#allocation6 + $0x188] sm:$0xff]
      %v2734 = vld [vmem:[#allocation6 + $0x190] sm:$0xff]
      %v2735 = vld [vmem:[#allocation6 + $0x198] sm:$0xff]
      %v2736 = vld [vmem:[#allocation6 + $0x1a0] sm:$0xff]
      %v2737 = vld [vmem:[#allocation6 + $0x1a8] sm:$0xff]
      %v2738 = vld [vmem:[#allocation6 + $0x1b0] sm:$0xff]
      %v2739 = vld [vmem:[#allocation6 + $0x1b8] sm:$0xff]
      %v2740 = vld [vmem:[#allocation6 + $0x1c0] sm:$0xff]
      %v2741 = vld [vmem:[#allocation6 + $0x1c8] sm:$0xff]
      %v2742 = vld [vmem:[#allocation6 + $0x1d0] sm:$0xff]
      %v2743 = vld [vmem:[#allocation6 + $0x1d8] sm:$0xff]
      %v2744 = vld [vmem:[#allocation6 + $0x1e0] sm:$0xff]
      %v2745 = vld [vmem:[#allocation6 + $0x1e8] sm:$0xff]
      %v2746 = vld [vmem:[#allocation6 + $0x1f0] sm:$0xff]
      %v2747 = vld [vmem:[#allocation6 + $0x1f8] sm:$0xff]
      %v2748 = vld [vmem:[#allocation6 + $0x200] sm:$0xff]
      %v2749 = vld [vmem:[#allocation6 + $0x208] sm:$0xff]
      %v2750 = vld [vmem:[#allocation6 + $0x210] sm:$0xff]
      %v2751 = vld [vmem:[#allocation6 + $0x218] sm:$0xff]
      %v2752 = vld [vmem:[#allocation6 + $0x220] sm:$0xff]
      %v2753 = vld [vmem:[#allocation6 + $0x228] sm:$0xff]
      %v2754 = vld [vmem:[#allocation6 + $0x230] sm:$0xff]
      %v2755 = vld [vmem:[#allocation6 + $0x238] sm:$0xff]
      %v2756 = vld [vmem:[#allocation8] sm:$0x3]
      %v2758 = vlaneseq
      %v2759 = vshrl.u32 %v2758, 7
      %v2760 = vsub.s32 0, %v2759
      %v2761 = vrot.slane %v2756, %v2760
      %v2762 = vlaneseq
      %v2763 = vshrl.u32 %v2762, 7
      %v2764 = vsub.s32 1, %v2763
      %v2765 = vrot.slane %v2756, %v2764
      %v3056 = vlaneseq
      %v3057 = vand.u32 %v3056, 127
      %v3058 = vlaneseq
      %v3059 = vshrl.u32 %v3058, 7
      %v3060 = vsub.s32 %v3057, %v3059
      %v3061 = vrot.slane %v2396, %v3060
      %v3062 = vadd.s32 %v3057, 4294967288
      %v3063 = vlaneseq
      %v3064 = vshrl.u32 %v3063, 7
      %v3065 = vsub.s32 %v3062, %v3064
      %v3066 = vrot.slane %v2397, %v3065
      %vm3067 = vcmask 130112
      %v3068 = vsel %vm3067, %v3066, %v3061
      %v3069 = vadd.s32 %v3057, 4294967280
      %v3070 = vlaneseq
      %v3071 = vshrl.u32 %v3070, 7
      %v3072 = vsub.s32 %v3069, %v3071
      %v3073 = vrot.slane %v2398, %v3072
      %vm3074 = vcmask 195712
      %v3075 = vsel %vm3074, %v3073, %v3068
      %v3076 = vadd.s32 %v3057, 4294967272
      %v3077 = vlaneseq
      %v3078 = vshrl.u32 %v3077, 7
      %v3079 = vsub.s32 %v3076, %v3078
      %v3080 = vrot.slane %v2399, %v3079
      %vm3081 = vcmask 261312
      %v3082 = vsel %vm3081, %v3080, %v3075
      %v3083 = vadd.s32 %v3057, 4294967264
      %v3084 = vlaneseq
      %v3085 = vshrl.u32 %v3084, 7
      %v3086 = vsub.s32 %v3083, %v3085
      %v3087 = vrot.slane %v2400, %v3086
      %vm3088 = vcmask 326912
      %v3089 = vsel %vm3088, %v3087, %v3082
      %v3090 = vadd.s32 %v3057, 4294967256
      %v3091 = vlaneseq
      %v3092 = vshrl.u32 %v3091, 7
      %v3093 = vsub.s32 %v3090, %v3092
      %v3094 = vrot.slane %v2401, %v3093
      %vm3095 = vcmask 392512
      %v3096 = vsel %vm3095, %v3094, %v3089
      %v3097 = vadd.s32 %v3057, 4294967248
      %v3098 = vlaneseq
      %v3099 = vshrl.u32 %v3098, 7
      %v3100 = vsub.s32 %v3097, %v3099
      %v3101 = vrot.slane %v2402, %v3100
      %vm3102 = vcmask 458112
      %v3103 = vsel %vm3102, %v3101, %v3096
      %v3104 = vadd.s32 %v3057, 4294967240
      %v3105 = vlaneseq
      %v3106 = vshrl.u32 %v3105, 7
      %v3107 = vsub.s32 %v3104, %v3106
      %v3108 = vrot.slane %v2403, %v3107
      %vm3109 = vcmask 523712
      %v3110 = vsel %vm3109, %v3108, %v3103
      %v3111 = vadd.s32 %v3057, 4294967232
      %v3112 = vlaneseq
      %v3113 = vshrl.u32 %v3112, 7
      %v3114 = vsub.s32 %v3111, %v3113
      %v3115 = vrot.slane %v2404, %v3114
      %vm3116 = vcmask 589312
      %v3117 = vsel %vm3116, %v3115, %v3110
      %v3118 = vadd.s32 %v3057, 4294967224
      %v3119 = vlaneseq
      %v3120 = vshrl.u32 %v3119, 7
      %v3121 = vsub.s32 %v3118, %v3120
      %v3122 = vrot.slane %v2405, %v3121
      %vm3123 = vcmask 654912
      %v3124 = vsel %vm3123, %v3122, %v3117
      %v3125 = vadd.s32 %v3057, 4294967216
      %v3126 = vlaneseq
      %v3127 = vshrl.u32 %v3126, 7
      %v3128 = vsub.s32 %v3125, %v3127
      %v3129 = vrot.slane %v2406, %v3128
      %vm3130 = vcmask 720512
      %v3131 = vsel %vm3130, %v3129, %v3124
      %v3132 = vadd.s32 %v3057, 4294967208
      %v3133 = vlaneseq
      %v3134 = vshrl.u32 %v3133, 7
      %v3135 = vsub.s32 %v3132, %v3134
      %v3136 = vrot.slane %v2407, %v3135
      %vm3137 = vcmask 786112
      %v3138 = vsel %vm3137, %v3136, %v3131
      %v3139 = vadd.s32 %v3057, 4294967200
      %v3140 = vlaneseq
      %v3141 = vshrl.u32 %v3140, 7
      %v3142 = vsub.s32 %v3139, %v3141
      %v3143 = vrot.slane %v2408, %v3142
      %vm3144 = vcmask 851712
      %v3145 = vsel %vm3144, %v3143, %v3138
      %v3146 = vadd.s32 %v3057, 4294967192
      %v3147 = vlaneseq
      %v3148 = vshrl.u32 %v3147, 7
      %v3149 = vsub.s32 %v3146, %v3148
      %v3150 = vrot.slane %v2409, %v3149
      %vm3151 = vcmask 917312
      %v3152 = vsel %vm3151, %v3150, %v3145
      %v3153 = vadd.s32 %v3057, 4294967184
      %v3154 = vlaneseq
      %v3155 = vshrl.u32 %v3154, 7
      %v3156 = vsub.s32 %v3153, %v3155
      %v3157 = vrot.slane %v2410, %v3156
      %vm3158 = vcmask 982912
      %v3159 = vsel %vm3158, %v3157, %v3152
      %v3160 = vadd.s32 %v3057, 4294967176
      %v3161 = vlaneseq
      %v3162 = vshrl.u32 %v3161, 7
      %v3163 = vsub.s32 %v3160, %v3162
      %v3164 = vrot.slane %v2411, %v3163
      %vm3165 = vcmask 1048512
      %v3166 = vsel %vm3165, %v3164, %v3159
      %v3167 = vlaneseq
      %v3168 = vshrl.u32 %v3167, 7
      %v3169 = vsub.s32 %v3057, %v3168
      %v3170 = vrot.slane %v2412, %v3169
      %v3171 = vlaneseq
      %v3172 = vshrl.u32 %v3171, 7
      %v3173 = vsub.s32 %v3062, %v3172
      %v3174 = vrot.slane %v2413, %v3173
      %v3175 = vsel %vm3067, %v3174, %v3170
      %v3176 = vlaneseq
      %v3177 = vshrl.u32 %v3176, 7
      %v3178 = vsub.s32 %v3069, %v3177
      %v3179 = vrot.slane %v2414, %v3178
      %v3180 = vsel %vm3074, %v3179, %v3175
      %v3181 = vlaneseq
      %v3182 = vshrl.u32 %v3181, 7
      %v3183 = vsub.s32 %v3076, %v3182
      %v3184 = vrot.slane %v2415, %v3183
      %v3185 = vsel %vm3081, %v3184, %v3180
      %v3186 = vlaneseq
      %v3187 = vshrl.u32 %v3186, 7
      %v3188 = vsub.s32 %v3083, %v3187
      %v3189 = vrot.slane %v2416, %v3188
      %v3190 = vsel %vm3088, %v3189, %v3185
      %v3191 = vlaneseq
      %v3192 = vshrl.u32 %v3191, 7
      %v3193 = vsub.s32 %v3090, %v3192
      %v3194 = vrot.slane %v2417, %v3193
      %v3195 = vsel %vm3095, %v3194, %v3190
      %v3196 = vlaneseq
      %v3197 = vshrl.u32 %v3196, 7
      %v3198 = vsub.s32 %v3097, %v3197
      %v3199 = vrot.slane %v2418, %v3198
      %v3200 = vsel %vm3102, %v3199, %v3195
      %v3201 = vlaneseq
      %v3202 = vshrl.u32 %v3201, 7
      %v3203 = vsub.s32 %v3104, %v3202
      %v3204 = vrot.slane %v2419, %v3203
      %v3205 = vsel %vm3109, %v3204, %v3200
      %v3206 = vlaneseq
      %v3207 = vshrl.u32 %v3206, 7
      %v3208 = vsub.s32 %v3111, %v3207
      %v3209 = vrot.slane %v2420, %v3208
      %v3210 = vsel %vm3116, %v3209, %v3205
      %v3211 = vlaneseq
      %v3212 = vshrl.u32 %v3211, 7
      %v3213 = vsub.s32 %v3118, %v3212
      %v3214 = vrot.slane %v2421, %v3213
      %v3215 = vsel %vm3123, %v3214, %v3210
      %v3216 = vlaneseq
      %v3217 = vshrl.u32 %v3216, 7
      %v3218 = vsub.s32 %v3125, %v3217
      %v3219 = vrot.slane %v2422, %v3218
      %v3220 = vsel %vm3130, %v3219, %v3215
      %v3221 = vlaneseq
      %v3222 = vshrl.u32 %v3221, 7
      %v3223 = vsub.s32 %v3132, %v3222
      %v3224 = vrot.slane %v2423, %v3223
      %v3225 = vsel %vm3137, %v3224, %v3220
      %v3226 = vlaneseq
      %v3227 = vshrl.u32 %v3226, 7
      %v3228 = vsub.s32 %v3139, %v3227
      %v3229 = vrot.slane %v2424, %v3228
      %v3230 = vsel %vm3144, %v3229, %v3225
      %v3231 = vlaneseq
      %v3232 = vshrl.u32 %v3231, 7
      %v3233 = vsub.s32 %v3146, %v3232
      %v3234 = vrot.slane %v2425, %v3233
      %v3235 = vsel %vm3151, %v3234, %v3230
      %v3236 = vlaneseq
      %v3237 = vshrl.u32 %v3236, 7
      %v3238 = vsub.s32 %v3153, %v3237
      %v3239 = vrot.slane %v2426, %v3238
      %v3240 = vsel %vm3158, %v3239, %v3235
      %v3241 = vlaneseq
      %v3242 = vshrl.u32 %v3241, 7
      %v3243 = vsub.s32 %v3160, %v3242
      %v3244 = vrot.slane %v2427, %v3243
      %v3245 = vsel %vm3165, %v3244, %v3240
      %v3246 = vlaneseq
      %v3247 = vshrl.u32 %v3246, 7
      %v3248 = vsub.s32 %v3057, %v3247
      %v3249 = vrot.slane %v2428, %v3248
      %v3250 = vlaneseq
      %v3251 = vshrl.u32 %v3250, 7
      %v3252 = vsub.s32 %v3062, %v3251
      %v3253 = vrot.slane %v2429, %v3252
      %v3254 = vsel %vm3067, %v3253, %v3249
      %v3255 = vlaneseq
      %v3256 = vshrl.u32 %v3255, 7
      %v3257 = vsub.s32 %v3069, %v3256
      %v3258 = vrot.slane %v2430, %v3257
      %v3259 = vsel %vm3074, %v3258, %v3254
      %v3260 = vlaneseq
      %v3261 = vshrl.u32 %v3260, 7
      %v3262 = vsub.s32 %v3076, %v3261
      %v3263 = vrot.slane %v2431, %v3262
      %v3264 = vsel %vm3081, %v3263, %v3259
      %v3265 = vlaneseq
      %v3266 = vshrl.u32 %v3265, 7
      %v3267 = vsub.s32 %v3057, %v3266
      %v3268 = vrot.slane %v2432, %v3267
      %v3269 = vlaneseq
      %v3270 = vshrl.u32 %v3269, 7
      %v3271 = vsub.s32 %v3062, %v3270
      %v3272 = vrot.slane %v2433, %v3271
      %v3273 = vsel %vm3067, %v3272, %v3268
      %v3274 = vlaneseq
      %v3275 = vshrl.u32 %v3274, 7
      %v3276 = vsub.s32 %v3069, %v3275
      %v3277 = vrot.slane %v2434, %v3276
      %v3278 = vsel %vm3074, %v3277, %v3273
      %v3279 = vlaneseq
      %v3280 = vshrl.u32 %v3279, 7
      %v3281 = vsub.s32 %v3076, %v3280
      %v3282 = vrot.slane %v2435, %v3281
      %v3283 = vsel %vm3081, %v3282, %v3278
      %v3284 = vlaneseq
      %v3285 = vshrl.u32 %v3284, 7
      %v3286 = vsub.s32 %v3083, %v3285
      %v3287 = vrot.slane %v2436, %v3286
      %v3288 = vsel %vm3088, %v3287, %v3283
      %v3289 = vlaneseq
      %v3290 = vshrl.u32 %v3289, 7
      %v3291 = vsub.s32 %v3090, %v3290
      %v3292 = vrot.slane %v2437, %v3291
      %v3293 = vsel %vm3095, %v3292, %v3288
      %v3294 = vlaneseq
      %v3295 = vshrl.u32 %v3294, 7
      %v3296 = vsub.s32 %v3097, %v3295
      %v3297 = vrot.slane %v2438, %v3296
      %v3298 = vsel %vm3102, %v3297, %v3293
      %v3299 = vlaneseq
      %v3300 = vshrl.u32 %v3299, 7
      %v3301 = vsub.s32 %v3104, %v3300
      %v3302 = vrot.slane %v2439, %v3301
      %v3303 = vsel %vm3109, %v3302, %v3298
      %v3304 = vlaneseq
      %v3305 = vshrl.u32 %v3304, 7
      %v3306 = vsub.s32 %v3111, %v3305
      %v3307 = vrot.slane %v2440, %v3306
      %v3308 = vsel %vm3116, %v3307, %v3303
      %v3309 = vlaneseq
      %v3310 = vshrl.u32 %v3309, 7
      %v3311 = vsub.s32 %v3118, %v3310
      %v3312 = vrot.slane %v2441, %v3311
      %v3313 = vsel %vm3123, %v3312, %v3308
      %v3314 = vlaneseq
      %v3315 = vshrl.u32 %v3314, 7
      %v3316 = vsub.s32 %v3125, %v3315
      %v3317 = vrot.slane %v2442, %v3316
      %v3318 = vsel %vm3130, %v3317, %v3313
      %v3319 = vlaneseq
      %v3320 = vshrl.u32 %v3319, 7
      %v3321 = vsub.s32 %v3132, %v3320
      %v3322 = vrot.slane %v2443, %v3321
      %v3323 = vsel %vm3137, %v3322, %v3318
      %v3324 = vlaneseq
      %v3325 = vshrl.u32 %v3324, 7
      %v3326 = vsub.s32 %v3139, %v3325
      %v3327 = vrot.slane %v2444, %v3326
      %v3328 = vsel %vm3144, %v3327, %v3323
      %v3329 = vlaneseq
      %v3330 = vshrl.u32 %v3329, 7
      %v3331 = vsub.s32 %v3146, %v3330
      %v3332 = vrot.slane %v2445, %v3331
      %v3333 = vsel %vm3151, %v3332, %v3328
      %v3334 = vlaneseq
      %v3335 = vshrl.u32 %v3334, 7
      %v3336 = vsub.s32 %v3153, %v3335
      %v3337 = vrot.slane %v2446, %v3336
      %v3338 = vsel %vm3158, %v3337, %v3333
      %v3339 = vlaneseq
      %v3340 = vshrl.u32 %v3339, 7
      %v3341 = vsub.s32 %v3160, %v3340
      %v3342 = vrot.slane %v2447, %v3341
      %v3343 = vsel %vm3165, %v3342, %v3338
      %v3344 = vlaneseq
      %v3345 = vshrl.u32 %v3344, 7
      %v3346 = vsub.s32 %v3057, %v3345
      %v3347 = vrot.slane %v2448, %v3346
      %v3348 = vlaneseq
      %v3349 = vshrl.u32 %v3348, 7
      %v3350 = vsub.s32 %v3062, %v3349
      %v3351 = vrot.slane %v2449, %v3350
      %v3352 = vsel %vm3067, %v3351, %v3347
      %v3353 = vlaneseq
      %v3354 = vshrl.u32 %v3353, 7
      %v3355 = vsub.s32 %v3069, %v3354
      %v3356 = vrot.slane %v2450, %v3355
      %v3357 = vsel %vm3074, %v3356, %v3352
      %v3358 = vlaneseq
      %v3359 = vshrl.u32 %v3358, 7
      %v3360 = vsub.s32 %v3076, %v3359
      %v3361 = vrot.slane %v2451, %v3360
      %v3362 = vsel %vm3081, %v3361, %v3357
      %v3363 = vlaneseq
      %v3364 = vshrl.u32 %v3363, 7
      %v3365 = vsub.s32 %v3083, %v3364
      %v3366 = vrot.slane %v2452, %v3365
      %v3367 = vsel %vm3088, %v3366, %v3362
      %v3368 = vlaneseq
      %v3369 = vshrl.u32 %v3368, 7
      %v3370 = vsub.s32 %v3090, %v3369
      %v3371 = vrot.slane %v2453, %v3370
      %v3372 = vsel %vm3095, %v3371, %v3367
      %v3373 = vlaneseq
      %v3374 = vshrl.u32 %v3373, 7
      %v3375 = vsub.s32 %v3097, %v3374
      %v3376 = vrot.slane %v2454, %v3375
      %v3377 = vsel %vm3102, %v3376, %v3372
      %v3378 = vlaneseq
      %v3379 = vshrl.u32 %v3378, 7
      %v3380 = vsub.s32 %v3104, %v3379
      %v3381 = vrot.slane %v2455, %v3380
      %v3382 = vsel %vm3109, %v3381, %v3377
      %v3383 = vlaneseq
      %v3384 = vshrl.u32 %v3383, 7
      %v3385 = vsub.s32 %v3111, %v3384
      %v3386 = vrot.slane %v2456, %v3385
      %v3387 = vsel %vm3116, %v3386, %v3382
      %v3388 = vlaneseq
      %v3389 = vshrl.u32 %v3388, 7
      %v3390 = vsub.s32 %v3118, %v3389
      %v3391 = vrot.slane %v2457, %v3390
      %v3392 = vsel %vm3123, %v3391, %v3387
      %v3393 = vlaneseq
      %v3394 = vshrl.u32 %v3393, 7
      %v3395 = vsub.s32 %v3125, %v3394
      %v3396 = vrot.slane %v2458, %v3395
      %v3397 = vsel %vm3130, %v3396, %v3392
      %v3398 = vlaneseq
      %v3399 = vshrl.u32 %v3398, 7
      %v3400 = vsub.s32 %v3132, %v3399
      %v3401 = vrot.slane %v2459, %v3400
      %v3402 = vsel %vm3137, %v3401, %v3397
      %v3403 = vlaneseq
      %v3404 = vshrl.u32 %v3403, 7
      %v3405 = vsub.s32 %v3139, %v3404
      %v3406 = vrot.slane %v2460, %v3405
      %v3407 = vsel %vm3144, %v3406, %v3402
      %v3408 = vlaneseq
      %v3409 = vshrl.u32 %v3408, 7
      %v3410 = vsub.s32 %v3146, %v3409
      %v3411 = vrot.slane %v2461, %v3410
      %v3412 = vsel %vm3151, %v3411, %v3407
      %v3413 = vlaneseq
      %v3414 = vshrl.u32 %v3413, 7
      %v3415 = vsub.s32 %v3153, %v3414
      %v3416 = vrot.slane %v2462, %v3415
      %v3417 = vsel %vm3158, %v3416, %v3412
      %v3418 = vlaneseq
      %v3419 = vshrl.u32 %v3418, 7
      %v3420 = vsub.s32 %v3160, %v3419
      %v3421 = vrot.slane %v2463, %v3420
      %v3422 = vsel %vm3165, %v3421, %v3417
      %v3423 = vlaneseq
      %v3424 = vshrl.u32 %v3423, 7
      %v3425 = vsub.s32 %v3057, %v3424
      %v3426 = vrot.slane %v2464, %v3425
      %v3427 = vlaneseq
      %v3428 = vshrl.u32 %v3427, 7
      %v3429 = vsub.s32 %v3062, %v3428
      %v3430 = vrot.slane %v2465, %v3429
      %v3431 = vsel %vm3067, %v3430, %v3426
      %v3432 = vlaneseq
      %v3433 = vshrl.u32 %v3432, 7
      %v3434 = vsub.s32 %v3069, %v3433
      %v3435 = vrot.slane %v2466, %v3434
      %v3436 = vsel %vm3074, %v3435, %v3431
      %v3437 = vlaneseq
      %v3438 = vshrl.u32 %v3437, 7
      %v3439 = vsub.s32 %v3076, %v3438
      %v3440 = vrot.slane %v2467, %v3439
      %v3441 = vsel %vm3081, %v3440, %v3436
      %v3442 = vlaneseq
      %v3443 = vshrl.u32 %v3442, 7
      %v3444 = vsub.s32 %v3057, %v3443
      %v3445 = vrot.slane %v2468, %v3444
      %v3446 = vlaneseq
      %v3447 = vshrl.u32 %v3446, 7
      %v3448 = vsub.s32 %v3062, %v3447
      %v3449 = vrot.slane %v2469, %v3448
      %v3450 = vsel %vm3067, %v3449, %v3445
      %v3451 = vlaneseq
      %v3452 = vshrl.u32 %v3451, 7
      %v3453 = vsub.s32 %v3069, %v3452
      %v3454 = vrot.slane %v2470, %v3453
      %v3455 = vsel %vm3074, %v3454, %v3450
      %v3456 = vlaneseq
      %v3457 = vshrl.u32 %v3456, 7
      %v3458 = vsub.s32 %v3076, %v3457
      %v3459 = vrot.slane %v2471, %v3458
      %v3460 = vsel %vm3081, %v3459, %v3455
      %v3461 = vlaneseq
      %v3462 = vshrl.u32 %v3461, 7
      %v3463 = vsub.s32 %v3083, %v3462
      %v3464 = vrot.slane %v2472, %v3463
      %v3465 = vsel %vm3088, %v3464, %v3460
      %v3466 = vlaneseq
      %v3467 = vshrl.u32 %v3466, 7
      %v3468 = vsub.s32 %v3090, %v3467
      %v3469 = vrot.slane %v2473, %v3468
      %v3470 = vsel %vm3095, %v3469, %v3465
      %v3471 = vlaneseq
      %v3472 = vshrl.u32 %v3471, 7
      %v3473 = vsub.s32 %v3097, %v3472
      %v3474 = vrot.slane %v2474, %v3473
      %v3475 = vsel %vm3102, %v3474, %v3470
      %v3476 = vlaneseq
      %v3477 = vshrl.u32 %v3476, 7
      %v3478 = vsub.s32 %v3104, %v3477
      %v3479 = vrot.slane %v2475, %v3478
      %v3480 = vsel %vm3109, %v3479, %v3475
      %v3481 = vlaneseq
      %v3482 = vshrl.u32 %v3481, 7
      %v3483 = vsub.s32 %v3111, %v3482
      %v3484 = vrot.slane %v2476, %v3483
      %v3485 = vsel %vm3116, %v3484, %v3480
      %v3486 = vlaneseq
      %v3487 = vshrl.u32 %v3486, 7
      %v3488 = vsub.s32 %v3118, %v3487
      %v3489 = vrot.slane %v2477, %v3488
      %v3490 = vsel %vm3123, %v3489, %v3485
      %v3491 = vlaneseq
      %v3492 = vshrl.u32 %v3491, 7
      %v3493 = vsub.s32 %v3125, %v3492
      %v3494 = vrot.slane %v2478, %v3493
      %v3495 = vsel %vm3130, %v3494, %v3490
      %v3496 = vlaneseq
      %v3497 = vshrl.u32 %v3496, 7
      %v3498 = vsub.s32 %v3132, %v3497
      %v3499 = vrot.slane %v2479, %v3498
      %v3500 = vsel %vm3137, %v3499, %v3495
      %v3501 = vlaneseq
      %v3502 = vshrl.u32 %v3501, 7
      %v3503 = vsub.s32 %v3139, %v3502
      %v3504 = vrot.slane %v2480, %v3503
      %v3505 = vsel %vm3144, %v3504, %v3500
      %v3506 = vlaneseq
      %v3507 = vshrl.u32 %v3506, 7
      %v3508 = vsub.s32 %v3146, %v3507
      %v3509 = vrot.slane %v2481, %v3508
      %v3510 = vsel %vm3151, %v3509, %v3505
      %v3511 = vlaneseq
      %v3512 = vshrl.u32 %v3511, 7
      %v3513 = vsub.s32 %v3153, %v3512
      %v3514 = vrot.slane %v2482, %v3513
      %v3515 = vsel %vm3158, %v3514, %v3510
      %v3516 = vlaneseq
      %v3517 = vshrl.u32 %v3516, 7
      %v3518 = vsub.s32 %v3160, %v3517
      %v3519 = vrot.slane %v2483, %v3518
      %v3520 = vsel %vm3165, %v3519, %v3515
      %v3521 = vlaneseq
      %v3522 = vshrl.u32 %v3521, 7
      %v3523 = vsub.s32 %v3057, %v3522
      %v3524 = vrot.slane %v2484, %v3523
      %v3525 = vlaneseq
      %v3526 = vshrl.u32 %v3525, 7
      %v3527 = vsub.s32 %v3062, %v3526
      %v3528 = vrot.slane %v2485, %v3527
      %v3529 = vsel %vm3067, %v3528, %v3524
      %v3530 = vlaneseq
      %v3531 = vshrl.u32 %v3530, 7
      %v3532 = vsub.s32 %v3069, %v3531
      %v3533 = vrot.slane %v2486, %v3532
      %v3534 = vsel %vm3074, %v3533, %v3529
      %v3535 = vlaneseq
      %v3536 = vshrl.u32 %v3535, 7
      %v3537 = vsub.s32 %v3076, %v3536
      %v3538 = vrot.slane %v2487, %v3537
      %v3539 = vsel %vm3081, %v3538, %v3534
      %v3540 = vlaneseq
      %v3541 = vshrl.u32 %v3540, 7
      %v3542 = vsub.s32 %v3083, %v3541
      %v3543 = vrot.slane %v2488, %v3542
      %v3544 = vsel %vm3088, %v3543, %v3539
      %v3545 = vlaneseq
      %v3546 = vshrl.u32 %v3545, 7
      %v3547 = vsub.s32 %v3090, %v3546
      %v3548 = vrot.slane %v2489, %v3547
      %v3549 = vsel %vm3095, %v3548, %v3544
      %v3550 = vlaneseq
      %v3551 = vshrl.u32 %v3550, 7
      %v3552 = vsub.s32 %v3097, %v3551
      %v3553 = vrot.slane %v2490, %v3552
      %v3554 = vsel %vm3102, %v3553, %v3549
      %v3555 = vlaneseq
      %v3556 = vshrl.u32 %v3555, 7
      %v3557 = vsub.s32 %v3104, %v3556
      %v3558 = vrot.slane %v2491, %v3557
      %v3559 = vsel %vm3109, %v3558, %v3554
      %v3560 = vlaneseq
      %v3561 = vshrl.u32 %v3560, 7
      %v3562 = vsub.s32 %v3111, %v3561
      %v3563 = vrot.slane %v2492, %v3562
      %v3564 = vsel %vm3116, %v3563, %v3559
      %v3565 = vlaneseq
      %v3566 = vshrl.u32 %v3565, 7
      %v3567 = vsub.s32 %v3118, %v3566
      %v3568 = vrot.slane %v2493, %v3567
      %v3569 = vsel %vm3123, %v3568, %v3564
      %v3570 = vlaneseq
      %v3571 = vshrl.u32 %v3570, 7
      %v3572 = vsub.s32 %v3125, %v3571
      %v3573 = vrot.slane %v2494, %v3572
      %v3574 = vsel %vm3130, %v3573, %v3569
      %v3575 = vlaneseq
      %v3576 = vshrl.u32 %v3575, 7
      %v3577 = vsub.s32 %v3132, %v3576
      %v3578 = vrot.slane %v2495, %v3577
      %v3579 = vsel %vm3137, %v3578, %v3574
      %v3580 = vlaneseq
      %v3581 = vshrl.u32 %v3580, 7
      %v3582 = vsub.s32 %v3139, %v3581
      %v3583 = vrot.slane %v2496, %v3582
      %v3584 = vsel %vm3144, %v3583, %v3579
      %v3585 = vlaneseq
      %v3586 = vshrl.u32 %v3585, 7
      %v3587 = vsub.s32 %v3146, %v3586
      %v3588 = vrot.slane %v2497, %v3587
      %v3589 = vsel %vm3151, %v3588, %v3584
      %v3590 = vlaneseq
      %v3591 = vshrl.u32 %v3590, 7
      %v3592 = vsub.s32 %v3153, %v3591
      %v3593 = vrot.slane %v2498, %v3592
      %v3594 = vsel %vm3158, %v3593, %v3589
      %v3595 = vlaneseq
      %v3596 = vshrl.u32 %v3595, 7
      %v3597 = vsub.s32 %v3160, %v3596
      %v3598 = vrot.slane %v2499, %v3597
      %v3599 = vsel %vm3165, %v3598, %v3594
      %v3600 = vlaneseq
      %v3601 = vshrl.u32 %v3600, 7
      %v3602 = vsub.s32 %v3057, %v3601
      %v3603 = vrot.slane %v2500, %v3602
      %v3604 = vlaneseq
      %v3605 = vshrl.u32 %v3604, 7
      %v3606 = vsub.s32 %v3062, %v3605
      %v3607 = vrot.slane %v2501, %v3606
      %v3608 = vsel %vm3067, %v3607, %v3603
      %v3609 = vlaneseq
      %v3610 = vshrl.u32 %v3609, 7
      %v3611 = vsub.s32 %v3069, %v3610
      %v3612 = vrot.slane %v2502, %v3611
      %v3613 = vsel %vm3074, %v3612, %v3608
      %v3614 = vlaneseq
      %v3615 = vshrl.u32 %v3614, 7
      %v3616 = vsub.s32 %v3076, %v3615
      %v3617 = vrot.slane %v2503, %v3616
      %v3618 = vsel %vm3081, %v3617, %v3613
      %v3619 = vlaneseq
      %v3620 = vshrl.u32 %v3619, 7
      %v3621 = vsub.s32 %v3057, %v3620
      %v3622 = vrot.slane %v2504, %v3621
      %v3623 = vlaneseq
      %v3624 = vshrl.u32 %v3623, 7
      %v3625 = vsub.s32 %v3062, %v3624
      %v3626 = vrot.slane %v2505, %v3625
      %v3627 = vsel %vm3067, %v3626, %v3622
      %v3628 = vlaneseq
      %v3629 = vshrl.u32 %v3628, 7
      %v3630 = vsub.s32 %v3069, %v3629
      %v3631 = vrot.slane %v2506, %v3630
      %v3632 = vsel %vm3074, %v3631, %v3627
      %v3633 = vlaneseq
      %v3634 = vshrl.u32 %v3633, 7
      %v3635 = vsub.s32 %v3076, %v3634
      %v3636 = vrot.slane %v2507, %v3635
      %v3637 = vsel %vm3081, %v3636, %v3632
      %v3638 = vlaneseq
      %v3639 = vshrl.u32 %v3638, 7
      %v3640 = vsub.s32 %v3083, %v3639
      %v3641 = vrot.slane %v2508, %v3640
      %v3642 = vsel %vm3088, %v3641, %v3637
      %v3643 = vlaneseq
      %v3644 = vshrl.u32 %v3643, 7
      %v3645 = vsub.s32 %v3090, %v3644
      %v3646 = vrot.slane %v2509, %v3645
      %v3647 = vsel %vm3095, %v3646, %v3642
      %v3648 = vlaneseq
      %v3649 = vshrl.u32 %v3648, 7
      %v3650 = vsub.s32 %v3097, %v3649
      %v3651 = vrot.slane %v2510, %v3650
      %v3652 = vsel %vm3102, %v3651, %v3647
      %v3653 = vlaneseq
      %v3654 = vshrl.u32 %v3653, 7
      %v3655 = vsub.s32 %v3104, %v3654
      %v3656 = vrot.slane %v2511, %v3655
      %v3657 = vsel %vm3109, %v3656, %v3652
      %v3658 = vlaneseq
      %v3659 = vshrl.u32 %v3658, 7
      %v3660 = vsub.s32 %v3111, %v3659
      %v3661 = vrot.slane %v2512, %v3660
      %v3662 = vsel %vm3116, %v3661, %v3657
      %v3663 = vlaneseq
      %v3664 = vshrl.u32 %v3663, 7
      %v3665 = vsub.s32 %v3118, %v3664
      %v3666 = vrot.slane %v2513, %v3665
      %v3667 = vsel %vm3123, %v3666, %v3662
      %v3668 = vlaneseq
      %v3669 = vshrl.u32 %v3668, 7
      %v3670 = vsub.s32 %v3125, %v3669
      %v3671 = vrot.slane %v2514, %v3670
      %v3672 = vsel %vm3130, %v3671, %v3667
      %v3673 = vlaneseq
      %v3674 = vshrl.u32 %v3673, 7
      %v3675 = vsub.s32 %v3132, %v3674
      %v3676 = vrot.slane %v2515, %v3675
      %v3677 = vsel %vm3137, %v3676, %v3672
      %v3678 = vlaneseq
      %v3679 = vshrl.u32 %v3678, 7
      %v3680 = vsub.s32 %v3139, %v3679
      %v3681 = vrot.slane %v2516, %v3680
      %v3682 = vsel %vm3144, %v3681, %v3677
      %v3683 = vlaneseq
      %v3684 = vshrl.u32 %v3683, 7
      %v3685 = vsub.s32 %v3146, %v3684
      %v3686 = vrot.slane %v2517, %v3685
      %v3687 = vsel %vm3151, %v3686, %v3682
      %v3688 = vlaneseq
      %v3689 = vshrl.u32 %v3688, 7
      %v3690 = vsub.s32 %v3153, %v3689
      %v3691 = vrot.slane %v2518, %v3690
      %v3692 = vsel %vm3158, %v3691, %v3687
      %v3693 = vlaneseq
      %v3694 = vshrl.u32 %v3693, 7
      %v3695 = vsub.s32 %v3160, %v3694
      %v3696 = vrot.slane %v2519, %v3695
      %v3697 = vsel %vm3165, %v3696, %v3692
      %v3698 = vlaneseq
      %v3699 = vshrl.u32 %v3698, 7
      %v3700 = vsub.s32 %v3057, %v3699
      %v3701 = vrot.slane %v2520, %v3700
      %v3702 = vlaneseq
      %v3703 = vshrl.u32 %v3702, 7
      %v3704 = vsub.s32 %v3062, %v3703
      %v3705 = vrot.slane %v2521, %v3704
      %v3706 = vsel %vm3067, %v3705, %v3701
      %v3707 = vlaneseq
      %v3708 = vshrl.u32 %v3707, 7
      %v3709 = vsub.s32 %v3069, %v3708
      %v3710 = vrot.slane %v2522, %v3709
      %v3711 = vsel %vm3074, %v3710, %v3706
      %v3712 = vlaneseq
      %v3713 = vshrl.u32 %v3712, 7
      %v3714 = vsub.s32 %v3076, %v3713
      %v3715 = vrot.slane %v2523, %v3714
      %v3716 = vsel %vm3081, %v3715, %v3711
      %v3717 = vlaneseq
      %v3718 = vshrl.u32 %v3717, 7
      %v3719 = vsub.s32 %v3083, %v3718
      %v3720 = vrot.slane %v2524, %v3719
      %v3721 = vsel %vm3088, %v3720, %v3716
      %v3722 = vlaneseq
      %v3723 = vshrl.u32 %v3722, 7
      %v3724 = vsub.s32 %v3090, %v3723
      %v3725 = vrot.slane %v2525, %v3724
      %v3726 = vsel %vm3095, %v3725, %v3721
      %v3727 = vlaneseq
      %v3728 = vshrl.u32 %v3727, 7
      %v3729 = vsub.s32 %v3097, %v3728
      %v3730 = vrot.slane %v2526, %v3729
      %v3731 = vsel %vm3102, %v3730, %v3726
      %v3732 = vlaneseq
      %v3733 = vshrl.u32 %v3732, 7
      %v3734 = vsub.s32 %v3104, %v3733
      %v3735 = vrot.slane %v2527, %v3734
      %v3736 = vsel %vm3109, %v3735, %v3731
      %v3737 = vlaneseq
      %v3738 = vshrl.u32 %v3737, 7
      %v3739 = vsub.s32 %v3111, %v3738
      %v3740 = vrot.slane %v2528, %v3739
      %v3741 = vsel %vm3116, %v3740, %v3736
      %v3742 = vlaneseq
      %v3743 = vshrl.u32 %v3742, 7
      %v3744 = vsub.s32 %v3118, %v3743
      %v3745 = vrot.slane %v2529, %v3744
      %v3746 = vsel %vm3123, %v3745, %v3741
      %v3747 = vlaneseq
      %v3748 = vshrl.u32 %v3747, 7
      %v3749 = vsub.s32 %v3125, %v3748
      %v3750 = vrot.slane %v2530, %v3749
      %v3751 = vsel %vm3130, %v3750, %v3746
      %v3752 = vlaneseq
      %v3753 = vshrl.u32 %v3752, 7
      %v3754 = vsub.s32 %v3132, %v3753
      %v3755 = vrot.slane %v2531, %v3754
      %v3756 = vsel %vm3137, %v3755, %v3751
      %v3757 = vlaneseq
      %v3758 = vshrl.u32 %v3757, 7
      %v3759 = vsub.s32 %v3139, %v3758
      %v3760 = vrot.slane %v2532, %v3759
      %v3761 = vsel %vm3144, %v3760, %v3756
      %v3762 = vlaneseq
      %v3763 = vshrl.u32 %v3762, 7
      %v3764 = vsub.s32 %v3146, %v3763
      %v3765 = vrot.slane %v2533, %v3764
      %v3766 = vsel %vm3151, %v3765, %v3761
      %v3767 = vlaneseq
      %v3768 = vshrl.u32 %v3767, 7
      %v3769 = vsub.s32 %v3153, %v3768
      %v3770 = vrot.slane %v2534, %v3769
      %v3771 = vsel %vm3158, %v3770, %v3766
      %v3772 = vlaneseq
      %v3773 = vshrl.u32 %v3772, 7
      %v3774 = vsub.s32 %v3160, %v3773
      %v3775 = vrot.slane %v2535, %v3774
      %v3776 = vsel %vm3165, %v3775, %v3771
      %v3777 = vlaneseq
      %v3778 = vshrl.u32 %v3777, 7
      %v3779 = vsub.s32 %v3057, %v3778
      %v3780 = vrot.slane %v2536, %v3779
      %v3781 = vlaneseq
      %v3782 = vshrl.u32 %v3781, 7
      %v3783 = vsub.s32 %v3062, %v3782
      %v3784 = vrot.slane %v2537, %v3783
      %v3785 = vsel %vm3067, %v3784, %v3780
      %v3786 = vlaneseq
      %v3787 = vshrl.u32 %v3786, 7
      %v3788 = vsub.s32 %v3069, %v3787
      %v3789 = vrot.slane %v2538, %v3788
      %v3790 = vsel %vm3074, %v3789, %v3785
      %v3791 = vlaneseq
      %v3792 = vshrl.u32 %v3791, 7
      %v3793 = vsub.s32 %v3076, %v3792
      %v3794 = vrot.slane %v2539, %v3793
      %v3795 = vsel %vm3081, %v3794, %v3790
      %v3796 = vlaneseq
      %v3797 = vshrl.u32 %v3796, 7
      %v3798 = vsub.s32 %v3057, %v3797
      %v3799 = vrot.slane %v2540, %v3798
      %v3800 = vlaneseq
      %v3801 = vshrl.u32 %v3800, 7
      %v3802 = vsub.s32 %v3062, %v3801
      %v3803 = vrot.slane %v2541, %v3802
      %v3804 = vsel %vm3067, %v3803, %v3799
      %v3805 = vlaneseq
      %v3806 = vshrl.u32 %v3805, 7
      %v3807 = vsub.s32 %v3069, %v3806
      %v3808 = vrot.slane %v2542, %v3807
      %v3809 = vsel %vm3074, %v3808, %v3804
      %v3810 = vlaneseq
      %v3811 = vshrl.u32 %v3810, 7
      %v3812 = vsub.s32 %v3076, %v3811
      %v3813 = vrot.slane %v2543, %v3812
      %v3814 = vsel %vm3081, %v3813, %v3809
      %v3815 = vlaneseq
      %v3816 = vshrl.u32 %v3815, 7
      %v3817 = vsub.s32 %v3083, %v3816
      %v3818 = vrot.slane %v2544, %v3817
      %v3819 = vsel %vm3088, %v3818, %v3814
      %v3820 = vlaneseq
      %v3821 = vshrl.u32 %v3820, 7
      %v3822 = vsub.s32 %v3090, %v3821
      %v3823 = vrot.slane %v2545, %v3822
      %v3824 = vsel %vm3095, %v3823, %v3819
      %v3825 = vlaneseq
      %v3826 = vshrl.u32 %v3825, 7
      %v3827 = vsub.s32 %v3097, %v3826
      %v3828 = vrot.slane %v2546, %v3827
      %v3829 = vsel %vm3102, %v3828, %v3824
      %v3830 = vlaneseq
      %v3831 = vshrl.u32 %v3830, 7
      %v3832 = vsub.s32 %v3104, %v3831
      %v3833 = vrot.slane %v2547, %v3832
      %v3834 = vsel %vm3109, %v3833, %v3829
      %v3835 = vlaneseq
      %v3836 = vshrl.u32 %v3835, 7
      %v3837 = vsub.s32 %v3111, %v3836
      %v3838 = vrot.slane %v2548, %v3837
      %v3839 = vsel %vm3116, %v3838, %v3834
      %v3840 = vlaneseq
      %v3841 = vshrl.u32 %v3840, 7
      %v3842 = vsub.s32 %v3118, %v3841
      %v3843 = vrot.slane %v2549, %v3842
      %v3844 = vsel %vm3123, %v3843, %v3839
      %v3845 = vlaneseq
      %v3846 = vshrl.u32 %v3845, 7
      %v3847 = vsub.s32 %v3125, %v3846
      %v3848 = vrot.slane %v2550, %v3847
      %v3849 = vsel %vm3130, %v3848, %v3844
      %v3850 = vlaneseq
      %v3851 = vshrl.u32 %v3850, 7
      %v3852 = vsub.s32 %v3132, %v3851
      %v3853 = vrot.slane %v2551, %v3852
      %v3854 = vsel %vm3137, %v3853, %v3849
      %v3855 = vlaneseq
      %v3856 = vshrl.u32 %v3855, 7
      %v3857 = vsub.s32 %v3139, %v3856
      %v3858 = vrot.slane %v2552, %v3857
      %v3859 = vsel %vm3144, %v3858, %v3854
      %v3860 = vlaneseq
      %v3861 = vshrl.u32 %v3860, 7
      %v3862 = vsub.s32 %v3146, %v3861
      %v3863 = vrot.slane %v2553, %v3862
      %v3864 = vsel %vm3151, %v3863, %v3859
      %v3865 = vlaneseq
      %v3866 = vshrl.u32 %v3865, 7
      %v3867 = vsub.s32 %v3153, %v3866
      %v3868 = vrot.slane %v2554, %v3867
      %v3869 = vsel %vm3158, %v3868, %v3864
      %v3870 = vlaneseq
      %v3871 = vshrl.u32 %v3870, 7
      %v3872 = vsub.s32 %v3160, %v3871
      %v3873 = vrot.slane %v2555, %v3872
      %v3874 = vsel %vm3165, %v3873, %v3869
      %v3875 = vlaneseq
      %v3876 = vshrl.u32 %v3875, 7
      %v3877 = vsub.s32 %v3057, %v3876
      %v3878 = vrot.slane %v2556, %v3877
      %v3879 = vlaneseq
      %v3880 = vshrl.u32 %v3879, 7
      %v3881 = vsub.s32 %v3062, %v3880
      %v3882 = vrot.slane %v2557, %v3881
      %v3883 = vsel %vm3067, %v3882, %v3878
      %v3884 = vlaneseq
      %v3885 = vshrl.u32 %v3884, 7
      %v3886 = vsub.s32 %v3069, %v3885
      %v3887 = vrot.slane %v2558, %v3886
      %v3888 = vsel %vm3074, %v3887, %v3883
      %v3889 = vlaneseq
      %v3890 = vshrl.u32 %v3889, 7
      %v3891 = vsub.s32 %v3076, %v3890
      %v3892 = vrot.slane %v2559, %v3891
      %v3893 = vsel %vm3081, %v3892, %v3888
      %v3894 = vlaneseq
      %v3895 = vshrl.u32 %v3894, 7
      %v3896 = vsub.s32 %v3083, %v3895
      %v3897 = vrot.slane %v2560, %v3896
      %v3898 = vsel %vm3088, %v3897, %v3893
      %v3899 = vlaneseq
      %v3900 = vshrl.u32 %v3899, 7
      %v3901 = vsub.s32 %v3090, %v3900
      %v3902 = vrot.slane %v2561, %v3901
      %v3903 = vsel %vm3095, %v3902, %v3898
      %v3904 = vlaneseq
      %v3905 = vshrl.u32 %v3904, 7
      %v3906 = vsub.s32 %v3097, %v3905
      %v3907 = vrot.slane %v2562, %v3906
      %v3908 = vsel %vm3102, %v3907, %v3903
      %v3909 = vlaneseq
      %v3910 = vshrl.u32 %v3909, 7
      %v3911 = vsub.s32 %v3104, %v3910
      %v3912 = vrot.slane %v2563, %v3911
      %v3913 = vsel %vm3109, %v3912, %v3908
      %v3914 = vlaneseq
      %v3915 = vshrl.u32 %v3914, 7
      %v3916 = vsub.s32 %v3111, %v3915
      %v3917 = vrot.slane %v2564, %v3916
      %v3918 = vsel %vm3116, %v3917, %v3913
      %v3919 = vlaneseq
      %v3920 = vshrl.u32 %v3919, 7
      %v3921 = vsub.s32 %v3118, %v3920
      %v3922 = vrot.slane %v2565, %v3921
      %v3923 = vsel %vm3123, %v3922, %v3918
      %v3924 = vlaneseq
      %v3925 = vshrl.u32 %v3924, 7
      %v3926 = vsub.s32 %v3125, %v3925
      %v3927 = vrot.slane %v2566, %v3926
      %v3928 = vsel %vm3130, %v3927, %v3923
      %v3929 = vlaneseq
      %v3930 = vshrl.u32 %v3929, 7
      %v3931 = vsub.s32 %v3132, %v3930
      %v3932 = vrot.slane %v2567, %v3931
      %v3933 = vsel %vm3137, %v3932, %v3928
      %v3934 = vlaneseq
      %v3935 = vshrl.u32 %v3934, 7
      %v3936 = vsub.s32 %v3139, %v3935
      %v3937 = vrot.slane %v2568, %v3936
      %v3938 = vsel %vm3144, %v3937, %v3933
      %v3939 = vlaneseq
      %v3940 = vshrl.u32 %v3939, 7
      %v3941 = vsub.s32 %v3146, %v3940
      %v3942 = vrot.slane %v2569, %v3941
      %v3943 = vsel %vm3151, %v3942, %v3938
      %v3944 = vlaneseq
      %v3945 = vshrl.u32 %v3944, 7
      %v3946 = vsub.s32 %v3153, %v3945
      %v3947 = vrot.slane %v2570, %v3946
      %v3948 = vsel %vm3158, %v3947, %v3943
      %v3949 = vlaneseq
      %v3950 = vshrl.u32 %v3949, 7
      %v3951 = vsub.s32 %v3160, %v3950
      %v3952 = vrot.slane %v2571, %v3951
      %v3953 = vsel %vm3165, %v3952, %v3948
      %v3954 = vlaneseq
      %v3955 = vshrl.u32 %v3954, 7
      %v3956 = vsub.s32 %v3057, %v3955
      %v3957 = vrot.slane %v2572, %v3956
      %v3958 = vlaneseq
      %v3959 = vshrl.u32 %v3958, 7
      %v3960 = vsub.s32 %v3062, %v3959
      %v3961 = vrot.slane %v2573, %v3960
      %v3962 = vsel %vm3067, %v3961, %v3957
      %v3963 = vlaneseq
      %v3964 = vshrl.u32 %v3963, 7
      %v3965 = vsub.s32 %v3069, %v3964
      %v3966 = vrot.slane %v2574, %v3965
      %v3967 = vsel %vm3074, %v3966, %v3962
      %v3968 = vlaneseq
      %v3969 = vshrl.u32 %v3968, 7
      %v3970 = vsub.s32 %v3076, %v3969
      %v3971 = vrot.slane %v2575, %v3970
      %v3972 = vsel %vm3081, %v3971, %v3967
      %v3973 = vlaneseq
      %v3974 = vshrl.u32 %v3973, 7
      %v3975 = vsub.s32 %v3057, %v3974
      %v3976 = vrot.slane %v2576, %v3975
      %v3977 = vlaneseq
      %v3978 = vshrl.u32 %v3977, 7
      %v3979 = vsub.s32 %v3062, %v3978
      %v3980 = vrot.slane %v2577, %v3979
      %v3981 = vsel %vm3067, %v3980, %v3976
      %v3982 = vlaneseq
      %v3983 = vshrl.u32 %v3982, 7
      %v3984 = vsub.s32 %v3069, %v3983
      %v3985 = vrot.slane %v2578, %v3984
      %v3986 = vsel %vm3074, %v3985, %v3981
      %v3987 = vlaneseq
      %v3988 = vshrl.u32 %v3987, 7
      %v3989 = vsub.s32 %v3076, %v3988
      %v3990 = vrot.slane %v2579, %v3989
      %v3991 = vsel %vm3081, %v3990, %v3986
      %v3992 = vlaneseq
      %v3993 = vshrl.u32 %v3992, 7
      %v3994 = vsub.s32 %v3083, %v3993
      %v3995 = vrot.slane %v2580, %v3994
      %v3996 = vsel %vm3088, %v3995, %v3991
      %v3997 = vlaneseq
      %v3998 = vshrl.u32 %v3997, 7
      %v3999 = vsub.s32 %v3090, %v3998
      %v4000 = vrot.slane %v2581, %v3999
      %v4001 = vsel %vm3095, %v4000, %v3996
      %v4002 = vlaneseq
      %v4003 = vshrl.u32 %v4002, 7
      %v4004 = vsub.s32 %v3097, %v4003
      %v4005 = vrot.slane %v2582, %v4004
      %v4006 = vsel %vm3102, %v4005, %v4001
      %v4007 = vlaneseq
      %v4008 = vshrl.u32 %v4007, 7
      %v4009 = vsub.s32 %v3104, %v4008
      %v4010 = vrot.slane %v2583, %v4009
      %v4011 = vsel %vm3109, %v4010, %v4006
      %v4012 = vlaneseq
      %v4013 = vshrl.u32 %v4012, 7
      %v4014 = vsub.s32 %v3111, %v4013
      %v4015 = vrot.slane %v2584, %v4014
      %v4016 = vsel %vm3116, %v4015, %v4011
      %v4017 = vlaneseq
      %v4018 = vshrl.u32 %v4017, 7
      %v4019 = vsub.s32 %v3118, %v4018
      %v4020 = vrot.slane %v2585, %v4019
      %v4021 = vsel %vm3123, %v4020, %v4016
      %v4022 = vlaneseq
      %v4023 = vshrl.u32 %v4022, 7
      %v4024 = vsub.s32 %v3125, %v4023
      %v4025 = vrot.slane %v2586, %v4024
      %v4026 = vsel %vm3130, %v4025, %v4021
      %v4027 = vlaneseq
      %v4028 = vshrl.u32 %v4027, 7
      %v4029 = vsub.s32 %v3132, %v4028
      %v4030 = vrot.slane %v2587, %v4029
      %v4031 = vsel %vm3137, %v4030, %v4026
      %v4032 = vlaneseq
      %v4033 = vshrl.u32 %v4032, 7
      %v4034 = vsub.s32 %v3139, %v4033
      %v4035 = vrot.slane %v2588, %v4034
      %v4036 = vsel %vm3144, %v4035, %v4031
      %v4037 = vlaneseq
      %v4038 = vshrl.u32 %v4037, 7
      %v4039 = vsub.s32 %v3146, %v4038
      %v4040 = vrot.slane %v2589, %v4039
      %v4041 = vsel %vm3151, %v4040, %v4036
      %v4042 = vlaneseq
      %v4043 = vshrl.u32 %v4042, 7
      %v4044 = vsub.s32 %v3153, %v4043
      %v4045 = vrot.slane %v2590, %v4044
      %v4046 = vsel %vm3158, %v4045, %v4041
      %v4047 = vlaneseq
      %v4048 = vshrl.u32 %v4047, 7
      %v4049 = vsub.s32 %v3160, %v4048
      %v4050 = vrot.slane %v2591, %v4049
      %v4051 = vsel %vm3165, %v4050, %v4046
      %v4052 = vlaneseq
      %v4053 = vshrl.u32 %v4052, 7
      %v4054 = vsub.s32 %v3057, %v4053
      %v4055 = vrot.slane %v2592, %v4054
      %v4056 = vlaneseq
      %v4057 = vshrl.u32 %v4056, 7
      %v4058 = vsub.s32 %v3062, %v4057
      %v4059 = vrot.slane %v2593, %v4058
      %v4060 = vsel %vm3067, %v4059, %v4055
      %v4061 = vlaneseq
      %v4062 = vshrl.u32 %v4061, 7
      %v4063 = vsub.s32 %v3069, %v4062
      %v4064 = vrot.slane %v2594, %v4063
      %v4065 = vsel %vm3074, %v4064, %v4060
      %v4066 = vlaneseq
      %v4067 = vshrl.u32 %v4066, 7
      %v4068 = vsub.s32 %v3076, %v4067
      %v4069 = vrot.slane %v2595, %v4068
      %v4070 = vsel %vm3081, %v4069, %v4065
      %v4071 = vlaneseq
      %v4072 = vshrl.u32 %v4071, 7
      %v4073 = vsub.s32 %v3083, %v4072
      %v4074 = vrot.slane %v2596, %v4073
      %v4075 = vsel %vm3088, %v4074, %v4070
      %v4076 = vlaneseq
      %v4077 = vshrl.u32 %v4076, 7
      %v4078 = vsub.s32 %v3090, %v4077
      %v4079 = vrot.slane %v2597, %v4078
      %v4080 = vsel %vm3095, %v4079, %v4075
      %v4081 = vlaneseq
      %v4082 = vshrl.u32 %v4081, 7
      %v4083 = vsub.s32 %v3097, %v4082
      %v4084 = vrot.slane %v2598, %v4083
      %v4085 = vsel %vm3102, %v4084, %v4080
      %v4086 = vlaneseq
      %v4087 = vshrl.u32 %v4086, 7
      %v4088 = vsub.s32 %v3104, %v4087
      %v4089 = vrot.slane %v2599, %v4088
      %v4090 = vsel %vm3109, %v4089, %v4085
      %v4091 = vlaneseq
      %v4092 = vshrl.u32 %v4091, 7
      %v4093 = vsub.s32 %v3111, %v4092
      %v4094 = vrot.slane %v2600, %v4093
      %v4095 = vsel %vm3116, %v4094, %v4090
      %v4096 = vlaneseq
      %v4097 = vshrl.u32 %v4096, 7
      %v4098 = vsub.s32 %v3118, %v4097
      %v4099 = vrot.slane %v2601, %v4098
      %v4100 = vsel %vm3123, %v4099, %v4095
      %v4101 = vlaneseq
      %v4102 = vshrl.u32 %v4101, 7
      %v4103 = vsub.s32 %v3125, %v4102
      %v4104 = vrot.slane %v2602, %v4103
      %v4105 = vsel %vm3130, %v4104, %v4100
      %v4106 = vlaneseq
      %v4107 = vshrl.u32 %v4106, 7
      %v4108 = vsub.s32 %v3132, %v4107
      %v4109 = vrot.slane %v2603, %v4108
      %v4110 = vsel %vm3137, %v4109, %v4105
      %v4111 = vlaneseq
      %v4112 = vshrl.u32 %v4111, 7
      %v4113 = vsub.s32 %v3139, %v4112
      %v4114 = vrot.slane %v2604, %v4113
      %v4115 = vsel %vm3144, %v4114, %v4110
      %v4116 = vlaneseq
      %v4117 = vshrl.u32 %v4116, 7
      %v4118 = vsub.s32 %v3146, %v4117
      %v4119 = vrot.slane %v2605, %v4118
      %v4120 = vsel %vm3151, %v4119, %v4115
      %v4121 = vlaneseq
      %v4122 = vshrl.u32 %v4121, 7
      %v4123 = vsub.s32 %v3153, %v4122
      %v4124 = vrot.slane %v2606, %v4123
      %v4125 = vsel %vm3158, %v4124, %v4120
      %v4126 = vlaneseq
      %v4127 = vshrl.u32 %v4126, 7
      %v4128 = vsub.s32 %v3160, %v4127
      %v4129 = vrot.slane %v2607, %v4128
      %v4130 = vsel %vm3165, %v4129, %v4125
      %v4131 = vlaneseq
      %v4132 = vshrl.u32 %v4131, 7
      %v4133 = vsub.s32 %v3057, %v4132
      %v4134 = vrot.slane %v2608, %v4133
      %v4135 = vlaneseq
      %v4136 = vshrl.u32 %v4135, 7
      %v4137 = vsub.s32 %v3062, %v4136
      %v4138 = vrot.slane %v2609, %v4137
      %v4139 = vsel %vm3067, %v4138, %v4134
      %v4140 = vlaneseq
      %v4141 = vshrl.u32 %v4140, 7
      %v4142 = vsub.s32 %v3069, %v4141
      %v4143 = vrot.slane %v2610, %v4142
      %v4144 = vsel %vm3074, %v4143, %v4139
      %v4145 = vlaneseq
      %v4146 = vshrl.u32 %v4145, 7
      %v4147 = vsub.s32 %v3076, %v4146
      %v4148 = vrot.slane %v2611, %v4147
      %v4149 = vsel %vm3081, %v4148, %v4144
      %v4150 = vlaneseq
      %v4151 = vshrl.u32 %v4150, 7
      %v4152 = vsub.s32 %v3057, %v4151
      %v4153 = vrot.slane %v2612, %v4152
      %v4154 = vlaneseq
      %v4155 = vshrl.u32 %v4154, 7
      %v4156 = vsub.s32 %v3062, %v4155
      %v4157 = vrot.slane %v2613, %v4156
      %v4158 = vsel %vm3067, %v4157, %v4153
      %v4159 = vlaneseq
      %v4160 = vshrl.u32 %v4159, 7
      %v4161 = vsub.s32 %v3069, %v4160
      %v4162 = vrot.slane %v2614, %v4161
      %v4163 = vsel %vm3074, %v4162, %v4158
      %v4164 = vlaneseq
      %v4165 = vshrl.u32 %v4164, 7
      %v4166 = vsub.s32 %v3076, %v4165
      %v4167 = vrot.slane %v2615, %v4166
      %v4168 = vsel %vm3081, %v4167, %v4163
      %v4169 = vlaneseq
      %v4170 = vshrl.u32 %v4169, 7
      %v4171 = vsub.s32 %v3083, %v4170
      %v4172 = vrot.slane %v2616, %v4171
      %v4173 = vsel %vm3088, %v4172, %v4168
      %v4174 = vlaneseq
      %v4175 = vshrl.u32 %v4174, 7
      %v4176 = vsub.s32 %v3090, %v4175
      %v4177 = vrot.slane %v2617, %v4176
      %v4178 = vsel %vm3095, %v4177, %v4173
      %v4179 = vlaneseq
      %v4180 = vshrl.u32 %v4179, 7
      %v4181 = vsub.s32 %v3097, %v4180
      %v4182 = vrot.slane %v2618, %v4181
      %v4183 = vsel %vm3102, %v4182, %v4178
      %v4184 = vlaneseq
      %v4185 = vshrl.u32 %v4184, 7
      %v4186 = vsub.s32 %v3104, %v4185
      %v4187 = vrot.slane %v2619, %v4186
      %v4188 = vsel %vm3109, %v4187, %v4183
      %v4189 = vlaneseq
      %v4190 = vshrl.u32 %v4189, 7
      %v4191 = vsub.s32 %v3111, %v4190
      %v4192 = vrot.slane %v2620, %v4191
      %v4193 = vsel %vm3116, %v4192, %v4188
      %v4194 = vlaneseq
      %v4195 = vshrl.u32 %v4194, 7
      %v4196 = vsub.s32 %v3118, %v4195
      %v4197 = vrot.slane %v2621, %v4196
      %v4198 = vsel %vm3123, %v4197, %v4193
      %v4199 = vlaneseq
      %v4200 = vshrl.u32 %v4199, 7
      %v4201 = vsub.s32 %v3125, %v4200
      %v4202 = vrot.slane %v2622, %v4201
      %v4203 = vsel %vm3130, %v4202, %v4198
      %v4204 = vlaneseq
      %v4205 = vshrl.u32 %v4204, 7
      %v4206 = vsub.s32 %v3132, %v4205
      %v4207 = vrot.slane %v2623, %v4206
      %v4208 = vsel %vm3137, %v4207, %v4203
      %v4209 = vlaneseq
      %v4210 = vshrl.u32 %v4209, 7
      %v4211 = vsub.s32 %v3139, %v4210
      %v4212 = vrot.slane %v2624, %v4211
      %v4213 = vsel %vm3144, %v4212, %v4208
      %v4214 = vlaneseq
      %v4215 = vshrl.u32 %v4214, 7
      %v4216 = vsub.s32 %v3146, %v4215
      %v4217 = vrot.slane %v2625, %v4216
      %v4218 = vsel %vm3151, %v4217, %v4213
      %v4219 = vlaneseq
      %v4220 = vshrl.u32 %v4219, 7
      %v4221 = vsub.s32 %v3153, %v4220
      %v4222 = vrot.slane %v2626, %v4221
      %v4223 = vsel %vm3158, %v4222, %v4218
      %v4224 = vlaneseq
      %v4225 = vshrl.u32 %v4224, 7
      %v4226 = vsub.s32 %v3160, %v4225
      %v4227 = vrot.slane %v2627, %v4226
      %v4228 = vsel %vm3165, %v4227, %v4223
      %v4229 = vlaneseq
      %v4230 = vshrl.u32 %v4229, 7
      %v4231 = vsub.s32 %v3057, %v4230
      %v4232 = vrot.slane %v2628, %v4231
      %v4233 = vlaneseq
      %v4234 = vshrl.u32 %v4233, 7
      %v4235 = vsub.s32 %v3062, %v4234
      %v4236 = vrot.slane %v2629, %v4235
      %v4237 = vsel %vm3067, %v4236, %v4232
      %v4238 = vlaneseq
      %v4239 = vshrl.u32 %v4238, 7
      %v4240 = vsub.s32 %v3069, %v4239
      %v4241 = vrot.slane %v2630, %v4240
      %v4242 = vsel %vm3074, %v4241, %v4237
      %v4243 = vlaneseq
      %v4244 = vshrl.u32 %v4243, 7
      %v4245 = vsub.s32 %v3076, %v4244
      %v4246 = vrot.slane %v2631, %v4245
      %v4247 = vsel %vm3081, %v4246, %v4242
      %v4248 = vlaneseq
      %v4249 = vshrl.u32 %v4248, 7
      %v4250 = vsub.s32 %v3083, %v4249
      %v4251 = vrot.slane %v2632, %v4250
      %v4252 = vsel %vm3088, %v4251, %v4247
      %v4253 = vlaneseq
      %v4254 = vshrl.u32 %v4253, 7
      %v4255 = vsub.s32 %v3090, %v4254
      %v4256 = vrot.slane %v2633, %v4255
      %v4257 = vsel %vm3095, %v4256, %v4252
      %v4258 = vlaneseq
      %v4259 = vshrl.u32 %v4258, 7
      %v4260 = vsub.s32 %v3097, %v4259
      %v4261 = vrot.slane %v2634, %v4260
      %v4262 = vsel %vm3102, %v4261, %v4257
      %v4263 = vlaneseq
      %v4264 = vshrl.u32 %v4263, 7
      %v4265 = vsub.s32 %v3104, %v4264
      %v4266 = vrot.slane %v2635, %v4265
      %v4267 = vsel %vm3109, %v4266, %v4262
      %v4268 = vlaneseq
      %v4269 = vshrl.u32 %v4268, 7
      %v4270 = vsub.s32 %v3111, %v4269
      %v4271 = vrot.slane %v2636, %v4270
      %v4272 = vsel %vm3116, %v4271, %v4267
      %v4273 = vlaneseq
      %v4274 = vshrl.u32 %v4273, 7
      %v4275 = vsub.s32 %v3118, %v4274
      %v4276 = vrot.slane %v2637, %v4275
      %v4277 = vsel %vm3123, %v4276, %v4272
      %v4278 = vlaneseq
      %v4279 = vshrl.u32 %v4278, 7
      %v4280 = vsub.s32 %v3125, %v4279
      %v4281 = vrot.slane %v2638, %v4280
      %v4282 = vsel %vm3130, %v4281, %v4277
      %v4283 = vlaneseq
      %v4284 = vshrl.u32 %v4283, 7
      %v4285 = vsub.s32 %v3132, %v4284
      %v4286 = vrot.slane %v2639, %v4285
      %v4287 = vsel %vm3137, %v4286, %v4282
      %v4288 = vlaneseq
      %v4289 = vshrl.u32 %v4288, 7
      %v4290 = vsub.s32 %v3139, %v4289
      %v4291 = vrot.slane %v2640, %v4290
      %v4292 = vsel %vm3144, %v4291, %v4287
      %v4293 = vlaneseq
      %v4294 = vshrl.u32 %v4293, 7
      %v4295 = vsub.s32 %v3146, %v4294
      %v4296 = vrot.slane %v2641, %v4295
      %v4297 = vsel %vm3151, %v4296, %v4292
      %v4298 = vlaneseq
      %v4299 = vshrl.u32 %v4298, 7
      %v4300 = vsub.s32 %v3153, %v4299
      %v4301 = vrot.slane %v2642, %v4300
      %v4302 = vsel %vm3158, %v4301, %v4297
      %v4303 = vlaneseq
      %v4304 = vshrl.u32 %v4303, 7
      %v4305 = vsub.s32 %v3160, %v4304
      %v4306 = vrot.slane %v2643, %v4305
      %v4307 = vsel %vm3165, %v4306, %v4302
      %v4308 = vlaneseq
      %v4309 = vshrl.u32 %v4308, 7
      %v4310 = vsub.s32 %v3057, %v4309
      %v4311 = vrot.slane %v2644, %v4310
      %v4312 = vlaneseq
      %v4313 = vshrl.u32 %v4312, 7
      %v4314 = vsub.s32 %v3062, %v4313
      %v4315 = vrot.slane %v2645, %v4314
      %v4316 = vsel %vm3067, %v4315, %v4311
      %v4317 = vlaneseq
      %v4318 = vshrl.u32 %v4317, 7
      %v4319 = vsub.s32 %v3069, %v4318
      %v4320 = vrot.slane %v2646, %v4319
      %v4321 = vsel %vm3074, %v4320, %v4316
      %v4322 = vlaneseq
      %v4323 = vshrl.u32 %v4322, 7
      %v4324 = vsub.s32 %v3076, %v4323
      %v4325 = vrot.slane %v2647, %v4324
      %v4326 = vsel %vm3081, %v4325, %v4321
      %v4327 = vlaneseq
      %v4328 = vshrl.u32 %v4327, 7
      %v4329 = vsub.s32 %v3057, %v4328
      %v4330 = vrot.slane %v2648, %v4329
      %v4331 = vlaneseq
      %v4332 = vshrl.u32 %v4331, 7
      %v4333 = vsub.s32 %v3062, %v4332
      %v4334 = vrot.slane %v2649, %v4333
      %v4335 = vsel %vm3067, %v4334, %v4330
      %v4336 = vlaneseq
      %v4337 = vshrl.u32 %v4336, 7
      %v4338 = vsub.s32 %v3069, %v4337
      %v4339 = vrot.slane %v2650, %v4338
      %v4340 = vsel %vm3074, %v4339, %v4335
      %v4341 = vlaneseq
      %v4342 = vshrl.u32 %v4341, 7
      %v4343 = vsub.s32 %v3076, %v4342
      %v4344 = vrot.slane %v2651, %v4343
      %v4345 = vsel %vm3081, %v4344, %v4340
      %v4346 = vlaneseq
      %v4347 = vshrl.u32 %v4346, 7
      %v4348 = vsub.s32 %v3083, %v4347
      %v4349 = vrot.slane %v2652, %v4348
      %v4350 = vsel %vm3088, %v4349, %v4345
      %v4351 = vlaneseq
      %v4352 = vshrl.u32 %v4351, 7
      %v4353 = vsub.s32 %v3090, %v4352
      %v4354 = vrot.slane %v2653, %v4353
      %v4355 = vsel %vm3095, %v4354, %v4350
      %v4356 = vlaneseq
      %v4357 = vshrl.u32 %v4356, 7
      %v4358 = vsub.s32 %v3097, %v4357
      %v4359 = vrot.slane %v2654, %v4358
      %v4360 = vsel %vm3102, %v4359, %v4355
      %v4361 = vlaneseq
      %v4362 = vshrl.u32 %v4361, 7
      %v4363 = vsub.s32 %v3104, %v4362
      %v4364 = vrot.slane %v2655, %v4363
      %v4365 = vsel %vm3109, %v4364, %v4360
      %v4366 = vlaneseq
      %v4367 = vshrl.u32 %v4366, 7
      %v4368 = vsub.s32 %v3111, %v4367
      %v4369 = vrot.slane %v2656, %v4368
      %v4370 = vsel %vm3116, %v4369, %v4365
      %v4371 = vlaneseq
      %v4372 = vshrl.u32 %v4371, 7
      %v4373 = vsub.s32 %v3118, %v4372
      %v4374 = vrot.slane %v2657, %v4373
      %v4375 = vsel %vm3123, %v4374, %v4370
      %v4376 = vlaneseq
      %v4377 = vshrl.u32 %v4376, 7
      %v4378 = vsub.s32 %v3125, %v4377
      %v4379 = vrot.slane %v2658, %v4378
      %v4380 = vsel %vm3130, %v4379, %v4375
      %v4381 = vlaneseq
      %v4382 = vshrl.u32 %v4381, 7
      %v4383 = vsub.s32 %v3132, %v4382
      %v4384 = vrot.slane %v2659, %v4383
      %v4385 = vsel %vm3137, %v4384, %v4380
      %v4386 = vlaneseq
      %v4387 = vshrl.u32 %v4386, 7
      %v4388 = vsub.s32 %v3139, %v4387
      %v4389 = vrot.slane %v2660, %v4388
      %v4390 = vsel %vm3144, %v4389, %v4385
      %v4391 = vlaneseq
      %v4392 = vshrl.u32 %v4391, 7
      %v4393 = vsub.s32 %v3146, %v4392
      %v4394 = vrot.slane %v2661, %v4393
      %v4395 = vsel %vm3151, %v4394, %v4390
      %v4396 = vlaneseq
      %v4397 = vshrl.u32 %v4396, 7
      %v4398 = vsub.s32 %v3153, %v4397
      %v4399 = vrot.slane %v2662, %v4398
      %v4400 = vsel %vm3158, %v4399, %v4395
      %v4401 = vlaneseq
      %v4402 = vshrl.u32 %v4401, 7
      %v4403 = vsub.s32 %v3160, %v4402
      %v4404 = vrot.slane %v2663, %v4403
      %v4405 = vsel %vm3165, %v4404, %v4400
      %v4406 = vlaneseq
      %v4407 = vshrl.u32 %v4406, 7
      %v4408 = vsub.s32 %v3057, %v4407
      %v4409 = vrot.slane %v2664, %v4408
      %v4410 = vlaneseq
      %v4411 = vshrl.u32 %v4410, 7
      %v4412 = vsub.s32 %v3062, %v4411
      %v4413 = vrot.slane %v2665, %v4412
      %v4414 = vsel %vm3067, %v4413, %v4409
      %v4415 = vlaneseq
      %v4416 = vshrl.u32 %v4415, 7
      %v4417 = vsub.s32 %v3069, %v4416
      %v4418 = vrot.slane %v2666, %v4417
      %v4419 = vsel %vm3074, %v4418, %v4414
      %v4420 = vlaneseq
      %v4421 = vshrl.u32 %v4420, 7
      %v4422 = vsub.s32 %v3076, %v4421
      %v4423 = vrot.slane %v2667, %v4422
      %v4424 = vsel %vm3081, %v4423, %v4419
      %v4425 = vlaneseq
      %v4426 = vshrl.u32 %v4425, 7
      %v4427 = vsub.s32 %v3083, %v4426
      %v4428 = vrot.slane %v2668, %v4427
      %v4429 = vsel %vm3088, %v4428, %v4424
      %v4430 = vlaneseq
      %v4431 = vshrl.u32 %v4430, 7
      %v4432 = vsub.s32 %v3090, %v4431
      %v4433 = vrot.slane %v2669, %v4432
      %v4434 = vsel %vm3095, %v4433, %v4429
      %v4435 = vlaneseq
      %v4436 = vshrl.u32 %v4435, 7
      %v4437 = vsub.s32 %v3097, %v4436
      %v4438 = vrot.slane %v2670, %v4437
      %v4439 = vsel %vm3102, %v4438, %v4434
      %v4440 = vlaneseq
      %v4441 = vshrl.u32 %v4440, 7
      %v4442 = vsub.s32 %v3104, %v4441
      %v4443 = vrot.slane %v2671, %v4442
      %v4444 = vsel %vm3109, %v4443, %v4439
      %v4445 = vlaneseq
      %v4446 = vshrl.u32 %v4445, 7
      %v4447 = vsub.s32 %v3111, %v4446
      %v4448 = vrot.slane %v2672, %v4447
      %v4449 = vsel %vm3116, %v4448, %v4444
      %v4450 = vlaneseq
      %v4451 = vshrl.u32 %v4450, 7
      %v4452 = vsub.s32 %v3118, %v4451
      %v4453 = vrot.slane %v2673, %v4452
      %v4454 = vsel %vm3123, %v4453, %v4449
      %v4455 = vlaneseq
      %v4456 = vshrl.u32 %v4455, 7
      %v4457 = vsub.s32 %v3125, %v4456
      %v4458 = vrot.slane %v2674, %v4457
      %v4459 = vsel %vm3130, %v4458, %v4454
      %v4460 = vlaneseq
      %v4461 = vshrl.u32 %v4460, 7
      %v4462 = vsub.s32 %v3132, %v4461
      %v4463 = vrot.slane %v2675, %v4462
      %v4464 = vsel %vm3137, %v4463, %v4459
      %v4465 = vlaneseq
      %v4466 = vshrl.u32 %v4465, 7
      %v4467 = vsub.s32 %v3139, %v4466
      %v4468 = vrot.slane %v2676, %v4467
      %v4469 = vsel %vm3144, %v4468, %v4464
      %v4470 = vlaneseq
      %v4471 = vshrl.u32 %v4470, 7
      %v4472 = vsub.s32 %v3146, %v4471
      %v4473 = vrot.slane %v2677, %v4472
      %v4474 = vsel %vm3151, %v4473, %v4469
      %v4475 = vlaneseq
      %v4476 = vshrl.u32 %v4475, 7
      %v4477 = vsub.s32 %v3153, %v4476
      %v4478 = vrot.slane %v2678, %v4477
      %v4479 = vsel %vm3158, %v4478, %v4474
      %v4480 = vlaneseq
      %v4481 = vshrl.u32 %v4480, 7
      %v4482 = vsub.s32 %v3160, %v4481
      %v4483 = vrot.slane %v2679, %v4482
      %v4484 = vsel %vm3165, %v4483, %v4479
      %v4485 = vlaneseq
      %v4486 = vshrl.u32 %v4485, 7
      %v4487 = vsub.s32 %v3057, %v4486
      %v4488 = vrot.slane %v2680, %v4487
      %v4489 = vlaneseq
      %v4490 = vshrl.u32 %v4489, 7
      %v4491 = vsub.s32 %v3062, %v4490
      %v4492 = vrot.slane %v2681, %v4491
      %v4493 = vsel %vm3067, %v4492, %v4488
      %v4494 = vlaneseq
      %v4495 = vshrl.u32 %v4494, 7
      %v4496 = vsub.s32 %v3069, %v4495
      %v4497 = vrot.slane %v2682, %v4496
      %v4498 = vsel %vm3074, %v4497, %v4493
      %v4499 = vlaneseq
      %v4500 = vshrl.u32 %v4499, 7
      %v4501 = vsub.s32 %v3076, %v4500
      %v4502 = vrot.slane %v2683, %v4501
      %v4503 = vsel %vm3081, %v4502, %v4498
      %vm4504 = vcmask 1041409
      %v4505 = vsel %vm4504, %v3343, %v3166
      %vm4506 = vcmask 1042434
      %v4507 = vsel %vm4506, %v3520, %v4505
      %vm4508 = vcmask 1043459
      %v4509 = vsel %vm4508, %v3697, %v4507
      %vm4510 = vcmask 1044484
      %v4511 = vsel %vm4510, %v3874, %v4509
      %vm4512 = vcmask 1045509
      %v4513 = vsel %vm4512, %v4051, %v4511
      %vm4514 = vcmask 1046534
      %v4515 = vsel %vm4514, %v4228, %v4513
      %vm4516 = vcmask 1047559
      %v4517 = vsel %vm4516, %v4405, %v4515
      %v4518 = vsel %vm4504, %v3422, %v3245
      %v4519 = vsel %vm4506, %v3599, %v4518
      %v4520 = vsel %vm4508, %v3776, %v4519
      %v4521 = vsel %vm4510, %v3953, %v4520
      %v4522 = vsel %vm4512, %v4130, %v4521
      %v4523 = vsel %vm4514, %v4307, %v4522
      %v4524 = vsel %vm4516, %v4484, %v4523
      %v4525 = vsel %vm4504, %v3441, %v3264
      %v4526 = vsel %vm4506, %v3618, %v4525
      %v4527 = vsel %vm4508, %v3795, %v4526
      %v4528 = vsel %vm4510, %v3972, %v4527
      %v4529 = vsel %vm4512, %v4149, %v4528
      %v4530 = vsel %vm4514, %v4326, %v4529
      %v4531 = vsel %vm4516, %v4503, %v4530
      %vm4534 = vcmask 261120
      %v4535 = vsel %vm4534, %v4531, 0
      %4537 = vmatprep.subr.mxu0 %v2715
      %4538 = vmatpush1.msra.mxu0 %v2714
      %4539 = vmatprep.subr.mxu0 %v2713
      %4540 = vmatpush1.msra.mxu0 %v2712
      %4541 = vmatprep.subr.mxu0 %v2711
      %4542 = vmatpush1.msra.mxu0 %v2710
      %4543 = vmatprep.subr.mxu0 %v2709
      %4544 = vmatpush1.msra.mxu0 %v2708
      %4545 = vmatprep.subr.mxu0 %v2707
      %4546 = vmatpush1.msra.mxu0 %v2706
      %4547 = vmatprep.subr.mxu0 %v2705
      %4548 = vmatpush1.msra.mxu0 %v2704
      %4549 = vmatprep.subr.mxu0 %v2703
      %4550 = vmatpush1.msra.mxu0 %v2702
      %4551 = vmatprep.subr.mxu0 %v2701
      %4552 = vmatpush1.msra.mxu0 %v2700
      %4553 = vmatprep.subr.mxu0 %v2699
      %4554 = vmatpush1.msra.mxu0 %v2698
      %4555 = vmatprep.subr.mxu0 %v2697
      %4556 = vmatpush1.msra.mxu0 %v2696
      %4557 = vmatprep.subr.mxu0 %v2695
      %4558 = vmatpush1.msra.mxu0 %v2694
      %4559 = vmatprep.subr.mxu0 %v2693
      %4560 = vmatpush1.msra.mxu0 %v2692
      %4561 = vmatprep.subr.mxu0 %v2691
      %4562 = vmatpush1.msra.mxu0 %v2690
      %4563 = vmatprep.subr.mxu0 %v2689
      %4564 = vmatpush1.msra.mxu0 %v2688
      %4565 = vmatprep.subr.mxu0 %v2687
      %4566 = vmatpush1.msra.mxu0 %v2686
      %4567 = vmatprep.subr.mxu0 %v2685
      %4568 = vmatpush1.msra.mxu0 %v2684
      %4569 = vmatprep.subr.mxu0 %v2747
      %4570 = vmatpush2.msra.mxu0 %v2746
      %4571 = vmatprep.subr.mxu0 %v2745
      %4572 = vmatpush2.msra.mxu0 %v2744
      %4573 = vmatprep.subr.mxu0 %v2743
      %4574 = vmatpush2.msra.mxu0 %v2742
      %4575 = vmatprep.subr.mxu0 %v2741
      %4576 = vmatpush2.msra.mxu0 %v2740
      %4577 = vmatprep.subr.mxu0 %v2739
      %4578 = vmatpush2.msra.mxu0 %v2738
      %4579 = vmatprep.subr.mxu0 %v2737
      %4580 = vmatpush2.msra.mxu0 %v2736
      %4581 = vmatprep.subr.mxu0 %v2735
      %4582 = vmatpush2.msra.mxu0 %v2734
      %4583 = vmatprep.subr.mxu0 %v2733
      %4584 = vmatpush2.msra.mxu0 %v2732
      %4585 = vmatprep.subr.mxu0 %v2731
      %4586 = vmatpush2.msra.mxu0 %v2730
      %4587 = vmatprep.subr.mxu0 %v2729
      %4588 = vmatpush2.msra.mxu0 %v2728
      %4589 = vmatprep.subr.mxu0 %v2727
      %4590 = vmatpush2.msra.mxu0 %v2726
      %4591 = vmatprep.subr.mxu0 %v2725
      %4592 = vmatpush2.msra.mxu0 %v2724
      %4593 = vmatprep.subr.mxu0 %v2723
      %4594 = vmatpush2.msra.mxu0 %v2722
      %4595 = vmatprep.subr.mxu0 %v2721
      %4596 = vmatpush2.msra.mxu0 %v2720
      %4597 = vmatprep.subr.mxu0 %v2719
      %4598 = vmatpush2.msra.mxu0 %v2718
      %4599 = vmatprep.subr.mxu0 %v2717
      %4600 = vmatpush2.msra.mxu0 %v2716
      %4601 = vmatprep.mubr.f32.mxu0 %v4524
      %4602 = vmatmul.mubr.f32.gmra.mxu0 %v4517
      %v4603 = vpop.f32.mrf.mxu0
      %v4604 = vadd.f32 %v2761, %v4603
      %v4605 = vpop.f32.mrf.mxu0
      %v4606 = vadd.f32 %v2765, %v4605
      %4607 = vdwg.mxu0
      %4608 = vmatprep.subr.mxu0 0.0
      %4609 = vmatpush1.msra.mxu0 0.0
      %4610 = vmatprep.subr.mxu0 0.0
      %4611 = vmatpush1.msra.mxu0 0.0
      %4612 = vmatprep.subr.mxu0 0.0
      %4613 = vmatpush1.msra.mxu0 0.0
      %4614 = vmatprep.subr.mxu0 0.0
      %4615 = vmatpush1.msra.mxu0 0.0
      %4616 = vmatprep.subr.mxu0 0.0
      %4617 = vmatpush1.msra.mxu0 0.0
      %4618 = vmatprep.subr.mxu0 0.0
      %4619 = vmatpush1.msra.mxu0 0.0
      %4620 = vmatprep.subr.mxu0 0.0
      %4621 = vmatpush1.msra.mxu0 0.0
      %4622 = vmatprep.subr.mxu0 0.0
      %4623 = vmatpush1.msra.mxu0 0.0
      %4624 = vmatprep.subr.mxu0 0.0
      %4625 = vmatpush1.msra.mxu0 0.0
      %4626 = vmatprep.subr.mxu0 0.0
      %4627 = vmatpush1.msra.mxu0 0.0
      %4628 = vmatprep.subr.mxu0 0.0
      %4629 = vmatpush1.msra.mxu0 0.0
      %4630 = vmatprep.subr.mxu0 0.0
      %4631 = vmatpush1.msra.mxu0 0.0
      %4632 = vmatprep.subr.mxu0 %v2755
      %4633 = vmatpush1.msra.mxu0 %v2754
      %4634 = vmatprep.subr.mxu0 %v2753
      %4635 = vmatpush1.msra.mxu0 %v2752
      %4636 = vmatprep.subr.mxu0 %v2751
      %4637 = vmatpush1.msra.mxu0 %v2750
      %4638 = vmatprep.subr.mxu0 %v2749
      %4639 = vmatpush1.msra.mxu0 %v2748
      %4640 = vmatprep.subr.mxu0 0.0
      %4641 = vmatpush2.msra.mxu0 0.0
      %4642 = vmatprep.subr.mxu0 0.0
      %4643 = vmatpush2.msra.mxu0 0.0
      %4644 = vmatprep.subr.mxu0 0.0
      %4645 = vmatpush2.msra.mxu0 0.0
      %4646 = vmatprep.subr.mxu0 0.0
      %4647 = vmatpush2.msra.mxu0 0.0
      %4648 = vmatprep.subr.mxu0 0.0
      %4649 = vmatpush2.msra.mxu0 0.0
      %4650 = vmatprep.subr.mxu0 0.0
      %4651 = vmatpush2.msra.mxu0 0.0
      %4652 = vmatprep.subr.mxu0 0.0
      %4653 = vmatpush2.msra.mxu0 0.0
      %4654 = vmatprep.subr.mxu0 0.0
      %4655 = vmatpush2.msra.mxu0 0.0
      %4656 = vmatprep.subr.mxu0 0.0
      %4657 = vmatpush2.msra.mxu0 0.0
      %4658 = vmatprep.subr.mxu0 0.0
      %4659 = vmatpush2.msra.mxu0 0.0
      %4660 = vmatprep.subr.mxu0 0.0
      %4661 = vmatpush2.msra.mxu0 0.0
      %4662 = vmatprep.subr.mxu0 0.0
      %4663 = vmatpush2.msra.mxu0 0.0
      %4664 = vmatprep.subr.mxu0 0.0
      %4665 = vmatpush2.msra.mxu0 0.0
      %4666 = vmatprep.subr.mxu0 0.0
      %4667 = vmatpush2.msra.mxu0 0.0
      %4668 = vmatprep.subr.mxu0 0.0
      %4669 = vmatpush2.msra.mxu0 0.0
      %4670 = vmatprep.subr.mxu0 0.0
      %4671 = vmatpush2.msra.mxu0 0.0
      %4672 = vmatprep.mubr.f32.mxu0 0.0
      %4673 = vmatmul.mubr.f32.gmra.mxu0 %v4535
      %v4674 = vpop.f32.mrf.mxu0
      %v4675 = vadd.f32 %v4604, %v4674
      %v4676 = vpop.f32.mrf.mxu0
      %v4677 = vadd.f32 %v4606, %v4676
      %4678 = vdwg.mxu0
      %v4679 = vmax.f32 %v4675, 0.0
      %v4680 = vmax.f32 %v4677, 0.0
      %v4681 = vld [vmem:[#allocation9] sm:$0xff]
      %v4682 = vld [vmem:[#allocation9 + $0x8] sm:$0xff]
      %v4683 = vld [vmem:[#allocation9 + $0x10] sm:$0xff]
      %v4684 = vld [vmem:[#allocation9 + $0x18] sm:$0xff]
      %v4685 = vld [vmem:[#allocation9 + $0x20] sm:$0xff]
      %v4686 = vld [vmem:[#allocation9 + $0x28] sm:$0xff]
      %v4687 = vld [vmem:[#allocation9 + $0x30] sm:$0xff]
      %v4688 = vld [vmem:[#allocation9 + $0x38] sm:$0xff]
      %v4689 = vld [vmem:[#allocation9 + $0x40] sm:$0xff]
      %v4690 = vld [vmem:[#allocation9 + $0x48] sm:$0xff]
      %v4691 = vld [vmem:[#allocation9 + $0x50] sm:$0xff]
      %v4692 = vld [vmem:[#allocation9 + $0x58] sm:$0xff]
      %v4693 = vld [vmem:[#allocation9 + $0x60] sm:$0xff]
      %v4694 = vld [vmem:[#allocation9 + $0x68] sm:$0xff]
      %v4695 = vld [vmem:[#allocation9 + $0x70] sm:$0xff]
      %v4696 = vld [vmem:[#allocation9 + $0x78] sm:$0xff]
      %v4697 = vld [vmem:[#allocation9 + $0x80] sm:$0xff]
      %v4698 = vld [vmem:[#allocation9 + $0x88] sm:$0xff]
      %v4699 = vld [vmem:[#allocation9 + $0x90] sm:$0xff]
      %v4700 = vld [vmem:[#allocation9 + $0x98] sm:$0xff]
      %v4701 = vld [vmem:[#allocation9 + $0xa0] sm:$0xff]
      %v4702 = vld [vmem:[#allocation9 + $0xa8] sm:$0xff]
      %v4703 = vld [vmem:[#allocation9 + $0xb0] sm:$0xff]
      %v4704 = vld [vmem:[#allocation9 + $0xb8] sm:$0xff]
      %v4705 = vld [vmem:[#allocation9 + $0xc0] sm:$0xff]
      %v4706 = vld [vmem:[#allocation9 + $0xc8] sm:$0xff]
      %v4707 = vld [vmem:[#allocation9 + $0xd0] sm:$0xff]
      %v4708 = vld [vmem:[#allocation9 + $0xd8] sm:$0xff]
      %v4709 = vld [vmem:[#allocation9 + $0xe0] sm:$0xff]
      %v4710 = vld [vmem:[#allocation9 + $0xe8] sm:$0xff]
      %v4711 = vld [vmem:[#allocation9 + $0xf0] sm:$0xff]
      %v4712 = vld [vmem:[#allocation9 + $0xf8] sm:$0xff]
      %v4713 = vld [vmem:[#allocation11] sm:$0x1]
      %v4715 = vlaneseq
      %v4716 = vshrl.u32 %v4715, 7
      %v4717 = vsub.s32 0, %v4716
      %v4718 = vrot.slane %v4713, %v4717
      %4720 = vmatprep.subr.mxu0 0.0
      %4721 = vmatpush1.msra.mxu0 %v4696
      %4722 = vmatprep.subr.mxu0 0.0
      %4723 = vmatpush1.msra.mxu0 %v4695
      %4724 = vmatprep.subr.mxu0 0.0
      %4725 = vmatpush1.msra.mxu0 %v4694
      %4726 = vmatprep.subr.mxu0 0.0
      %4727 = vmatpush1.msra.mxu0 %v4693
      %4728 = vmatprep.subr.mxu0 0.0
      %4729 = vmatpush1.msra.mxu0 %v4692
      %4730 = vmatprep.subr.mxu0 0.0
      %4731 = vmatpush1.msra.mxu0 %v4691
      %4732 = vmatprep.subr.mxu0 0.0
      %4733 = vmatpush1.msra.mxu0 %v4690
      %4734 = vmatprep.subr.mxu0 0.0
      %4735 = vmatpush1.msra.mxu0 %v4689
      %4736 = vmatprep.subr.mxu0 0.0
      %4737 = vmatpush1.msra.mxu0 %v4688
      %4738 = vmatprep.subr.mxu0 0.0
      %4739 = vmatpush1.msra.mxu0 %v4687
      %4740 = vmatprep.subr.mxu0 0.0
      %4741 = vmatpush1.msra.mxu0 %v4686
      %4742 = vmatprep.subr.mxu0 0.0
      %4743 = vmatpush1.msra.mxu0 %v4685
      %4744 = vmatprep.subr.mxu0 0.0
      %4745 = vmatpush1.msra.mxu0 %v4684
      %4746 = vmatprep.subr.mxu0 0.0
      %4747 = vmatpush1.msra.mxu0 %v4683
      %4748 = vmatprep.subr.mxu0 0.0
      %4749 = vmatpush1.msra.mxu0 %v4682
      %4750 = vmatprep.subr.mxu0 0.0
      %4751 = vmatpush1.msra.mxu0 %v4681
      %4752 = vmatprep.subr.mxu0 0.0
      %4753 = vmatpush2.msra.mxu0 %v4712
      %4754 = vmatprep.subr.mxu0 0.0
      %4755 = vmatpush2.msra.mxu0 %v4711
      %4756 = vmatprep.subr.mxu0 0.0
      %4757 = vmatpush2.msra.mxu0 %v4710
      %4758 = vmatprep.subr.mxu0 0.0
      %4759 = vmatpush2.msra.mxu0 %v4709
      %4760 = vmatprep.subr.mxu0 0.0
      %4761 = vmatpush2.msra.mxu0 %v4708
      %4762 = vmatprep.subr.mxu0 0.0
      %4763 = vmatpush2.msra.mxu0 %v4707
      %4764 = vmatprep.subr.mxu0 0.0
      %4765 = vmatpush2.msra.mxu0 %v4706
      %4766 = vmatprep.subr.mxu0 0.0
      %4767 = vmatpush2.msra.mxu0 %v4705
      %4768 = vmatprep.subr.mxu0 0.0
      %4769 = vmatpush2.msra.mxu0 %v4704
      %4770 = vmatprep.subr.mxu0 0.0
      %4771 = vmatpush2.msra.mxu0 %v4703
      %4772 = vmatprep.subr.mxu0 0.0
      %4773 = vmatpush2.msra.mxu0 %v4702
      %4774 = vmatprep.subr.mxu0 0.0
      %4775 = vmatpush2.msra.mxu0 %v4701
      %4776 = vmatprep.subr.mxu0 0.0
      %4777 = vmatpush2.msra.mxu0 %v4700
      %4778 = vmatprep.subr.mxu0 0.0
      %4779 = vmatpush2.msra.mxu0 %v4699
      %4780 = vmatprep.subr.mxu0 0.0
      %4781 = vmatpush2.msra.mxu0 %v4698
      %4782 = vmatprep.subr.mxu0 0.0
      %4783 = vmatpush2.msra.mxu0 %v4697
      %4784 = vmatprep.mubr.f32.mxu0 %v4680
      %4785 = vmatmul.mubr.f32.gmra.mxu0 %v4679
      %v4786 = vpop.f32.mrf.mxu0
      %v4787 = vadd.f32 %v4718, %v4786
      %v4788 = vpop.f32.mrf.mxu0
      %4789 = vdwg.mxu0
      %vm4790 = vcmp.lt.s32.totalorder %v3057, 2
      %v4791 = vsel %vm4790, %v4787, -1e+30
      %4792 = vmax.xlane.f32.xlu0 %v4791
      %v4793 = vpop.xlane.xlu0 %4792
      %v4794 = vsub.f32 %v4791, %v4793
      %v4795 = vmul.f32 %v4794, 1.442695
      %v4796 = vpow.pop %v4795
      %4797 = vadd.xlane.f32.xlu0 %v4796
      %v4798 = vpop.xlane.xlu0 %4797
      %v4799 = vlog2.pop %v4798
      %v4800 = vmul.f32 %v4799, 0.6931472
      %v4801 = vsub.f32 %v4794, %v4800
      %4802 = vst [vmem:[#allocation12] sm:$0xff] %v4801
    $region49: #{tpu_custom_call.1} parent=1 // pred_fallthru
      _
    // Predicated region
    $region50: #{tpu_custom_call.1} parent=1 // pred_check
      _
    $region51: #{tpu_custom_call.1} parent=1 // pred_check_branch
      %4804 = sbr.rel (0) target = $region53
    $region52: #{tpu_custom_call.1} parent=1 // pred_region
      %s4806 = ssub.s32 128, 128
      %4807 = vsyncadd [#allocation5], %s4806
      %s4809 = sshll.u32 [#allocation12], 4
      %s4810 = int_to_ptr.vmem [resolvable:$true] %s4809
      %4812 = dma.vmem_to_hbm [thread:$0]  %s4810, 128, %s5, [#allocation5]
    $region53: #{tpu_custom_call.1} parent=1 // pred_fallthru
      _
    // Predicated region
    $region54: #{tpu_custom_call.1} parent=1 // pred_check
      _
    $region55: #{tpu_custom_call.1} parent=1 // pred_check_branch
      %4814 = sbr.rel (0) target = $region57
    $region56: #{tpu_custom_call.1} parent=1 // pred_region
      %4815 = dma.done [#allocation5], 128
    $region57: #{tpu_custom_call.1} parent=1 // pred_fallthru
      _
    %4816 = vsyncpa [#allocation4], 1
    %4817 = vsyncpa [#allocation7], 1
    %4818 = vsyncpa [#allocation10], 1
    %4819 = vsyncpa [#allocation5], 1

</llo_original>
